<compile_context>
chip_gen: v5e
topology: v5e:2x2
jax: 0.10.0
libtpu: 0.0.40
codegen_flags: <defaults>
</compile_context>

<pallas_src>
import jax
import jax.numpy as jnp
from jax import lax
from jax.experimental import pallas as pl
from jax.experimental.pallas import tpu as pltpu

BN_EPS = 1e-5


# ----------------------------- kernel helpers --------------------------------
def _eye_batched(n, m):
    """(n, m, m) stack of identity matrices, built from >=2D iota."""
    r = lax.broadcasted_iota(jnp.int32, (n, m, m), 1)
    c = lax.broadcasted_iota(jnp.int32, (n, m, m), 2)
    return (r == c).astype(jnp.float32)


def _swap_last2(a, eye_b):
    """Swap the last two dims of a (N, P, Q) array via a batched identity
    matmul on the (idle) MXU: out[n, q, p] = sum_d eye[q, d] * a[n, p, d]."""
    return lax.dot_general(eye_b, a, (((2,), (2,)), ((0,), (0,))),
                           preferred_element_type=jnp.float32)


def _shift_l(x, d):
    """shifted[n, l, :] = x[n, l + d, :], zero at the ends (shift along axis 1).

    Implemented as a zero-row concat + prefix/suffix slice along the sublane
    axis — no lane-axis relayout, and it realises Conv1d 'same' zero padding.
    """
    if d == 0:
        return x
    n, l, c = x.shape
    pad = jnp.zeros((n, abs(d), c), jnp.float32)
    if d > 0:
        return jnp.concatenate([x[:, d:, :], pad], axis=1)
    return jnp.concatenate([pad, x[:, : l + d, :]], axis=1)


# ------------------------------- fused kernel --------------------------------
def _make_encoder_kernel(channel_spec, n_batch, length0, ksize):
    """Build the fused kernel body: all U-Net encoder blocks in one pallas_call."""
    steps = len(channel_spec)
    assert ksize % 2 == 1, "padding='same' path implemented for odd kernel sizes"
    half = (ksize - 1) // 2

    def conv_bn_relu(x, w_ref, bn_ref, j, cin, cout):
        """Conv1d('same', no bias) + train-mode BatchNorm1d + ReLU (NLC layout).

        K accumulated matmuls (one per tap) replace the im2col slab.  The conv
        bias is never added: train-mode BN's mean subtraction cancels it.
        """
        n, l, _ = x.shape
        y = None
        for k in range(ksize):
            xk = _shift_l(x, k - half)                       # x[:, l + k - half, :]
            w_k = w_ref[j, k, :cin, :cout]                   # (cin, cout) prefix slice
            t = lax.dot_general(xk, w_k, (((2,), (0,)), ((), ())),
                                preferred_element_type=jnp.float32)
            y = t if y is None else y + t

        # Train-mode BatchNorm1d: batch statistics over (N, L), biased variance,
        # one pass over y (sum & sum-of-squares), folded to a single FMA.
        inv_cnt = 1.0 / float(n * l)
        mu = jnp.sum(y, axis=(0, 1), keepdims=True) * inv_cnt        # (1, 1, cout)
        ms = jnp.sum(y * y, axis=(0, 1), keepdims=True) * inv_cnt
        var = jnp.maximum(ms - mu * mu, 0.0)
        gamma = bn_ref[j, 0:1, :cout]                                 # (1, cout)
        beta = bn_ref[j, 1:2, :cout]
        scale = gamma * lax.rsqrt(var + BN_EPS)
        shift = beta - mu * scale
        return jnp.maximum(y * scale + shift, 0.0)

    def kernel(x_ref, w_ref, bn_ref, *out_refs):
        block_out_refs = out_refs[:steps]        # pre-pool block outputs (NCL)
        final_ref = out_refs[steps]              # final pooled output (NCL)

        # NCL -> NLC once, in-kernel (channels onto the lane axis for the conv
        # contraction).  Done as a batched identity matmul on the idle MXU.
        x_ncl = x_ref[...].astype(jnp.float32)                        # (N, C0, L0)
        x = _swap_last2(x_ncl, _eye_batched(n_batch, length0))        # (N, L0, C0)

        length = length0
        for s, (cin, cmid, cout) in enumerate(channel_spec):
            h = conv_bn_relu(x, w_ref, bn_ref, 2 * s, cin, cmid)
            y = conv_bn_relu(h, w_ref, bn_ref, 2 * s + 1, cmid, cout)

            # Store the pre-pool block output directly in NCL (no wrapper
            # transpose): out[n, c, l] = y[n, l, c].
            block_out_refs[s][...] = _swap_last2(y, _eye_batched(n_batch, cout))

            # max_pool1d(kernel=2, stride=2) along L; the pooled activation
            # stays in VMEM as the next block's input (no HBM round trip).
            # (Reshape-based pairing kept for lowering robustness at L < 8.)
            x = jnp.max(y.reshape(n_batch, length // 2, 2, cout), axis=2)
            length //= 2

        cout_last = channel_spec[-1][2]
        final_ref[...] = _swap_last2(x, _eye_batched(n_batch, cout_last))

    return kernel


# --------------------------------- wrapper ------------------------------------
def unet1d_encoder(x_ncl, w_slab, bn_slab, channel_spec):
    """Forward pass of _Unet1DEncoder.

    x_ncl:        (N, C_in, L) float32, PyTorch NCL layout.
    w_slab:       (2*steps, K, Cin_max, Cout_max) zero-padded per-tap conv
                  weights; w_slab[j, k, i, o] == w_pytorch_j[o, i, k].
    bn_slab:      (2*steps, 2, Cout_max) zero-padded (gamma, beta) per conv.
    channel_spec: static tuple of (cin, cmid, cout) per block.

    Returns (y, output_list) with the same shapes/layout as the PyTorch module.
    Conv biases are dropped: train-mode BatchNorm cancels them exactly.
    """
    steps = len(channel_spec)
    n, c0, l0 = x_ncl.shape
    ksize = w_slab.shape[1]
    assert c0 == channel_spec[0][0]

    out_shapes = []
    length = l0
    for (_cin, _cmid, cout) in channel_spec:
        assert length % 2 == 0, "max_pool1d(kernel=2) needs an even length at every step"
        out_shapes.append(jax.ShapeDtypeStruct((n, cout, length), jnp.float32))
        length //= 2
    out_shapes.append(
        jax.ShapeDtypeStruct((n, channel_spec[-1][2], length), jnp.float32))

    vm = pl.BlockSpec(memory_space=pltpu.MemorySpace.VMEM)
    results = pl.pallas_call(
        _make_encoder_kernel(channel_spec, n, l0, ksize),
        out_shape=tuple(out_shapes),
        in_specs=[vm, vm, vm],
        out_specs=tuple([vm] * (steps + 1)),
        # Explicit scoped-VMEM budget (matters on v5e's 16 MiB default and on
        # v7x's 64 MiB physical ceiling when N/L are scaled up).
        compiler_params=pltpu.CompilerParams(vmem_limit_bytes=32 * 1024 * 1024),
    )(x_ncl, w_slab, bn_slab)

    return results[steps], list(results[:steps])


# --------------------------- parameters & packing -----------------------------
def init_params(key, steps=4, input_channels=2, initial_filters=4, kernel_size=3):
    """Deterministic synthetic parameters in PyTorch layouts:
    per block: (w1 (Cmid,Cin,K), b1, g1, bt1, w2 (Cout,Cmid,K), b2, g2, bt2)."""
    input_filters = [input_channels] + [initial_filters * 2 ** i for i in range(steps - 1)]
    out_filters = [initial_filters * 2 ** i for i in range(steps)]
    params = []
    for i in range(steps):
        cin, cout = input_filters[i], out_filters[i]
        cmid = cout  # in_middle_filters is None -> mid_filters = end_filters
        key, *ks = jax.random.split(key, 9)
        w1 = jax.random.normal(ks[0], (cmid, cin, kernel_size), jnp.float32) / jnp.sqrt(
            jnp.float32(cin * kernel_size))
        b1 = 0.1 * jax.random.normal(ks[1], (cmid,), jnp.float32)
        g1 = 1.0 + 0.1 * jax.random.normal(ks[2], (cmid,), jnp.float32)
        bt1 = 0.1 * jax.random.normal(ks[3], (cmid,), jnp.float32)
        w2 = jax.random.normal(ks[4], (cout, cmid, kernel_size), jnp.float32) / jnp.sqrt(
            jnp.float32(cmid * kernel_size))
        b2 = 0.1 * jax.random.normal(ks[5], (cout,), jnp.float32)
        g2 = 1.0 + 0.1 * jax.random.normal(ks[6], (cout,), jnp.float32)
        bt2 = 0.1 * jax.random.normal(ks[7], (cout,), jnp.float32)
        params.append((w1, b1, g1, bt1, w2, b2, g2, bt2))
    return params


def pack_params(params_pt):
    """Pack PyTorch-layout block params into 2 zero-padded slabs (done once,
    outside the jitted forward).  Conv biases are dropped (cancel under
    train-mode BN).  Returns (w_slab, bn_slab, channel_spec)."""
    steps = len(params_pt)
    ksize = params_pt[0][0].shape[-1]
    convs, channel_spec = [], []
    for (w1, _b1, g1, bt1, w2, _b2, g2, bt2) in params_pt:
        cmid, cin, _ = w1.shape
        cout = w2.shape[0]
        channel_spec.append((int(cin), int(cmid), int(cout)))
        convs.append((w1, g1, bt1))
        convs.append((w2, g2, bt2))
    cin_max = max(w.shape[1] for (w, _, _) in convs)
    cout_max = max(w.shape[0] for (w, _, _) in convs)

    w_slab = jnp.zeros((2 * steps, ksize, cin_max, cout_max), jnp.float32)
    bn_slab = jnp.zeros((2 * steps, 2, cout_max), jnp.float32)
    for j, (w, g, bt) in enumerate(convs):
        co, ci, _ = w.shape
        w_kio = jnp.transpose(w, (2, 1, 0))   # (K, Cin, Cout): w_kio[k,i,o] = w[o,i,k]
        w_slab = w_slab.at[j, :, :ci, :co].set(w_kio)
        bn_slab = bn_slab.at[j, 0, :co].set(g)
        bn_slab = bn_slab.at[j, 1, :co].set(bt)
    return w_slab, bn_slab, tuple(channel_spec)


# --------------------------- pure-JAX reference --------------------------------
def _ref_conv_bn_relu(x_ncl, w, b, gamma, beta):
    y = lax.conv_general_dilated(
        x_ncl, w, window_strides=(1,), padding="SAME",
        dimension_numbers=("NCH", "OIH", "NCH"),
        precision=lax.Precision.HIGHEST) + b[None, :, None]
    mu = jnp.mean(y, axis=(0, 2), keepdims=True)
    var = jnp.mean((y - mu) ** 2, axis=(0, 2), keepdims=True)
    y = (y - mu) * lax.rsqrt(var + BN_EPS)
    return jnp.maximum(gamma[None, :, None] * y + beta[None, :, None], 0.0)


def reference_forward(x_ncl, params_pt):
    """Pure-JAX (non-Pallas) reference of the PyTorch module: train-mode BN,
    conv biases INCLUDED (the kernel drops them — they cancel exactly)."""
    outs = []
    y = x_ncl
    for (w1, b1, g1, bt1, w2, b2, g2, bt2) in params_pt:
        y = _ref_conv_bn_relu(y, w1, b1, g1, bt1)
        y = _ref_conv_bn_relu(y, w2, b2, g2, bt2)
        outs.append(y)
        n, c, l = y.shape
        y = jnp.max(y.reshape(n, c, l // 2, 2), axis=-1)
    return y, outs


# ----------------------------------- main --------------------------------------
if __name__ == "__main__":
    key = jax.random.PRNGKey(0)
    k_x, k_p = jax.random.split(key)

    # PyTorch-style input: (batch=2, channels=2, length=16), NCL.
    x = jax.random.normal(k_x, (2, 2, 16), jnp.float32)
    params_pt = init_params(k_p, steps=4, input_channels=2, initial_filters=4,
                            kernel_size=3)
    w_slab, bn_slab, channel_spec = pack_params(params_pt)

    fwd = jax.jit(unet1d_encoder, static_argnums=(3,))
    y, outs = fwd(x, w_slab, bn_slab, channel_spec)
    y = jax.block_until_ready(y)
    outs = [jax.block_until_ready(o) for o in outs]

    expected_out_shapes = [(2, 4, 16), (2, 8, 8), (2, 16, 4), (2, 32, 2)]
    assert y.shape == (2, 32, 1), y.shape
    assert [tuple(o.shape) for o in outs] == expected_out_shapes, [o.shape for o in outs]

    # Numerical check against the pure-JAX reference.  Tolerance allows for the
    # MXU f32 multi-pass matmul path and the amplification of tiny rounding
    # differences through 8 small-batch BatchNorm layers; any structural bug
    # (wrong tap shift, weight layout, transpose, BN) produces O(0.1+) errors.
    y_ref, outs_ref = reference_forward(x, params_pt)
    for got, want in zip(outs + [y], outs_ref + [y_ref]):
        max_err = float(jnp.max(jnp.abs(got - want)))
        assert bool(jnp.allclose(got, want, atol=2e-2, rtol=2e-2)), max_err

    print("KERNEL_OK")
</pallas_src>

<mosaic_0001>
module attributes {stable_mosaic.version = 11 : i64} {
  func.func @kernel(%arg0: memref<2x2x16xf32, #tpu.memory_space<vmem>>, %arg1: memref<8x3x32x32xf32, #tpu.memory_space<vmem>>, %arg2: memref<8x2x32xf32, #tpu.memory_space<vmem>>, %arg3: memref<2x4x16xf32, #tpu.memory_space<vmem>>, %arg4: memref<2x8x8xf32, #tpu.memory_space<vmem>>, %arg5: memref<2x16x4xf32, #tpu.memory_space<vmem>>, %arg6: memref<2x32x2xf32, #tpu.memory_space<vmem>>, %arg7: memref<2x32x1xf32, #tpu.memory_space<vmem>>) attributes {dimension_semantics = [], scalar_prefetch = 0 : i64, scratch_operands = 0 : i64, tpu.core_type = #tpu.core_type<tc>} {
    %c0 = arith.constant 0 : index
    %c0_0 = arith.constant 0 : index
    %c0_1 = arith.constant 0 : index
    %0 = vector.load %arg0[%c0, %c0_0, %c0_1] : memref<2x2x16xf32, #tpu.memory_space<vmem>>, vector<2x2x16xf32>
    %1 = tpu.iota {dimensions = array<i32: 1>} : vector<2x16x16xi32>
    %2 = tpu.iota {dimensions = array<i32: 2>} : vector<2x16x16xi32>
    %3 = arith.cmpi eq, %1, %2 : vector<2x16x16xi32>
    %4 = arith.extui %3 : vector<2x16x16xi1> to vector<2x16x16xi32>
    %5 = arith.sitofp %4 : vector<2x16x16xi32> to vector<2x16x16xf32>
    %cst = arith.constant dense<0.000000e+00> : vector<2x16x2xf32>
    %6 = tpu.matmul %5, %0, %cst {dimension_numbers = #tpu.dot_dimension_numbers<[2], [2], [1], [1], [0, 0, 0, 1, 1, 1], [0], [0]>} : vector<2x16x16xf32>, vector<2x2x16xf32>, vector<2x16x2xf32> -> vector<2x16x2xf32>
    %cst_2 = arith.constant 0.000000e+00 : f32
    %7 = vector.broadcast %cst_2 : f32 to vector<2x1x2xf32>
    %8 = vector.extract_strided_slice %6 {offsets = [0, 0, 0], sizes = [2, 15, 2], strides = [1, 1, 1]} : vector<2x16x2xf32> to vector<2x15x2xf32>
    %9 = tpu.concatenate %7, %8 in 1 : vector<2x1x2xf32>, vector<2x15x2xf32> -> vector<2x16x2xf32>
    %c0_3 = arith.constant 0 : index
    %c0_4 = arith.constant 0 : index
    %c0_5 = arith.constant 0 : index
    %c0_6 = arith.constant 0 : index
    %10 = vector.load %arg1[%c0_3, %c0_4, %c0_5, %c0_6] : memref<8x3x32x32xf32, #tpu.memory_space<vmem>>, vector<1x1x2x4xf32>
    %11 = vector.shape_cast %10 : vector<1x1x2x4xf32> to vector<2x4xf32>
    %cst_7 = arith.constant dense<0.000000e+00> : vector<2x16x4xf32>
    %12 = tpu.matmul %9, %11, %cst_7 {dimension_numbers = #tpu.dot_dimension_numbers<[2], [0], [0, 1], [1], [0, 0, 0, 1, 1, 1], [], []>} : vector<2x16x2xf32>, vector<2x4xf32>, vector<2x16x4xf32> -> vector<2x16x4xf32>
    %c0_8 = arith.constant 0 : index
    %c1 = arith.constant 1 : index
    %c0_9 = arith.constant 0 : index
    %c0_10 = arith.constant 0 : index
    %13 = vector.load %arg1[%c0_8, %c1, %c0_9, %c0_10] : memref<8x3x32x32xf32, #tpu.memory_space<vmem>>, vector<1x1x2x4xf32>
    %14 = vector.shape_cast %13 : vector<1x1x2x4xf32> to vector<2x4xf32>
    %cst_11 = arith.constant dense<0.000000e+00> : vector<2x16x4xf32>
    %15 = tpu.matmul %6, %14, %cst_11 {dimension_numbers = #tpu.dot_dimension_numbers<[2], [0], [0, 1], [1], [0, 0, 0, 1, 1, 1], [], []>} : vector<2x16x2xf32>, vector<2x4xf32>, vector<2x16x4xf32> -> vector<2x16x4xf32>
    %16 = arith.addf %12, %15 : vector<2x16x4xf32>
    %cst_12 = arith.constant 0.000000e+00 : f32
    %17 = vector.broadcast %cst_12 : f32 to vector<2x1x2xf32>
    %18 = vector.extract_strided_slice %6 {offsets = [0, 1, 0], sizes = [2, 15, 2], strides = [1, 1, 1]} : vector<2x16x2xf32> to vector<2x15x2xf32>
    %19 = tpu.concatenate %18, %17 in 1 : vector<2x15x2xf32>, vector<2x1x2xf32> -> vector<2x16x2xf32>
    %c0_13 = arith.constant 0 : index
    %c2 = arith.constant 2 : index
    %c0_14 = arith.constant 0 : index
    %c0_15 = arith.constant 0 : index
    %20 = vector.load %arg1[%c0_13, %c2, %c0_14, %c0_15] : memref<8x3x32x32xf32, #tpu.memory_space<vmem>>, vector<1x1x2x4xf32>
    %21 = vector.shape_cast %20 : vector<1x1x2x4xf32> to vector<2x4xf32>
    %cst_16 = arith.constant dense<0.000000e+00> : vector<2x16x4xf32>
    %22 = tpu.matmul %19, %21, %cst_16 {dimension_numbers = #tpu.dot_dimension_numbers<[2], [0], [0, 1], [1], [0, 0, 0, 1, 1, 1], [], []>} : vector<2x16x2xf32>, vector<2x4xf32>, vector<2x16x4xf32> -> vector<2x16x4xf32>
    %23 = arith.addf %16, %22 : vector<2x16x4xf32>
    %cst_17 = arith.constant dense<0.000000e+00> : vector<4xf32>
    %24 = vector.multi_reduction <add>, %23, %cst_17 [0, 1] : vector<2x16x4xf32> to vector<4xf32>
    %25 = vector.shape_cast %24 : vector<4xf32> to vector<1x1x4xf32>
    %cst_18 = arith.constant 3.125000e-02 : f32
    %26 = vector.broadcast %cst_18 : f32 to vector<1x1x4xf32>
    %27 = arith.mulf %25, %26 : vector<1x1x4xf32>
    %28 = arith.mulf %23, %23 : vector<2x16x4xf32>
    %cst_19 = arith.constant dense<0.000000e+00> : vector<4xf32>
    %29 = vector.multi_reduction <add>, %28, %cst_19 [0, 1] : vector<2x16x4xf32> to vector<4xf32>
    %30 = vector.shape_cast %29 : vector<4xf32> to vector<1x1x4xf32>
    %cst_20 = arith.constant 3.125000e-02 : f32
    %31 = vector.broadcast %cst_20 : f32 to vector<1x1x4xf32>
    %32 = arith.mulf %30, %31 : vector<1x1x4xf32>
    %33 = arith.mulf %27, %27 : vector<1x1x4xf32>
    %34 = arith.subf %32, %33 : vector<1x1x4xf32>
    %cst_21 = arith.constant 0.000000e+00 : f32
    %35 = vector.broadcast %cst_21 : f32 to vector<1x1x4xf32>
    %36 = arith.maximumf %34, %35 : vector<1x1x4xf32>
    %c0_22 = arith.constant 0 : index
    %c0_23 = arith.constant 0 : index
    %c0_24 = arith.constant 0 : index
    %37 = vector.load %arg2[%c0_22, %c0_23, %c0_24] : memref<8x2x32xf32, #tpu.memory_space<vmem>>, vector<1x1x4xf32>
    %38 = vector.shape_cast %37 : vector<1x1x4xf32> to vector<1x4xf32>
    %c0_25 = arith.constant 0 : index
    %c1_26 = arith.constant 1 : index
    %c0_27 = arith.constant 0 : index
    %39 = vector.load %arg2[%c0_25, %c1_26, %c0_27] : memref<8x2x32xf32, #tpu.memory_space<vmem>>, vector<1x1x4xf32>
    %40 = vector.shape_cast %39 : vector<1x1x4xf32> to vector<1x4xf32>
    %cst_28 = arith.constant 9.99999974E-6 : f32
    %41 = vector.broadcast %cst_28 : f32 to vector<1x1x4xf32>
    %42 = arith.addf %36, %41 : vector<1x1x4xf32>
    %43 = math.rsqrt %42 : vector<1x1x4xf32>
    %44 = vector.shape_cast %38 : vector<1x4xf32> to vector<1x1x4xf32>
    %45 = arith.mulf %44, %43 : vector<1x1x4xf32>
    %46 = arith.mulf %27, %45 : vector<1x1x4xf32>
    %47 = vector.shape_cast %40 : vector<1x4xf32> to vector<1x1x4xf32>
    %48 = arith.subf %47, %46 : vector<1x1x4xf32>
    %49 = vector.broadcast %45 : vector<1x1x4xf32> to vector<2x16x4xf32>
    %50 = arith.mulf %23, %49 : vector<2x16x4xf32>
    %51 = vector.broadcast %48 : vector<1x1x4xf32> to vector<2x16x4xf32>
    %52 = arith.addf %50, %51 : vector<2x16x4xf32>
    %cst_29 = arith.constant 0.000000e+00 : f32
    %53 = vector.broadcast %cst_29 : f32 to vector<2x16x4xf32>
    %54 = arith.maximumf %52, %53 : vector<2x16x4xf32>
    %cst_30 = arith.constant 0.000000e+00 : f32
    %55 = vector.broadcast %cst_30 : f32 to vector<2x1x4xf32>
    %56 = vector.extract_strided_slice %54 {offsets = [0, 0, 0], sizes = [2, 15, 4], strides = [1, 1, 1]} : vector<2x16x4xf32> to vector<2x15x4xf32>
    %57 = tpu.concatenate %55, %56 in 1 : vector<2x1x4xf32>, vector<2x15x4xf32> -> vector<2x16x4xf32>
    %c1_31 = arith.constant 1 : index
    %c0_32 = arith.constant 0 : index
    %c0_33 = arith.constant 0 : index
    %c0_34 = arith.constant 0 : index
    %58 = vector.load %arg1[%c1_31, %c0_32, %c0_33, %c0_34] : memref<8x3x32x32xf32, #tpu.memory_space<vmem>>, vector<1x1x4x4xf32>
    %59 = vector.shape_cast %58 : vector<1x1x4x4xf32> to vector<4x4xf32>
    %cst_35 = arith.constant dense<0.000000e+00> : vector<2x16x4xf32>
    %60 = tpu.matmul %57, %59, %cst_35 {dimension_numbers = #tpu.dot_dimension_numbers<[2], [0], [0, 1], [1], [0, 0, 0, 1, 1, 1], [], []>} : vector<2x16x4xf32>, vector<4x4xf32>, vector<2x16x4xf32> -> vector<2x16x4xf32>
    %c1_36 = arith.constant 1 : index
    %c1_37 = arith.constant 1 : index
    %c0_38 = arith.constant 0 : index
    %c0_39 = arith.constant 0 : index
    %61 = vector.load %arg1[%c1_36, %c1_37, %c0_38, %c0_39] : memref<8x3x32x32xf32, #tpu.memory_space<vmem>>, vector<1x1x4x4xf32>
    %62 = vector.shape_cast %61 : vector<1x1x4x4xf32> to vector<4x4xf32>
    %cst_40 = arith.constant dense<0.000000e+00> : vector<2x16x4xf32>
    %63 = tpu.matmul %54, %62, %cst_40 {dimension_numbers = #tpu.dot_dimension_numbers<[2], [0], [0, 1], [1], [0, 0, 0, 1, 1, 1], [], []>} : vector<2x16x4xf32>, vector<4x4xf32>, vector<2x16x4xf32> -> vector<2x16x4xf32>
    %64 = arith.addf %60, %63 : vector<2x16x4xf32>
    %cst_41 = arith.constant 0.000000e+00 : f32
    %65 = vector.broadcast %cst_41 : f32 to vector<2x1x4xf32>
    %66 = vector.extract_strided_slice %54 {offsets = [0, 1, 0], sizes = [2, 15, 4], strides = [1, 1, 1]} : vector<2x16x4xf32> to vector<2x15x4xf32>
    %67 = tpu.concatenate %66, %65 in 1 : vector<2x15x4xf32>, vector<2x1x4xf32> -> vector<2x16x4xf32>
    %c1_42 = arith.constant 1 : index
    %c2_43 = arith.constant 2 : index
    %c0_44 = arith.constant 0 : index
    %c0_45 = arith.constant 0 : index
    %68 = vector.load %arg1[%c1_42, %c2_43, %c0_44, %c0_45] : memref<8x3x32x32xf32, #tpu.memory_space<vmem>>, vector<1x1x4x4xf32>
    %69 = vector.shape_cast %68 : vector<1x1x4x4xf32> to vector<4x4xf32>
    %cst_46 = arith.constant dense<0.000000e+00> : vector<2x16x4xf32>
    %70 = tpu.matmul %67, %69, %cst_46 {dimension_numbers = #tpu.dot_dimension_numbers<[2], [0], [0, 1], [1], [0, 0, 0, 1, 1, 1], [], []>} : vector<2x16x4xf32>, vector<4x4xf32>, vector<2x16x4xf32> -> vector<2x16x4xf32>
    %71 = arith.addf %64, %70 : vector<2x16x4xf32>
    %cst_47 = arith.constant dense<0.000000e+00> : vector<4xf32>
    %72 = vector.multi_reduction <add>, %71, %cst_47 [0, 1] : vector<2x16x4xf32> to vector<4xf32>
    %73 = vector.shape_cast %72 : vector<4xf32> to vector<1x1x4xf32>
    %cst_48 = arith.constant 3.125000e-02 : f32
    %74 = vector.broadcast %cst_48 : f32 to vector<1x1x4xf32>
    %75 = arith.mulf %73, %74 : vector<1x1x4xf32>
    %76 = arith.mulf %71, %71 : vector<2x16x4xf32>
    %cst_49 = arith.constant dense<0.000000e+00> : vector<4xf32>
    %77 = vector.multi_reduction <add>, %76, %cst_49 [0, 1] : vector<2x16x4xf32> to vector<4xf32>
    %78 = vector.shape_cast %77 : vector<4xf32> to vector<1x1x4xf32>
    %cst_50 = arith.constant 3.125000e-02 : f32
    %79 = vector.broadcast %cst_50 : f32 to vector<1x1x4xf32>
    %80 = arith.mulf %78, %79 : vector<1x1x4xf32>
    %81 = arith.mulf %75, %75 : vector<1x1x4xf32>
    %82 = arith.subf %80, %81 : vector<1x1x4xf32>
    %cst_51 = arith.constant 0.000000e+00 : f32
    %83 = vector.broadcast %cst_51 : f32 to vector<1x1x4xf32>
    %84 = arith.maximumf %82, %83 : vector<1x1x4xf32>
    %c1_52 = arith.constant 1 : index
    %c0_53 = arith.constant 0 : index
    %c0_54 = arith.constant 0 : index
    %85 = vector.load %arg2[%c1_52, %c0_53, %c0_54] : memref<8x2x32xf32, #tpu.memory_space<vmem>>, vector<1x1x4xf32>
    %86 = vector.shape_cast %85 : vector<1x1x4xf32> to vector<1x4xf32>
    %c1_55 = arith.constant 1 : index
    %c1_56 = arith.constant 1 : index
    %c0_57 = arith.constant 0 : index
    %87 = vector.load %arg2[%c1_55, %c1_56, %c0_57] : memref<8x2x32xf32, #tpu.memory_space<vmem>>, vector<1x1x4xf32>
    %88 = vector.shape_cast %87 : vector<1x1x4xf32> to vector<1x4xf32>
    %cst_58 = arith.constant 9.99999974E-6 : f32
    %89 = vector.broadcast %cst_58 : f32 to vector<1x1x4xf32>
    %90 = arith.addf %84, %89 : vector<1x1x4xf32>
    %91 = math.rsqrt %90 : vector<1x1x4xf32>
    %92 = vector.shape_cast %86 : vector<1x4xf32> to vector<1x1x4xf32>
    %93 = arith.mulf %92, %91 : vector<1x1x4xf32>
    %94 = arith.mulf %75, %93 : vector<1x1x4xf32>
    %95 = vector.shape_cast %88 : vector<1x4xf32> to vector<1x1x4xf32>
    %96 = arith.subf %95, %94 : vector<1x1x4xf32>
    %97 = vector.broadcast %93 : vector<1x1x4xf32> to vector<2x16x4xf32>
    %98 = arith.mulf %71, %97 : vector<2x16x4xf32>
    %99 = vector.broadcast %96 : vector<1x1x4xf32> to vector<2x16x4xf32>
    %100 = arith.addf %98, %99 : vector<2x16x4xf32>
    %cst_59 = arith.constant 0.000000e+00 : f32
    %101 = vector.broadcast %cst_59 : f32 to vector<2x16x4xf32>
    %102 = arith.maximumf %100, %101 : vector<2x16x4xf32>
    %103 = tpu.iota {dimensions = array<i32: 1>} : vector<2x4x4xi32>
    %104 = tpu.iota {dimensions = array<i32: 2>} : vector<2x4x4xi32>
    %105 = arith.cmpi eq, %103, %104 : vector<2x4x4xi32>
    %106 = arith.extui %105 : vector<2x4x4xi1> to vector<2x4x4xi32>
    %107 = arith.sitofp %106 : vector<2x4x4xi32> to vector<2x4x4xf32>
    %cst_60 = arith.constant dense<0.000000e+00> : vector<2x4x16xf32>
    %108 = tpu.matmul %107, %102, %cst_60 {dimension_numbers = #tpu.dot_dimension_numbers<[2], [2], [1], [1], [0, 0, 0, 1, 1, 1], [0], [0]>} : vector<2x4x4xf32>, vector<2x16x4xf32>, vector<2x4x16xf32> -> vector<2x4x16xf32>
    %c0_61 = arith.constant 0 : index
    %c0_62 = arith.constant 0 : index
    %c0_63 = arith.constant 0 : index
    %109 = vector.load %arg3[%c0_61, %c0_62, %c0_63] : memref<2x4x16xf32, #tpu.memory_space<vmem>>, vector<2x4x16xf32>
    tpu.vector_store %arg3[%c0_61, %c0_62, %c0_63], %108 {strides = array<i32>} : memref<2x4x16xf32, #tpu.memory_space<vmem>>, vector<2x4x16xf32>,
    %110 = vector.shape_cast %102 : vector<2x16x4xf32> to vector<2x8x2x4xf32>
    %cst_64 = arith.constant dense<0xFF800000> : vector<2x8x4xf32>
    %111 = vector.multi_reduction <maximumf>, %110, %cst_64 [2] : vector<2x8x2x4xf32> to vector<2x8x4xf32>
    %cst_65 = arith.constant 0.000000e+00 : f32
    %112 = vector.broadcast %cst_65 : f32 to vector<2x1x4xf32>
    %113 = vector.extract_strided_slice %111 {offsets = [0, 0, 0], sizes = [2, 7, 4], strides = [1, 1, 1]} : vector<2x8x4xf32> to vector<2x7x4xf32>
    %114 = tpu.concatenate %112, %113 in 1 : vector<2x1x4xf32>, vector<2x7x4xf32> -> vector<2x8x4xf32>
    %c2_66 = arith.constant 2 : index
    %c0_67 = arith.constant 0 : index
    %c0_68 = arith.constant 0 : index
    %c0_69 = arith.constant 0 : index
    %115 = vector.load %arg1[%c2_66, %c0_67, %c0_68, %c0_69] : memref<8x3x32x32xf32, #tpu.memory_space<vmem>>, vector<1x1x4x8xf32>
    %116 = vector.shape_cast %115 : vector<1x1x4x8xf32> to vector<4x8xf32>
    %cst_70 = arith.constant dense<0.000000e+00> : vector<2x8x8xf32>
    %117 = tpu.matmul %114, %116, %cst_70 {dimension_numbers = #tpu.dot_dimension_numbers<[2], [0], [0, 1], [1], [0, 0, 0, 1, 1, 1], [], []>} : vector<2x8x4xf32>, vector<4x8xf32>, vector<2x8x8xf32> -> vector<2x8x8xf32>
    %c2_71 = arith.constant 2 : index
    %c1_72 = arith.constant 1 : index
    %c0_73 = arith.constant 0 : index
    %c0_74 = arith.constant 0 : index
    %118 = vector.load %arg1[%c2_71, %c1_72, %c0_73, %c0_74] : memref<8x3x32x32xf32, #tpu.memory_space<vmem>>, vector<1x1x4x8xf32>
    %119 = vector.shape_cast %118 : vector<1x1x4x8xf32> to vector<4x8xf32>
    %cst_75 = arith.constant dense<0.000000e+00> : vector<2x8x8xf32>
    %120 = tpu.matmul %111, %119, %cst_75 {dimension_numbers = #tpu.dot_dimension_numbers<[2], [0], [0, 1], [1], [0, 0, 0, 1, 1, 1], [], []>} : vector<2x8x4xf32>, vector<4x8xf32>, vector<2x8x8xf32> -> vector<2x8x8xf32>
    %121 = arith.addf %117, %120 : vector<2x8x8xf32>
    %cst_76 = arith.constant 0.000000e+00 : f32
    %122 = vector.broadcast %cst_76 : f32 to vector<2x1x4xf32>
    %123 = vector.extract_strided_slice %111 {offsets = [0, 1, 0], sizes = [2, 7, 4], strides = [1, 1, 1]} : vector<2x8x4xf32> to vector<2x7x4xf32>
    %124 = tpu.concatenate %123, %122 in 1 : vector<2x7x4xf32>, vector<2x1x4xf32> -> vector<2x8x4xf32>
    %c2_77 = arith.constant 2 : index
    %c2_78 = arith.constant 2 : index
    %c0_79 = arith.constant 0 : index
    %c0_80 = arith.constant 0 : index
    %125 = vector.load %arg1[%c2_77, %c2_78, %c0_79, %c0_80] : memref<8x3x32x32xf32, #tpu.memory_space<vmem>>, vector<1x1x4x8xf32>
    %126 = vector.shape_cast %125 : vector<1x1x4x8xf32> to vector<4x8xf32>
    %cst_81 = arith.constant dense<0.000000e+00> : vector<2x8x8xf32>
    %127 = tpu.matmul %124, %126, %cst_81 {dimension_numbers = #tpu.dot_dimension_numbers<[2], [0], [0, 1], [1], [0, 0, 0, 1, 1, 1], [], []>} : vector<2x8x4xf32>, vector<4x8xf32>, vector<2x8x8xf32> -> vector<2x8x8xf32>
    %128 = arith.addf %121, %127 : vector<2x8x8xf32>
    %cst_82 = arith.constant dense<0.000000e+00> : vector<8xf32>
    %129 = vector.multi_reduction <add>, %128, %cst_82 [0, 1] : vector<2x8x8xf32> to vector<8xf32>
    %130 = vector.shape_cast %129 : vector<8xf32> to vector<1x1x8xf32>
    %cst_83 = arith.constant 6.250000e-02 : f32
    %131 = vector.broadcast %cst_83 : f32 to vector<1x1x8xf32>
    %132 = arith.mulf %130, %131 : vector<1x1x8xf32>
    %133 = arith.mulf %128, %128 : vector<2x8x8xf32>
    %cst_84 = arith.constant dense<0.000000e+00> : vector<8xf32>
    %134 = vector.multi_reduction <add>, %133, %cst_84 [0, 1] : vector<2x8x8xf32> to vector<8xf32>
    %135 = vector.shape_cast %134 : vector<8xf32> to vector<1x1x8xf32>
    %cst_85 = arith.constant 6.250000e-02 : f32
    %136 = vector.broadcast %cst_85 : f32 to vector<1x1x8xf32>
    %137 = arith.mulf %135, %136 : vector<1x1x8xf32>
    %138 = arith.mulf %132, %132 : vector<1x1x8xf32>
    %139 = arith.subf %137, %138 : vector<1x1x8xf32>
    %cst_86 = arith.constant 0.000000e+00 : f32
    %140 = vector.broadcast %cst_86 : f32 to vector<1x1x8xf32>
    %141 = arith.maximumf %139, %140 : vector<1x1x8xf32>
    %c2_87 = arith.constant 2 : index
    %c0_88 = arith.constant 0 : index
    %c0_89 = arith.constant 0 : index
    %142 = vector.load %arg2[%c2_87, %c0_88, %c0_89] : memref<8x2x32xf32, #tpu.memory_space<vmem>>, vector<1x1x8xf32>
    %143 = vector.shape_cast %142 : vector<1x1x8xf32> to vector<1x8xf32>
    %c2_90 = arith.constant 2 : index
    %c1_91 = arith.constant 1 : index
    %c0_92 = arith.constant 0 : index
    %144 = vector.load %arg2[%c2_90, %c1_91, %c0_92] : memref<8x2x32xf32, #tpu.memory_space<vmem>>, vector<1x1x8xf32>
    %145 = vector.shape_cast %144 : vector<1x1x8xf32> to vector<1x8xf32>
    %cst_93 = arith.constant 9.99999974E-6 : f32
    %146 = vector.broadcast %cst_93 : f32 to vector<1x1x8xf32>
    %147 = arith.addf %141, %146 : vector<1x1x8xf32>
    %148 = math.rsqrt %147 : vector<1x1x8xf32>
    %149 = vector.shape_cast %143 : vector<1x8xf32> to vector<1x1x8xf32>
    %150 = arith.mulf %149, %148 : vector<1x1x8xf32>
    %151 = arith.mulf %132, %150 : vector<1x1x8xf32>
    %152 = vector.shape_cast %145 : vector<1x8xf32> to vector<1x1x8xf32>
    %153 = arith.subf %152, %151 : vector<1x1x8xf32>
    %154 = vector.broadcast %150 : vector<1x1x8xf32> to vector<2x8x8xf32>
    %155 = arith.mulf %128, %154 : vector<2x8x8xf32>
    %156 = vector.broadcast %153 : vector<1x1x8xf32> to vector<2x8x8xf32>
    %157 = arith.addf %155, %156 : vector<2x8x8xf32>
    %cst_94 = arith.constant 0.000000e+00 : f32
    %158 = vector.broadcast %cst_94 : f32 to vector<2x8x8xf32>
    %159 = arith.maximumf %157, %158 : vector<2x8x8xf32>
    %cst_95 = arith.constant 0.000000e+00 : f32
    %160 = vector.broadcast %cst_95 : f32 to vector<2x1x8xf32>
    %161 = vector.extract_strided_slice %159 {offsets = [0, 0, 0], sizes = [2, 7, 8], strides = [1, 1, 1]} : vector<2x8x8xf32> to vector<2x7x8xf32>
    %162 = tpu.concatenate %160, %161 in 1 : vector<2x1x8xf32>, vector<2x7x8xf32> -> vector<2x8x8xf32>
    %c3 = arith.constant 3 : index
    %c0_96 = arith.constant 0 : index
    %c0_97 = arith.constant 0 : index
    %c0_98 = arith.constant 0 : index
    %163 = vector.load %arg1[%c3, %c0_96, %c0_97, %c0_98] : memref<8x3x32x32xf32, #tpu.memory_space<vmem>>, vector<1x1x8x8xf32>
    %164 = vector.shape_cast %163 : vector<1x1x8x8xf32> to vector<8x8xf32>
    %cst_99 = arith.constant dense<0.000000e+00> : vector<2x8x8xf32>
    %165 = tpu.matmul %162, %164, %cst_99 {dimension_numbers = #tpu.dot_dimension_numbers<[2], [0], [0, 1], [1], [0, 0, 0, 1, 1, 1], [], []>} : vector<2x8x8xf32>, vector<8x8xf32>, vector<2x8x8xf32> -> vector<2x8x8xf32>
    %c3_100 = arith.constant 3 : index
    %c1_101 = arith.constant 1 : index
    %c0_102 = arith.constant 0 : index
    %c0_103 = arith.constant 0 : index
    %166 = vector.load %arg1[%c3_100, %c1_101, %c0_102, %c0_103] : memref<8x3x32x32xf32, #tpu.memory_space<vmem>>, vector<1x1x8x8xf32>
    %167 = vector.shape_cast %166 : vector<1x1x8x8xf32> to vector<8x8xf32>
    %cst_104 = arith.constant dense<0.000000e+00> : vector<2x8x8xf32>
    %168 = tpu.matmul %159, %167, %cst_104 {dimension_numbers = #tpu.dot_dimension_numbers<[2], [0], [0, 1], [1], [0, 0, 0, 1, 1, 1], [], []>} : vector<2x8x8xf32>, vector<8x8xf32>, vector<2x8x8xf32> -> vector<2x8x8xf32>
    %169 = arith.addf %165, %168 : vector<2x8x8xf32>
    %cst_105 = arith.constant 0.000000e+00 : f32
    %170 = vector.broadcast %cst_105 : f32 to vector<2x1x8xf32>
    %171 = vector.extract_strided_slice %159 {offsets = [0, 1, 0], sizes = [2, 7, 8], strides = [1, 1, 1]} : vector<2x8x8xf32> to vector<2x7x8xf32>
    %172 = tpu.concatenate %171, %170 in 1 : vector<2x7x8xf32>, vector<2x1x8xf32> -> vector<2x8x8xf32>
    %c3_106 = arith.constant 3 : index
    %c2_107 = arith.constant 2 : index
    %c0_108 = arith.constant 0 : index
    %c0_109 = arith.constant 0 : index
    %173 = vector.load %arg1[%c3_106, %c2_107, %c0_108, %c0_109] : memref<8x3x32x32xf32, #tpu.memory_space<vmem>>, vector<1x1x8x8xf32>
    %174 = vector.shape_cast %173 : vector<1x1x8x8xf32> to vector<8x8xf32>
    %cst_110 = arith.constant dense<0.000000e+00> : vector<2x8x8xf32>
    %175 = tpu.matmul %172, %174, %cst_110 {dimension_numbers = #tpu.dot_dimension_numbers<[2], [0], [0, 1], [1], [0, 0, 0, 1, 1, 1], [], []>} : vector<2x8x8xf32>, vector<8x8xf32>, vector<2x8x8xf32> -> vector<2x8x8xf32>
    %176 = arith.addf %169, %175 : vector<2x8x8xf32>
    %cst_111 = arith.constant dense<0.000000e+00> : vector<8xf32>
    %177 = vector.multi_reduction <add>, %176, %cst_111 [0, 1] : vector<2x8x8xf32> to vector<8xf32>
    %178 = vector.shape_cast %177 : vector<8xf32> to vector<1x1x8xf32>
    %cst_112 = arith.constant 6.250000e-02 : f32
    %179 = vector.broadcast %cst_112 : f32 to vector<1x1x8xf32>
    %180 = arith.mulf %178, %179 : vector<1x1x8xf32>
    %181 = arith.mulf %176, %176 : vector<2x8x8xf32>
    %cst_113 = arith.constant dense<0.000000e+00> : vector<8xf32>
    %182 = vector.multi_reduction <add>, %181, %cst_113 [0, 1] : vector<2x8x8xf32> to vector<8xf32>
    %183 = vector.shape_cast %182 : vector<8xf32> to vector<1x1x8xf32>
    %cst_114 = arith.constant 6.250000e-02 : f32
    %184 = vector.broadcast %cst_114 : f32 to vector<1x1x8xf32>
    %185 = arith.mulf %183, %184 : vector<1x1x8xf32>
    %186 = arith.mulf %180, %180 : vector<1x1x8xf32>
    %187 = arith.subf %185, %186 : vector<1x1x8xf32>
    %cst_115 = arith.constant 0.000000e+00 : f32
    %188 = vector.broadcast %cst_115 : f32 to vector<1x1x8xf32>
    %189 = arith.maximumf %187, %188 : vector<1x1x8xf32>
    %c3_116 = arith.constant 3 : index
    %c0_117 = arith.constant 0 : index
    %c0_118 = arith.constant 0 : index
    %190 = vector.load %arg2[%c3_116, %c0_117, %c0_118] : memref<8x2x32xf32, #tpu.memory_space<vmem>>, vector<1x1x8xf32>
    %191 = vector.shape_cast %190 : vector<1x1x8xf32> to vector<1x8xf32>
    %c3_119 = arith.constant 3 : index
    %c1_120 = arith.constant 1 : index
    %c0_121 = arith.constant 0 : index
    %192 = vector.load %arg2[%c3_119, %c1_120, %c0_121] : memref<8x2x32xf32, #tpu.memory_space<vmem>>, vector<1x1x8xf32>
    %193 = vector.shape_cast %192 : vector<1x1x8xf32> to vector<1x8xf32>
    %cst_122 = arith.constant 9.99999974E-6 : f32
    %194 = vector.broadcast %cst_122 : f32 to vector<1x1x8xf32>
    %195 = arith.addf %189, %194 : vector<1x1x8xf32>
    %196 = math.rsqrt %195 : vector<1x1x8xf32>
    %197 = vector.shape_cast %191 : vector<1x8xf32> to vector<1x1x8xf32>
    %198 = arith.mulf %197, %196 : vector<1x1x8xf32>
    %199 = arith.mulf %180, %198 : vector<1x1x8xf32>
    %200 = vector.shape_cast %193 : vector<1x8xf32> to vector<1x1x8xf32>
    %201 = arith.subf %200, %199 : vector<1x1x8xf32>
    %202 = vector.broadcast %198 : vector<1x1x8xf32> to vector<2x8x8xf32>
    %203 = arith.mulf %176, %202 : vector<2x8x8xf32>
    %204 = vector.broadcast %201 : vector<1x1x8xf32> to vector<2x8x8xf32>
    %205 = arith.addf %203, %204 : vector<2x8x8xf32>
    %cst_123 = arith.constant 0.000000e+00 : f32
    %206 = vector.broadcast %cst_123 : f32 to vector<2x8x8xf32>
    %207 = arith.maximumf %205, %206 : vector<2x8x8xf32>
    %208 = tpu.iota {dimensions = array<i32: 1>} : vector<2x8x8xi32>
    %209 = tpu.iota {dimensions = array<i32: 2>} : vector<2x8x8xi32>
    %210 = arith.cmpi eq, %208, %209 : vector<2x8x8xi32>
    %211 = arith.extui %210 : vector<2x8x8xi1> to vector<2x8x8xi32>
    %212 = arith.sitofp %211 : vector<2x8x8xi32> to vector<2x8x8xf32>
    %cst_124 = arith.constant dense<0.000000e+00> : vector<2x8x8xf32>
    %213 = tpu.matmul %212, %207, %cst_124 {dimension_numbers = #tpu.dot_dimension_numbers<[2], [2], [1], [1], [0, 0, 0, 1, 1, 1], [0], [0]>} : vector<2x8x8xf32>, vector<2x8x8xf32>, vector<2x8x8xf32> -> vector<2x8x8xf32>
    %c0_125 = arith.constant 0 : index
    %c0_126 = arith.constant 0 : index
    %c0_127 = arith.constant 0 : index
    %214 = vector.load %arg4[%c0_125, %c0_126, %c0_127] : memref<2x8x8xf32, #tpu.memory_space<vmem>>, vector<2x8x8xf32>
    tpu.vector_store %arg4[%c0_125, %c0_126, %c0_127], %213 {strides = array<i32>} : memref<2x8x8xf32, #tpu.memory_space<vmem>>, vector<2x8x8xf32>,
    %215 = vector.shape_cast %207 : vector<2x8x8xf32> to vector<2x4x2x8xf32>
    %cst_128 = arith.constant dense<0xFF800000> : vector<2x4x8xf32>
    %216 = vector.multi_reduction <maximumf>, %215, %cst_128 [2] : vector<2x4x2x8xf32> to vector<2x4x8xf32>
    %cst_129 = arith.constant 0.000000e+00 : f32
    %217 = vector.broadcast %cst_129 : f32 to vector<2x1x8xf32>
    %218 = vector.extract_strided_slice %216 {offsets = [0, 0, 0], sizes = [2, 3, 8], strides = [1, 1, 1]} : vector<2x4x8xf32> to vector<2x3x8xf32>
    %219 = tpu.concatenate %217, %218 in 1 : vector<2x1x8xf32>, vector<2x3x8xf32> -> vector<2x4x8xf32>
    %c4 = arith.constant 4 : index
    %c0_130 = arith.constant 0 : index
    %c0_131 = arith.constant 0 : index
    %c0_132 = arith.constant 0 : index
    %220 = vector.load %arg1[%c4, %c0_130, %c0_131, %c0_132] : memref<8x3x32x32xf32, #tpu.memory_space<vmem>>, vector<1x1x8x16xf32>
    %221 = vector.shape_cast %220 : vector<1x1x8x16xf32> to vector<8x16xf32>
    %cst_133 = arith.constant dense<0.000000e+00> : vector<2x4x16xf32>
    %222 = tpu.matmul %219, %221, %cst_133 {dimension_numbers = #tpu.dot_dimension_numbers<[2], [0], [0, 1], [1], [0, 0, 0, 1, 1, 1], [], []>} : vector<2x4x8xf32>, vector<8x16xf32>, vector<2x4x16xf32> -> vector<2x4x16xf32>
    %c4_134 = arith.constant 4 : index
    %c1_135 = arith.constant 1 : index
    %c0_136 = arith.constant 0 : index
    %c0_137 = arith.constant 0 : index
    %223 = vector.load %arg1[%c4_134, %c1_135, %c0_136, %c0_137] : memref<8x3x32x32xf32, #tpu.memory_space<vmem>>, vector<1x1x8x16xf32>
    %224 = vector.shape_cast %223 : vector<1x1x8x16xf32> to vector<8x16xf32>
    %cst_138 = arith.constant dense<0.000000e+00> : vector<2x4x16xf32>
    %225 = tpu.matmul %216, %224, %cst_138 {dimension_numbers = #tpu.dot_dimension_numbers<[2], [0], [0, 1], [1], [0, 0, 0, 1, 1, 1], [], []>} : vector<2x4x8xf32>, vector<8x16xf32>, vector<2x4x16xf32> -> vector<2x4x16xf32>
    %226 = arith.addf %222, %225 : vector<2x4x16xf32>
    %cst_139 = arith.constant 0.000000e+00 : f32
    %227 = vector.broadcast %cst_139 : f32 to vector<2x1x8xf32>
    %228 = vector.extract_strided_slice %216 {offsets = [0, 1, 0], sizes = [2, 3, 8], strides = [1, 1, 1]} : vector<2x4x8xf32> to vector<2x3x8xf32>
    %229 = tpu.concatenate %228, %227 in 1 : vector<2x3x8xf32>, vector<2x1x8xf32> -> vector<2x4x8xf32>
    %c4_140 = arith.constant 4 : index
    %c2_141 = arith.constant 2 : index
    %c0_142 = arith.constant 0 : index
    %c0_143 = arith.constant 0 : index
    %230 = vector.load %arg1[%c4_140, %c2_141, %c0_142, %c0_143] : memref<8x3x32x32xf32, #tpu.memory_space<vmem>>, vector<1x1x8x16xf32>
    %231 = vector.shape_cast %230 : vector<1x1x8x16xf32> to vector<8x16xf32>
    %cst_144 = arith.constant dense<0.000000e+00> : vector<2x4x16xf32>
    %232 = tpu.matmul %229, %231, %cst_144 {dimension_numbers = #tpu.dot_dimension_numbers<[2], [0], [0, 1], [1], [0, 0, 0, 1, 1, 1], [], []>} : vector<2x4x8xf32>, vector<8x16xf32>, vector<2x4x16xf32> -> vector<2x4x16xf32>
    %233 = arith.addf %226, %232 : vector<2x4x16xf32>
    %cst_145 = arith.constant dense<0.000000e+00> : vector<16xf32>
    %234 = vector.multi_reduction <add>, %233, %cst_145 [0, 1] : vector<2x4x16xf32> to vector<16xf32>
    %235 = vector.shape_cast %234 : vector<16xf32> to vector<1x1x16xf32>
    %cst_146 = arith.constant 1.250000e-01 : f32
    %236 = vector.broadcast %cst_146 : f32 to vector<1x1x16xf32>
    %237 = arith.mulf %235, %236 : vector<1x1x16xf32>
    %238 = arith.mulf %233, %233 : vector<2x4x16xf32>
    %cst_147 = arith.constant dense<0.000000e+00> : vector<16xf32>
    %239 = vector.multi_reduction <add>, %238, %cst_147 [0, 1] : vector<2x4x16xf32> to vector<16xf32>
    %240 = vector.shape_cast %239 : vector<16xf32> to vector<1x1x16xf32>
    %cst_148 = arith.constant 1.250000e-01 : f32
    %241 = vector.broadcast %cst_148 : f32 to vector<1x1x16xf32>
    %242 = arith.mulf %240, %241 : vector<1x1x16xf32>
    %243 = arith.mulf %237, %237 : vector<1x1x16xf32>
    %244 = arith.subf %242, %243 : vector<1x1x16xf32>
    %cst_149 = arith.constant 0.000000e+00 : f32
    %245 = vector.broadcast %cst_149 : f32 to vector<1x1x16xf32>
    %246 = arith.maximumf %244, %245 : vector<1x1x16xf32>
    %c4_150 = arith.constant 4 : index
    %c0_151 = arith.constant 0 : index
    %c0_152 = arith.constant 0 : index
    %247 = vector.load %arg2[%c4_150, %c0_151, %c0_152] : memref<8x2x32xf32, #tpu.memory_space<vmem>>, vector<1x1x16xf32>
    %248 = vector.shape_cast %247 : vector<1x1x16xf32> to vector<1x16xf32>
    %c4_153 = arith.constant 4 : index
    %c1_154 = arith.constant 1 : index
    %c0_155 = arith.constant 0 : index
    %249 = vector.load %arg2[%c4_153, %c1_154, %c0_155] : memref<8x2x32xf32, #tpu.memory_space<vmem>>, vector<1x1x16xf32>
    %250 = vector.shape_cast %249 : vector<1x1x16xf32> to vector<1x16xf32>
    %cst_156 = arith.constant 9.99999974E-6 : f32
    %251 = vector.broadcast %cst_156 : f32 to vector<1x1x16xf32>
    %252 = arith.addf %246, %251 : vector<1x1x16xf32>
    %253 = math.rsqrt %252 : vector<1x1x16xf32>
    %254 = vector.shape_cast %248 : vector<1x16xf32> to vector<1x1x16xf32>
    %255 = arith.mulf %254, %253 : vector<1x1x16xf32>
    %256 = arith.mulf %237, %255 : vector<1x1x16xf32>
    %257 = vector.shape_cast %250 : vector<1x16xf32> to vector<1x1x16xf32>
    %258 = arith.subf %257, %256 : vector<1x1x16xf32>
    %259 = vector.broadcast %255 : vector<1x1x16xf32> to vector<2x4x16xf32>
    %260 = arith.mulf %233, %259 : vector<2x4x16xf32>
    %261 = vector.broadcast %258 : vector<1x1x16xf32> to vector<2x4x16xf32>
    %262 = arith.addf %260, %261 : vector<2x4x16xf32>
    %cst_157 = arith.constant 0.000000e+00 : f32
    %263 = vector.broadcast %cst_157 : f32 to vector<2x4x16xf32>
    %264 = arith.maximumf %262, %263 : vector<2x4x16xf32>
    %cst_158 = arith.constant 0.000000e+00 : f32
    %265 = vector.broadcast %cst_158 : f32 to vector<2x1x16xf32>
    %266 = vector.extract_strided_slice %264 {offsets = [0, 0, 0], sizes = [2, 3, 16], strides = [1, 1, 1]} : vector<2x4x16xf32> to vector<2x3x16xf32>
    %267 = tpu.concatenate %265, %266 in 1 : vector<2x1x16xf32>, vector<2x3x16xf32> -> vector<2x4x16xf32>
    %c5 = arith.constant 5 : index
    %c0_159 = arith.constant 0 : index
    %c0_160 = arith.constant 0 : index
    %c0_161 = arith.constant 0 : index
    %268 = vector.load %arg1[%c5, %c0_159, %c0_160, %c0_161] : memref<8x3x32x32xf32, #tpu.memory_space<vmem>>, vector<1x1x16x16xf32>
    %269 = vector.shape_cast %268 : vector<1x1x16x16xf32> to vector<16x16xf32>
    %cst_162 = arith.constant dense<0.000000e+00> : vector<2x4x16xf32>
    %270 = tpu.matmul %267, %269, %cst_162 {dimension_numbers = #tpu.dot_dimension_numbers<[2], [0], [0, 1], [1], [0, 0, 0, 1, 1, 1], [], []>} : vector<2x4x16xf32>, vector<16x16xf32>, vector<2x4x16xf32> -> vector<2x4x16xf32>
    %c5_163 = arith.constant 5 : index
    %c1_164 = arith.constant 1 : index
    %c0_165 = arith.constant 0 : index
    %c0_166 = arith.constant 0 : index
    %271 = vector.load %arg1[%c5_163, %c1_164, %c0_165, %c0_166] : memref<8x3x32x32xf32, #tpu.memory_space<vmem>>, vector<1x1x16x16xf32>
    %272 = vector.shape_cast %271 : vector<1x1x16x16xf32> to vector<16x16xf32>
    %cst_167 = arith.constant dense<0.000000e+00> : vector<2x4x16xf32>
    %273 = tpu.matmul %264, %272, %cst_167 {dimension_numbers = #tpu.dot_dimension_numbers<[2], [0], [0, 1], [1], [0, 0, 0, 1, 1, 1], [], []>} : vector<2x4x16xf32>, vector<16x16xf32>, vector<2x4x16xf32> -> vector<2x4x16xf32>
    %274 = arith.addf %270, %273 : vector<2x4x16xf32>
    %cst_168 = arith.constant 0.000000e+00 : f32
    %275 = vector.broadcast %cst_168 : f32 to vector<2x1x16xf32>
    %276 = vector.extract_strided_slice %264 {offsets = [0, 1, 0], sizes = [2, 3, 16], strides = [1, 1, 1]} : vector<2x4x16xf32> to vector<2x3x16xf32>
    %277 = tpu.concatenate %276, %275 in 1 : vector<2x3x16xf32>, vector<2x1x16xf32> -> vector<2x4x16xf32>
    %c5_169 = arith.constant 5 : index
    %c2_170 = arith.constant 2 : index
    %c0_171 = arith.constant 0 : index
    %c0_172 = arith.constant 0 : index
    %278 = vector.load %arg1[%c5_169, %c2_170, %c0_171, %c0_172] : memref<8x3x32x32xf32, #tpu.memory_space<vmem>>, vector<1x1x16x16xf32>
    %279 = vector.shape_cast %278 : vector<1x1x16x16xf32> to vector<16x16xf32>
    %cst_173 = arith.constant dense<0.000000e+00> : vector<2x4x16xf32>
    %280 = tpu.matmul %277, %279, %cst_173 {dimension_numbers = #tpu.dot_dimension_numbers<[2], [0], [0, 1], [1], [0, 0, 0, 1, 1, 1], [], []>} : vector<2x4x16xf32>, vector<16x16xf32>, vector<2x4x16xf32> -> vector<2x4x16xf32>
    %281 = arith.addf %274, %280 : vector<2x4x16xf32>
    %cst_174 = arith.constant dense<0.000000e+00> : vector<16xf32>
    %282 = vector.multi_reduction <add>, %281, %cst_174 [0, 1] : vector<2x4x16xf32> to vector<16xf32>
    %283 = vector.shape_cast %282 : vector<16xf32> to vector<1x1x16xf32>
    %cst_175 = arith.constant 1.250000e-01 : f32
    %284 = vector.broadcast %cst_175 : f32 to vector<1x1x16xf32>
    %285 = arith.mulf %283, %284 : vector<1x1x16xf32>
    %286 = arith.mulf %281, %281 : vector<2x4x16xf32>
    %cst_176 = arith.constant dense<0.000000e+00> : vector<16xf32>
    %287 = vector.multi_reduction <add>, %286, %cst_176 [0, 1] : vector<2x4x16xf32> to vector<16xf32>
    %288 = vector.shape_cast %287 : vector<16xf32> to vector<1x1x16xf32>
    %cst_177 = arith.constant 1.250000e-01 : f32
    %289 = vector.broadcast %cst_177 : f32 to vector<1x1x16xf32>
    %290 = arith.mulf %288, %289 : vector<1x1x16xf32>
    %291 = arith.mulf %285, %285 : vector<1x1x16xf32>
    %292 = arith.subf %290, %291 : vector<1x1x16xf32>
    %cst_178 = arith.constant 0.000000e+00 : f32
    %293 = vector.broadcast %cst_178 : f32 to vector<1x1x16xf32>
    %294 = arith.maximumf %292, %293 : vector<1x1x16xf32>
    %c5_179 = arith.constant 5 : index
    %c0_180 = arith.constant 0 : index
    %c0_181 = arith.constant 0 : index
    %295 = vector.load %arg2[%c5_179, %c0_180, %c0_181] : memref<8x2x32xf32, #tpu.memory_space<vmem>>, vector<1x1x16xf32>
    %296 = vector.shape_cast %295 : vector<1x1x16xf32> to vector<1x16xf32>
    %c5_182 = arith.constant 5 : index
    %c1_183 = arith.constant 1 : index
    %c0_184 = arith.constant 0 : index
    %297 = vector.load %arg2[%c5_182, %c1_183, %c0_184] : memref<8x2x32xf32, #tpu.memory_space<vmem>>, vector<1x1x16xf32>
    %298 = vector.shape_cast %297 : vector<1x1x16xf32> to vector<1x16xf32>
    %cst_185 = arith.constant 9.99999974E-6 : f32
    %299 = vector.broadcast %cst_185 : f32 to vector<1x1x16xf32>
    %300 = arith.addf %294, %299 : vector<1x1x16xf32>
    %301 = math.rsqrt %300 : vector<1x1x16xf32>
    %302 = vector.shape_cast %296 : vector<1x16xf32> to vector<1x1x16xf32>
    %303 = arith.mulf %302, %301 : vector<1x1x16xf32>
    %304 = arith.mulf %285, %303 : vector<1x1x16xf32>
    %305 = vector.shape_cast %298 : vector<1x16xf32> to vector<1x1x16xf32>
    %306 = arith.subf %305, %304 : vector<1x1x16xf32>
    %307 = vector.broadcast %303 : vector<1x1x16xf32> to vector<2x4x16xf32>
    %308 = arith.mulf %281, %307 : vector<2x4x16xf32>
    %309 = vector.broadcast %306 : vector<1x1x16xf32> to vector<2x4x16xf32>
    %310 = arith.addf %308, %309 : vector<2x4x16xf32>
    %cst_186 = arith.constant 0.000000e+00 : f32
    %311 = vector.broadcast %cst_186 : f32 to vector<2x4x16xf32>
    %312 = arith.maximumf %310, %311 : vector<2x4x16xf32>
    %313 = tpu.iota {dimensions = array<i32: 1>} : vector<2x16x16xi32>
    %314 = tpu.iota {dimensions = array<i32: 2>} : vector<2x16x16xi32>
    %315 = arith.cmpi eq, %313, %314 : vector<2x16x16xi32>
    %316 = arith.extui %315 : vector<2x16x16xi1> to vector<2x16x16xi32>
    %317 = arith.sitofp %316 : vector<2x16x16xi32> to vector<2x16x16xf32>
    %cst_187 = arith.constant dense<0.000000e+00> : vector<2x16x4xf32>
    %318 = tpu.matmul %317, %312, %cst_187 {dimension_numbers = #tpu.dot_dimension_numbers<[2], [2], [1], [1], [0, 0, 0, 1, 1, 1], [0], [0]>} : vector<2x16x16xf32>, vector<2x4x16xf32>, vector<2x16x4xf32> -> vector<2x16x4xf32>
    %c0_188 = arith.constant 0 : index
    %c0_189 = arith.constant 0 : index
    %c0_190 = arith.constant 0 : index
    %319 = vector.load %arg5[%c0_188, %c0_189, %c0_190] : memref<2x16x4xf32, #tpu.memory_space<vmem>>, vector<2x16x4xf32>
    tpu.vector_store %arg5[%c0_188, %c0_189, %c0_190], %318 {strides = array<i32>} : memref<2x16x4xf32, #tpu.memory_space<vmem>>, vector<2x16x4xf32>,
    %320 = vector.shape_cast %312 : vector<2x4x16xf32> to vector<2x2x2x16xf32>
    %cst_191 = arith.constant dense<0xFF800000> : vector<2x2x16xf32>
    %321 = vector.multi_reduction <maximumf>, %320, %cst_191 [2] : vector<2x2x2x16xf32> to vector<2x2x16xf32>
    %cst_192 = arith.constant 0.000000e+00 : f32
    %322 = vector.broadcast %cst_192 : f32 to vector<2x1x16xf32>
    %323 = vector.extract_strided_slice %321 {offsets = [0, 0, 0], sizes = [2, 1, 16], strides = [1, 1, 1]} : vector<2x2x16xf32> to vector<2x1x16xf32>
    %324 = tpu.concatenate %322, %323 in 1 : vector<2x1x16xf32>, vector<2x1x16xf32> -> vector<2x2x16xf32>
    %c6 = arith.constant 6 : index
    %c0_193 = arith.constant 0 : index
    %c0_194 = arith.constant 0 : index
    %c0_195 = arith.constant 0 : index
    %325 = vector.load %arg1[%c6, %c0_193, %c0_194, %c0_195] : memref<8x3x32x32xf32, #tpu.memory_space<vmem>>, vector<1x1x16x32xf32>
    %326 = vector.shape_cast %325 : vector<1x1x16x32xf32> to vector<16x32xf32>
    %cst_196 = arith.constant dense<0.000000e+00> : vector<2x2x32xf32>
    %327 = tpu.matmul %324, %326, %cst_196 {dimension_numbers = #tpu.dot_dimension_numbers<[2], [0], [0, 1], [1], [0, 0, 0, 1, 1, 1], [], []>} : vector<2x2x16xf32>, vector<16x32xf32>, vector<2x2x32xf32> -> vector<2x2x32xf32>
    %c6_197 = arith.constant 6 : index
    %c1_198 = arith.constant 1 : index
    %c0_199 = arith.constant 0 : index
    %c0_200 = arith.constant 0 : index
    %328 = vector.load %arg1[%c6_197, %c1_198, %c0_199, %c0_200] : memref<8x3x32x32xf32, #tpu.memory_space<vmem>>, vector<1x1x16x32xf32>
    %329 = vector.shape_cast %328 : vector<1x1x16x32xf32> to vector<16x32xf32>
    %cst_201 = arith.constant dense<0.000000e+00> : vector<2x2x32xf32>
    %330 = tpu.matmul %321, %329, %cst_201 {dimension_numbers = #tpu.dot_dimension_numbers<[2], [0], [0, 1], [1], [0, 0, 0, 1, 1, 1], [], []>} : vector<2x2x16xf32>, vector<16x32xf32>, vector<2x2x32xf32> -> vector<2x2x32xf32>
    %331 = arith.addf %327, %330 : vector<2x2x32xf32>
    %cst_202 = arith.constant 0.000000e+00 : f32
    %332 = vector.broadcast %cst_202 : f32 to vector<2x1x16xf32>
    %333 = vector.extract_strided_slice %321 {offsets = [0, 1, 0], sizes = [2, 1, 16], strides = [1, 1, 1]} : vector<2x2x16xf32> to vector<2x1x16xf32>
    %334 = tpu.concatenate %333, %332 in 1 : vector<2x1x16xf32>, vector<2x1x16xf32> -> vector<2x2x16xf32>
    %c6_203 = arith.constant 6 : index
    %c2_204 = arith.constant 2 : index
    %c0_205 = arith.constant 0 : index
    %c0_206 = arith.constant 0 : index
    %335 = vector.load %arg1[%c6_203, %c2_204, %c0_205, %c0_206] : memref<8x3x32x32xf32, #tpu.memory_space<vmem>>, vector<1x1x16x32xf32>
    %336 = vector.shape_cast %335 : vector<1x1x16x32xf32> to vector<16x32xf32>
    %cst_207 = arith.constant dense<0.000000e+00> : vector<2x2x32xf32>
    %337 = tpu.matmul %334, %336, %cst_207 {dimension_numbers = #tpu.dot_dimension_numbers<[2], [0], [0, 1], [1], [0, 0, 0, 1, 1, 1], [], []>} : vector<2x2x16xf32>, vector<16x32xf32>, vector<2x2x32xf32> -> vector<2x2x32xf32>
    %338 = arith.addf %331, %337 : vector<2x2x32xf32>
    %cst_208 = arith.constant dense<0.000000e+00> : vector<32xf32>
    %339 = vector.multi_reduction <add>, %338, %cst_208 [0, 1] : vector<2x2x32xf32> to vector<32xf32>
    %340 = vector.shape_cast %339 : vector<32xf32> to vector<1x1x32xf32>
    %cst_209 = arith.constant 2.500000e-01 : f32
    %341 = vector.broadcast %cst_209 : f32 to vector<1x1x32xf32>
    %342 = arith.mulf %340, %341 : vector<1x1x32xf32>
    %343 = arith.mulf %338, %338 : vector<2x2x32xf32>
    %cst_210 = arith.constant dense<0.000000e+00> : vector<32xf32>
    %344 = vector.multi_reduction <add>, %343, %cst_210 [0, 1] : vector<2x2x32xf32> to vector<32xf32>
    %345 = vector.shape_cast %344 : vector<32xf32> to vector<1x1x32xf32>
    %cst_211 = arith.constant 2.500000e-01 : f32
    %346 = vector.broadcast %cst_211 : f32 to vector<1x1x32xf32>
    %347 = arith.mulf %345, %346 : vector<1x1x32xf32>
    %348 = arith.mulf %342, %342 : vector<1x1x32xf32>
    %349 = arith.subf %347, %348 : vector<1x1x32xf32>
    %cst_212 = arith.constant 0.000000e+00 : f32
    %350 = vector.broadcast %cst_212 : f32 to vector<1x1x32xf32>
    %351 = arith.maximumf %349, %350 : vector<1x1x32xf32>
    %c6_213 = arith.constant 6 : index
    %c0_214 = arith.constant 0 : index
    %c0_215 = arith.constant 0 : index
    %352 = vector.load %arg2[%c6_213, %c0_214, %c0_215] : memref<8x2x32xf32, #tpu.memory_space<vmem>>, vector<1x1x32xf32>
    %353 = vector.shape_cast %352 : vector<1x1x32xf32> to vector<1x32xf32>
    %c6_216 = arith.constant 6 : index
    %c1_217 = arith.constant 1 : index
    %c0_218 = arith.constant 0 : index
    %354 = vector.load %arg2[%c6_216, %c1_217, %c0_218] : memref<8x2x32xf32, #tpu.memory_space<vmem>>, vector<1x1x32xf32>
    %355 = vector.shape_cast %354 : vector<1x1x32xf32> to vector<1x32xf32>
    %cst_219 = arith.constant 9.99999974E-6 : f32
    %356 = vector.broadcast %cst_219 : f32 to vector<1x1x32xf32>
    %357 = arith.addf %351, %356 : vector<1x1x32xf32>
    %358 = math.rsqrt %357 : vector<1x1x32xf32>
    %359 = vector.shape_cast %353 : vector<1x32xf32> to vector<1x1x32xf32>
    %360 = arith.mulf %359, %358 : vector<1x1x32xf32>
    %361 = arith.mulf %342, %360 : vector<1x1x32xf32>
    %362 = vector.shape_cast %355 : vector<1x32xf32> to vector<1x1x32xf32>
    %363 = arith.subf %362, %361 : vector<1x1x32xf32>
    %364 = vector.broadcast %360 : vector<1x1x32xf32> to vector<2x2x32xf32>
    %365 = arith.mulf %338, %364 : vector<2x2x32xf32>
    %366 = vector.broadcast %363 : vector<1x1x32xf32> to vector<2x2x32xf32>
    %367 = arith.addf %365, %366 : vector<2x2x32xf32>
    %cst_220 = arith.constant 0.000000e+00 : f32
    %368 = vector.broadcast %cst_220 : f32 to vector<2x2x32xf32>
    %369 = arith.maximumf %367, %368 : vector<2x2x32xf32>
    %cst_221 = arith.constant 0.000000e+00 : f32
    %370 = vector.broadcast %cst_221 : f32 to vector<2x1x32xf32>
    %371 = vector.extract_strided_slice %369 {offsets = [0, 0, 0], sizes = [2, 1, 32], strides = [1, 1, 1]} : vector<2x2x32xf32> to vector<2x1x32xf32>
    %372 = tpu.concatenate %370, %371 in 1 : vector<2x1x32xf32>, vector<2x1x32xf32> -> vector<2x2x32xf32>
    %c7 = arith.constant 7 : index
    %c0_222 = arith.constant 0 : index
    %c0_223 = arith.constant 0 : index
    %c0_224 = arith.constant 0 : index
    %373 = vector.load %arg1[%c7, %c0_222, %c0_223, %c0_224] : memref<8x3x32x32xf32, #tpu.memory_space<vmem>>, vector<1x1x32x32xf32>
    %374 = vector.shape_cast %373 : vector<1x1x32x32xf32> to vector<32x32xf32>
    %cst_225 = arith.constant dense<0.000000e+00> : vector<2x2x32xf32>
    %375 = tpu.matmul %372, %374, %cst_225 {dimension_numbers = #tpu.dot_dimension_numbers<[2], [0], [0, 1], [1], [0, 0, 0, 1, 1, 1], [], []>} : vector<2x2x32xf32>, vector<32x32xf32>, vector<2x2x32xf32> -> vector<2x2x32xf32>
    %c7_226 = arith.constant 7 : index
    %c1_227 = arith.constant 1 : index
    %c0_228 = arith.constant 0 : index
    %c0_229 = arith.constant 0 : index
    %376 = vector.load %arg1[%c7_226, %c1_227, %c0_228, %c0_229] : memref<8x3x32x32xf32, #tpu.memory_space<vmem>>, vector<1x1x32x32xf32>
    %377 = vector.shape_cast %376 : vector<1x1x32x32xf32> to vector<32x32xf32>
    %cst_230 = arith.constant dense<0.000000e+00> : vector<2x2x32xf32>
    %378 = tpu.matmul %369, %377, %cst_230 {dimension_numbers = #tpu.dot_dimension_numbers<[2], [0], [0, 1], [1], [0, 0, 0, 1, 1, 1], [], []>} : vector<2x2x32xf32>, vector<32x32xf32>, vector<2x2x32xf32> -> vector<2x2x32xf32>
    %379 = arith.addf %375, %378 : vector<2x2x32xf32>
    %cst_231 = arith.constant 0.000000e+00 : f32
    %380 = vector.broadcast %cst_231 : f32 to vector<2x1x32xf32>
    %381 = vector.extract_strided_slice %369 {offsets = [0, 1, 0], sizes = [2, 1, 32], strides = [1, 1, 1]} : vector<2x2x32xf32> to vector<2x1x32xf32>
    %382 = tpu.concatenate %381, %380 in 1 : vector<2x1x32xf32>, vector<2x1x32xf32> -> vector<2x2x32xf32>
    %c7_232 = arith.constant 7 : index
    %c2_233 = arith.constant 2 : index
    %c0_234 = arith.constant 0 : index
    %c0_235 = arith.constant 0 : index
    %383 = vector.load %arg1[%c7_232, %c2_233, %c0_234, %c0_235] : memref<8x3x32x32xf32, #tpu.memory_space<vmem>>, vector<1x1x32x32xf32>
    %384 = vector.shape_cast %383 : vector<1x1x32x32xf32> to vector<32x32xf32>
    %cst_236 = arith.constant dense<0.000000e+00> : vector<2x2x32xf32>
    %385 = tpu.matmul %382, %384, %cst_236 {dimension_numbers = #tpu.dot_dimension_numbers<[2], [0], [0, 1], [1], [0, 0, 0, 1, 1, 1], [], []>} : vector<2x2x32xf32>, vector<32x32xf32>, vector<2x2x32xf32> -> vector<2x2x32xf32>
    %386 = arith.addf %379, %385 : vector<2x2x32xf32>
    %cst_237 = arith.constant dense<0.000000e+00> : vector<32xf32>
    %387 = vector.multi_reduction <add>, %386, %cst_237 [0, 1] : vector<2x2x32xf32> to vector<32xf32>
    %388 = vector.shape_cast %387 : vector<32xf32> to vector<1x1x32xf32>
    %cst_238 = arith.constant 2.500000e-01 : f32
    %389 = vector.broadcast %cst_238 : f32 to vector<1x1x32xf32>
    %390 = arith.mulf %388, %389 : vector<1x1x32xf32>
    %391 = arith.mulf %386, %386 : vector<2x2x32xf32>
    %cst_239 = arith.constant dense<0.000000e+00> : vector<32xf32>
    %392 = vector.multi_reduction <add>, %391, %cst_239 [0, 1] : vector<2x2x32xf32> to vector<32xf32>
    %393 = vector.shape_cast %392 : vector<32xf32> to vector<1x1x32xf32>
    %cst_240 = arith.constant 2.500000e-01 : f32
    %394 = vector.broadcast %cst_240 : f32 to vector<1x1x32xf32>
    %395 = arith.mulf %393, %394 : vector<1x1x32xf32>
    %396 = arith.mulf %390, %390 : vector<1x1x32xf32>
    %397 = arith.subf %395, %396 : vector<1x1x32xf32>
    %cst_241 = arith.constant 0.000000e+00 : f32
    %398 = vector.broadcast %cst_241 : f32 to vector<1x1x32xf32>
    %399 = arith.maximumf %397, %398 : vector<1x1x32xf32>
    %c7_242 = arith.constant 7 : index
    %c0_243 = arith.constant 0 : index
    %c0_244 = arith.constant 0 : index
    %400 = vector.load %arg2[%c7_242, %c0_243, %c0_244] : memref<8x2x32xf32, #tpu.memory_space<vmem>>, vector<1x1x32xf32>
    %401 = vector.shape_cast %400 : vector<1x1x32xf32> to vector<1x32xf32>
    %c7_245 = arith.constant 7 : index
    %c1_246 = arith.constant 1 : index
    %c0_247 = arith.constant 0 : index
    %402 = vector.load %arg2[%c7_245, %c1_246, %c0_247] : memref<8x2x32xf32, #tpu.memory_space<vmem>>, vector<1x1x32xf32>
    %403 = vector.shape_cast %402 : vector<1x1x32xf32> to vector<1x32xf32>
    %cst_248 = arith.constant 9.99999974E-6 : f32
    %404 = vector.broadcast %cst_248 : f32 to vector<1x1x32xf32>
    %405 = arith.addf %399, %404 : vector<1x1x32xf32>
    %406 = math.rsqrt %405 : vector<1x1x32xf32>
    %407 = vector.shape_cast %401 : vector<1x32xf32> to vector<1x1x32xf32>
    %408 = arith.mulf %407, %406 : vector<1x1x32xf32>
    %409 = arith.mulf %390, %408 : vector<1x1x32xf32>
    %410 = vector.shape_cast %403 : vector<1x32xf32> to vector<1x1x32xf32>
    %411 = arith.subf %410, %409 : vector<1x1x32xf32>
    %412 = vector.broadcast %408 : vector<1x1x32xf32> to vector<2x2x32xf32>
    %413 = arith.mulf %386, %412 : vector<2x2x32xf32>
    %414 = vector.broadcast %411 : vector<1x1x32xf32> to vector<2x2x32xf32>
    %415 = arith.addf %413, %414 : vector<2x2x32xf32>
    %cst_249 = arith.constant 0.000000e+00 : f32
    %416 = vector.broadcast %cst_249 : f32 to vector<2x2x32xf32>
    %417 = arith.maximumf %415, %416 : vector<2x2x32xf32>
    %418 = tpu.iota {dimensions = array<i32: 1>} : vector<2x32x32xi32>
    %419 = tpu.iota {dimensions = array<i32: 2>} : vector<2x32x32xi32>
    %420 = arith.cmpi eq, %418, %419 : vector<2x32x32xi32>
    %421 = arith.extui %420 : vector<2x32x32xi1> to vector<2x32x32xi32>
    %422 = arith.sitofp %421 : vector<2x32x32xi32> to vector<2x32x32xf32>
    %cst_250 = arith.constant dense<0.000000e+00> : vector<2x32x2xf32>
    %423 = tpu.matmul %422, %417, %cst_250 {dimension_numbers = #tpu.dot_dimension_numbers<[2], [2], [1], [1], [0, 0, 0, 1, 1, 1], [0], [0]>} : vector<2x32x32xf32>, vector<2x2x32xf32>, vector<2x32x2xf32> -> vector<2x32x2xf32>
    %c0_251 = arith.constant 0 : index
    %c0_252 = arith.constant 0 : index
    %c0_253 = arith.constant 0 : index
    %424 = vector.load %arg6[%c0_251, %c0_252, %c0_253] : memref<2x32x2xf32, #tpu.memory_space<vmem>>, vector<2x32x2xf32>
    tpu.vector_store %arg6[%c0_251, %c0_252, %c0_253], %423 {strides = array<i32>} : memref<2x32x2xf32, #tpu.memory_space<vmem>>, vector<2x32x2xf32>,
    %425 = vector.shape_cast %417 : vector<2x2x32xf32> to vector<2x1x2x32xf32>
    %cst_254 = arith.constant dense<0xFF800000> : vector<2x1x32xf32>
    %426 = vector.multi_reduction <maximumf>, %425, %cst_254 [2] : vector<2x1x2x32xf32> to vector<2x1x32xf32>
    %427 = tpu.iota {dimensions = array<i32: 1>} : vector<2x32x32xi32>
    %428 = tpu.iota {dimensions = array<i32: 2>} : vector<2x32x32xi32>
    %429 = arith.cmpi eq, %427, %428 : vector<2x32x32xi32>
    %430 = arith.extui %429 : vector<2x32x32xi1> to vector<2x32x32xi32>
    %431 = arith.sitofp %430 : vector<2x32x32xi32> to vector<2x32x32xf32>
    %cst_255 = arith.constant dense<0.000000e+00> : vector<2x32x1xf32>
    %432 = tpu.matmul %431, %426, %cst_255 {dimension_numbers = #tpu.dot_dimension_numbers<[2], [2], [1], [1], [0, 0, 0, 1, 1, 1], [0], [0]>} : vector<2x32x32xf32>, vector<2x1x32xf32>, vector<2x32x1xf32> -> vector<2x32x1xf32>
    %c0_256 = arith.constant 0 : index
    %c0_257 = arith.constant 0 : index
    %c0_258 = arith.constant 0 : index
    %433 = vector.load %arg7[%c0_256, %c0_257, %c0_258] : memref<2x32x1xf32, #tpu.memory_space<vmem>>, vector<2x32x1xf32>
    tpu.vector_store %arg7[%c0_256, %c0_257, %c0_258], %432 {strides = array<i32>} : memref<2x32x1xf32, #tpu.memory_space<vmem>>, vector<2x32x1xf32>,
    return
  }
}

</mosaic_0001>

<llo_original>
// kernel: unet1d_encoder.1
$region0: #{unet1d_encoder.1}
  #allocation0 [shape = 'u32[]', space=smem, size = 0x4, offset = 0x4, fixed_abs, tag = 'smem constant byte address 0x4 - core index']
  #allocation1 [shape = 'u32[72,128]{1,0:T(1,128)}', space=vmem, size = 0x9000, scoped, tag = 'internal scratch']
  %s0 = inlined_call_operand.hbm [shape: f32[2,2,16], index: 0, kind: input, shape index: {}]
  %s1 = inlined_call_operand.hbm [shape: f32[8,3,32,32], index: 1, kind: input, shape index: {}]
  %s2 = inlined_call_operand.hbm [shape: f32[8,2,32], index: 2, kind: input, shape index: {}]
  %s3 = inlined_call_operand.hbm [shape: f32[2,4,16], index: 3, kind: output, shape index: {0}]
  %s4 = inlined_call_operand.hbm [shape: f32[2,8,8], index: 4, kind: output, shape index: {1}]
  %s5 = inlined_call_operand.vmem [shape: f32[2,16,4], index: 5, kind: output, shape index: {2}]
  %s6 = inlined_call_operand.vmem [shape: f32[2,32,2], index: 6, kind: output, shape index: {3}]
  %s7 = inlined_call_operand.vmem [shape: f32[2,32,1], index: 7, kind: output, shape index: {4}]
  %8 = xla_tuple %s3, %s4, %s5, %s6, %s7
  %s9 = sld [smem:[#allocation0]]
  $region66: #{unet1d_encoder.1} parent=0
    _
  %s11 = ssub.s32 1, %s9
  %s12 = scalar_select 0, %s11, %s9
  $region1: #{unet1d_encoder.1} parent=0
    #allocation2 [shape = 'u8[2048]{0}', space=vmem, size = 0x800, scoped, tag = 'input window, operand 0, single buffered']
    #allocation3 [shape = 's32[1]{0}', space=sflag, size = 0x4, scoped, tag = 'scoped memory for unet1d_encoder.1']
    #allocation4 [shape = 's32[1]{0}', space=sflag, size = 0x4, scoped, tag = 'scoped memory for unet1d_encoder.1']
    #allocation5 [shape = 'u8[393216]{0}', space=vmem, size = 0x60000, scoped, tag = 'input window, operand 1, single buffered']
    #allocation6 [shape = 's32[1]{0}', space=sflag, size = 0x4, scoped, tag = 'scoped memory for unet1d_encoder.1']
    #allocation7 [shape = 'u8[8192]{0}', space=vmem, size = 0x2000, scoped, tag = 'input window, operand 2, single buffered']
    #allocation8 [shape = 'u8[4096]{0}', space=vmem, size = 0x1000, scoped, tag = 'output window, operand 0, single buffered']
    #allocation9 [shape = 'u8[8192]{0}', space=vmem, size = 0x2000, scoped, tag = 'output window, operand 1, single buffered']
    #allocation10 [shape = 's32[1]{0}', space=sflag, size = 0x4, scoped, tag = 'scoped memory for unet1d_encoder.1']
    %13 = vsyncpa [#allocation3], 0
    %14 = vsyncpa [#allocation6], 0
    %15 = vsyncpa [#allocation4], 0
    %16 = vsyncpa [#allocation10], 0
    // Predicated region
    $region2: #{unet1d_encoder.1} parent=1 // pred_check
      _
    $region3: #{unet1d_encoder.1} parent=1 // pred_check_branch
      %18 = sbr.rel (0) target = $region5
    $region4: #{unet1d_encoder.1} parent=1 // pred_region
      %20 = vsyncadd [#allocation3], 0
      %s21 = sshll.u32 %s0, 4
      %s22 = int_to_ptr.hbm [resolvable:$true] %s21
      %s23 = sshll.u32 [#allocation2], 4
      %s24 = int_to_ptr.vmem [resolvable:$true] %s23
      %29 = dma.hbm_to_vmem [thread:$0]  %s22, 64, %s24, [#allocation3], 32, 32, 2
    $region5: #{unet1d_encoder.1} parent=1 // pred_fallthru
      _
    // Predicated region
    $region6: #{unet1d_encoder.1} parent=1 // pred_check
      _
    $region7: #{unet1d_encoder.1} parent=1 // pred_check_branch
      %31 = sbr.rel (0) target = $region9
    $region8: #{unet1d_encoder.1} parent=1 // pred_region
      %33 = vsyncadd [#allocation6], 0
      %s34 = sshll.u32 %s1, 4
      %s35 = int_to_ptr.hbm [resolvable:$true] %s34
      %s36 = sshll.u32 [#allocation5], 4
      %s37 = int_to_ptr.vmem [resolvable:$true] %s36
      %42 = dma.hbm_to_vmem [thread:$0]  %s35, 12288, %s37, [#allocation6], 128, 128, 8
    $region9: #{unet1d_encoder.1} parent=1 // pred_fallthru
      _
    // Predicated region
    $region10: #{unet1d_encoder.1} parent=1 // pred_check
      _
    $region11: #{unet1d_encoder.1} parent=1 // pred_check_branch
      %44 = sbr.rel (0) target = $region13
    $region12: #{unet1d_encoder.1} parent=1 // pred_region
      %46 = vsyncadd [#allocation6], 0
      %s47 = sshll.u32 %s2, 4
      %s48 = int_to_ptr.hbm [resolvable:$true] %s47
      %s49 = sshll.u32 [#allocation7], 4
      %s50 = int_to_ptr.vmem [resolvable:$true] %s49
      %55 = dma.hbm_to_vmem [thread:$0]  %s48, 256, %s50, [#allocation6], 32, 32, 2
    $region13: #{unet1d_encoder.1} parent=1 // pred_fallthru
      _
    // Predicated region
    $region14: #{unet1d_encoder.1} parent=1 // pred_check
      _
    $region15: #{unet1d_encoder.1} parent=1 // pred_check_branch
      %57 = sbr.rel (0) target = $region17
    $region16: #{unet1d_encoder.1} parent=1 // pred_region
      %59 = dma.done [#allocation3], 64
    $region17: #{unet1d_encoder.1} parent=1 // pred_fallthru
      _
    // Predicated region
    $region18: #{unet1d_encoder.1} parent=1 // pred_check
      _
    $region19: #{unet1d_encoder.1} parent=1 // pred_check_branch
      %61 = sbr.rel (0) target = $region21
    $region20: #{unet1d_encoder.1} parent=1 // pred_region
      %63 = dma.done [#allocation6], 12288
    $region21: #{unet1d_encoder.1} parent=1 // pred_fallthru
      _
    // Predicated region
    $region22: #{unet1d_encoder.1} parent=1 // pred_check
      _
    $region23: #{unet1d_encoder.1} parent=1 // pred_check_branch
      %65 = sbr.rel (0) target = $region25
    $region24: #{unet1d_encoder.1} parent=1 // pred_region
      %67 = dma.done [#allocation6], 256
    $region25: #{unet1d_encoder.1} parent=1 // pred_fallthru
      _
    %v68 = vld [vmem:[#allocation2] sm:$0x3]
    %v69 = vld [vmem:[#allocation2 + $0x2] sm:$0x3]
    %v70 = vlaneseq
    %v71 = vshrl.u32 %v70, 7
    %v72 = vadd.s32 %v71, 8
    %v73 = vlaneseq
    %v74 = vand.u32 %v73, 127
    %vm75 = vcmp.eq.s32.totalorder %v71, %v74
    %vm76 = vcmp.eq.s32.totalorder %v72, %v74
    %v77 = vsel %vm75, 1, 0
    %v78 = vsel %vm76, 1, 0
    %v79 = vcvt.s32.f32 %v77
    %v80 = vcvt.s32.f32 %v78
    %vm81 = vcmask 130048
    %v83 = vsel %vm81, %v79, 0
    %v86 = vsel %vm81, %v80, 0
    %v89 = vsel %vm81, %v68, 0
    %91 = vmatpush.xpose.msra.mxu0 0.0
    %92 = vmatpush.xpose.msra.mxu0 0.0
    %93 = vmatpush.xpose.msra.mxu0 0.0
    %94 = vmatpush.xpose.msra.mxu0 0.0
    %95 = vmatpush.xpose.msra.mxu0 0.0
    %96 = vmatpush.xpose.msra.mxu0 0.0
    %97 = vmatpush.xpose.msra.mxu0 0.0
    %98 = vmatpush.xpose.msra.mxu0 0.0
    %99 = vmatpush.xpose.msra.mxu0 0.0
    %100 = vmatpush.xpose.msra.mxu0 0.0
    %101 = vmatpush.xpose.msra.mxu0 0.0
    %102 = vmatpush.xpose.msra.mxu0 0.0
    %103 = vmatpush.xpose.msra.mxu0 0.0
    %104 = vmatpush.xpose.msra.mxu0 0.0
    %105 = vmatpush.xpose.msra.mxu0 0.0
    %106 = vmatpush.xpose.msra.mxu0 %v89
    %107 = vmatmul.f32.gmra.mxu0 %v83
    %v108 = vpop.f32.mrf.mxu0
    %v109 = vadd.f32 0.0, %v108
    %110 = vmatmul.f32.gmra.mxu0 %v86
    %v111 = vpop.f32.mrf.mxu0
    %v112 = vadd.f32 0.0, %v111
    %113 = vdwg.mxu0
    %v115 = vsel %vm81, %v69, 0
    %117 = vmatpush.xpose.msra.mxu0 0.0
    %118 = vmatpush.xpose.msra.mxu0 0.0
    %119 = vmatpush.xpose.msra.mxu0 0.0
    %120 = vmatpush.xpose.msra.mxu0 0.0
    %121 = vmatpush.xpose.msra.mxu0 0.0
    %122 = vmatpush.xpose.msra.mxu0 0.0
    %123 = vmatpush.xpose.msra.mxu0 0.0
    %124 = vmatpush.xpose.msra.mxu0 0.0
    %125 = vmatpush.xpose.msra.mxu0 0.0
    %126 = vmatpush.xpose.msra.mxu0 0.0
    %127 = vmatpush.xpose.msra.mxu0 0.0
    %128 = vmatpush.xpose.msra.mxu0 0.0
    %129 = vmatpush.xpose.msra.mxu0 0.0
    %130 = vmatpush.xpose.msra.mxu0 0.0
    %131 = vmatpush.xpose.msra.mxu0 0.0
    %132 = vmatpush.xpose.msra.mxu0 %v115
    %133 = vmatmul.f32.gmra.mxu0 %v83
    %v134 = vpop.f32.mrf.mxu0
    %v135 = vadd.f32 0.0, %v134
    %136 = vmatmul.f32.gmra.mxu0 %v86
    %v137 = vpop.f32.mrf.mxu0
    %v138 = vadd.f32 0.0, %v137
    %139 = vdwg.mxu0
    %vm144 = vcmask 1040384
    %v145 = vrot.slane %v109, 7
    %v146 = vrot.slane %v112, 7
    %v147 = vsel %vm144, %v145, %v146
    %v148 = vrot.slane %v135, 7
    %v149 = vrot.slane %v138, 7
    %v150 = vsel %vm144, %v148, %v149
    %v153 = vsel %vm144, 0.0, %v145
    %v154 = vsel %vm144, 0.0, %v148
    %v155 = vld [vmem:[#allocation5] sm:$0x3]
    %s156 = scalar_lea.vmem [#allocation5], 32
    %v157 = vld [vmem:[%s156] sm:$0x3]
    %vm158 = vcmask 15360
    %v159 = vsel %vm158, %v109, 0
    %v161 = vsel %vm158, %v112, 0
    %v163 = vsel %vm158, %v135, 0
    %v165 = vsel %vm158, %v138, 0
    %vm167 = vcmask 1041408
    %v169 = vsel %vm167, %v157, 0
    %171 = vmatpush.msra.mxu0 0.0
    %172 = vmatpush.msra.mxu0 0.0
    %173 = vmatpush.msra.mxu0 0.0
    %174 = vmatpush.msra.mxu0 0.0
    %175 = vmatpush.msra.mxu0 0.0
    %176 = vmatpush.msra.mxu0 0.0
    %177 = vmatpush.msra.mxu0 0.0
    %178 = vmatpush.msra.mxu0 0.0
    %179 = vmatpush.msra.mxu0 0.0
    %180 = vmatpush.msra.mxu0 0.0
    %181 = vmatpush.msra.mxu0 0.0
    %182 = vmatpush.msra.mxu0 0.0
    %183 = vmatpush.msra.mxu0 0.0
    %184 = vmatpush.msra.mxu0 0.0
    %185 = vmatpush.msra.mxu0 0.0
    %186 = vmatpush.msra.mxu0 %v169
    %187 = vmatmul.f32.gmra.mxu0 %v159
    %v188 = vpop.f32.mrf.mxu0
    %v189 = vadd.f32 0.0, %v188
    %190 = vmatmul.f32.gmra.mxu0 %v161
    %v191 = vpop.f32.mrf.mxu0
    %v192 = vadd.f32 0.0, %v191
    %193 = vmatmul.f32.gmra.mxu0 %v163
    %v194 = vpop.f32.mrf.mxu0
    %v195 = vadd.f32 0.0, %v194
    %196 = vmatmul.f32.gmra.mxu0 %v165
    %v197 = vpop.f32.mrf.mxu0
    %v198 = vadd.f32 0.0, %v197
    %199 = vdwg.mxu0
    %v201 = vsel %vm158, %v153, 0
    %v203 = vsel %vm158, %v147, 0
    %v206 = vsel %vm158, %v154, 0
    %v208 = vsel %vm158, %v150, 0
    %v211 = vsel %vm167, %v155, 0
    %213 = vmatpush.msra.mxu0 0.0
    %214 = vmatpush.msra.mxu0 0.0
    %215 = vmatpush.msra.mxu0 0.0
    %216 = vmatpush.msra.mxu0 0.0
    %217 = vmatpush.msra.mxu0 0.0
    %218 = vmatpush.msra.mxu0 0.0
    %219 = vmatpush.msra.mxu0 0.0
    %220 = vmatpush.msra.mxu0 0.0
    %221 = vmatpush.msra.mxu0 0.0
    %222 = vmatpush.msra.mxu0 0.0
    %223 = vmatpush.msra.mxu0 0.0
    %224 = vmatpush.msra.mxu0 0.0
    %225 = vmatpush.msra.mxu0 0.0
    %226 = vmatpush.msra.mxu0 0.0
    %227 = vmatpush.msra.mxu0 0.0
    %228 = vmatpush.msra.mxu0 %v211
    %229 = vmatmul.f32.gmra.mxu0 %v201
    %v230 = vpop.f32.mrf.mxu0
    %v231 = vadd.f32 %v189, %v230
    %232 = vmatmul.f32.gmra.mxu0 %v203
    %v233 = vpop.f32.mrf.mxu0
    %v234 = vadd.f32 %v192, %v233
    %235 = vmatmul.f32.gmra.mxu0 %v206
    %v236 = vpop.f32.mrf.mxu0
    %v237 = vadd.f32 %v195, %v236
    %238 = vmatmul.f32.gmra.mxu0 %v208
    %v239 = vpop.f32.mrf.mxu0
    %v240 = vadd.f32 %v198, %v239
    %241 = vdwg.mxu0
    %vm242 = vcmask 1046528
    %v243 = vrot.slane %v109, 1
    %v244 = vrot.slane %v112, 1
    %v245 = vsel %vm242, %v243, %v244
    %v246 = vrot.slane %v135, 1
    %v247 = vrot.slane %v138, 1
    %v248 = vsel %vm242, %v246, %v247
    %v251 = vsel %vm242, %v244, 0.0
    %v252 = vsel %vm242, %v247, 0.0
    %s253 = scalar_lea.vmem [#allocation5], 64
    %v254 = vld [vmem:[%s253] sm:$0x3]
    %v255 = vsel %vm158, %v245, 0
    %v258 = vsel %vm158, %v251, 0
    %v260 = vsel %vm158, %v248, 0
    %v263 = vsel %vm158, %v252, 0
    %v266 = vsel %vm167, %v254, 0
    %268 = vmatpush.msra.mxu0 0.0
    %269 = vmatpush.msra.mxu0 0.0
    %270 = vmatpush.msra.mxu0 0.0
    %271 = vmatpush.msra.mxu0 0.0
    %272 = vmatpush.msra.mxu0 0.0
    %273 = vmatpush.msra.mxu0 0.0
    %274 = vmatpush.msra.mxu0 0.0
    %275 = vmatpush.msra.mxu0 0.0
    %276 = vmatpush.msra.mxu0 0.0
    %277 = vmatpush.msra.mxu0 0.0
    %278 = vmatpush.msra.mxu0 0.0
    %279 = vmatpush.msra.mxu0 0.0
    %280 = vmatpush.msra.mxu0 0.0
    %281 = vmatpush.msra.mxu0 0.0
    %282 = vmatpush.msra.mxu0 0.0
    %283 = vmatpush.msra.mxu0 %v266
    %284 = vmatmul.f32.gmra.mxu0 %v255
    %v285 = vpop.f32.mrf.mxu0
    %v286 = vadd.f32 0.0, %v285
    %287 = vmatmul.f32.gmra.mxu0 %v258
    %v288 = vpop.f32.mrf.mxu0
    %v289 = vadd.f32 0.0, %v288
    %290 = vmatmul.f32.gmra.mxu0 %v260
    %v291 = vpop.f32.mrf.mxu0
    %v292 = vadd.f32 0.0, %v291
    %293 = vmatmul.f32.gmra.mxu0 %v263
    %v294 = vpop.f32.mrf.mxu0
    %v295 = vadd.f32 0.0, %v294
    %296 = vdwg.mxu0
    %v297 = vadd.f32 %v231, %v286
    %v298 = vadd.f32 %v234, %v289
    %v299 = vadd.f32 %v237, %v292
    %v300 = vadd.f32 %v240, %v295
    %vm301 = vcmask 31744
    %v302 = vsel %vm301, %v297, 0.0
    %v303 = vsel %vm301, %v298, 0.0
    %v304 = vadd.f32 %v302, %v303
    %v305 = vsel %vm301, %v299, 0.0
    %v306 = vadd.f32 %v304, %v305
    %v307 = vsel %vm301, %v300, 0.0
    %v308 = vadd.f32 %v306, %v307
    %v309 = vrot.slane %v308, 4
    %v310 = vadd.f32 %v308, %v309
    %v311 = vrot.slane %v310, 2
    %v312 = vadd.f32 %v310, %v311
    %v313 = vrot.slane %v312, 1
    %v314 = vadd.f32 %v312, %v313
    %v315 = vmul.f32 %v314, 0.03125
    %v316 = vmul.f32 %v297, %v297
    %v317 = vmul.f32 %v298, %v298
    %v318 = vmul.f32 %v299, %v299
    %v319 = vmul.f32 %v300, %v300
    %v320 = vsel %vm301, %v316, 0.0
    %v321 = vsel %vm301, %v317, 0.0
    %v322 = vadd.f32 %v320, %v321
    %v323 = vsel %vm301, %v318, 0.0
    %v324 = vadd.f32 %v322, %v323
    %v325 = vsel %vm301, %v319, 0.0
    %v326 = vadd.f32 %v324, %v325
    %v327 = vrot.slane %v326, 4
    %v328 = vadd.f32 %v326, %v327
    %v329 = vrot.slane %v328, 2
    %v330 = vadd.f32 %v328, %v329
    %v331 = vrot.slane %v330, 1
    %v332 = vadd.f32 %v330, %v331
    %v333 = vmul.f32 %v332, 0.03125
    %v334 = vmul.f32 %v315, %v315
    %v335 = vsub.f32 %v333, %v334
    %v336 = vmax.f32 %v335, 0.0
    %v337 = vld [vmem:[#allocation7] sm:$0x1]
    %v338 = vld [vmem:[#allocation7 + $0x1] sm:$0x1]
    %v339 = vadd.f32 %v336, 1e-05
    %v340 = vrsqrt.pop %v339
    %v341 = vmul.f32 %v340, %v339
    %v342 = vmul.f32 %v341, %v340
    %v343 = vmul.f32 0.5, %v342
    %v344 = vsub.f32 1.5, %v343
    %v345 = vmul.f32 %v340, %v344
    %vm346 = vweird.f32 %v339
    %vm347 = vweird.f32 %v340
    %vm348 = vmor %vm346, %vm347
    %v349 = vsel %vm348, %v340, %v345
    %v350 = vmul.f32 %v337, %v349
    %v351 = vmul.f32 %v315, %v350
    %v352 = vsub.f32 %v338, %v351
    %v353 = vperm.slane %v350, 0
    %v354 = vmul.f32 %v297, %v353
    %v355 = vmul.f32 %v298, %v353
    %v356 = vmul.f32 %v299, %v353
    %v357 = vmul.f32 %v300, %v353
    %v358 = vperm.slane %v352, 0
    %v359 = vadd.f32 %v354, %v358
    %v360 = vadd.f32 %v355, %v358
    %v361 = vadd.f32 %v356, %v358
    %v362 = vadd.f32 %v357, %v358
    %v363 = vmax.f32 %v359, 0.0
    %v364 = vmax.f32 %v360, 0.0
    %v365 = vmax.f32 %v361, 0.0
    %v366 = vmax.f32 %v362, 0.0
    %v371 = vrot.slane %v363, 7
    %v372 = vrot.slane %v364, 7
    %v373 = vsel %vm144, %v371, %v372
    %v374 = vrot.slane %v365, 7
    %v375 = vrot.slane %v366, 7
    %v376 = vsel %vm144, %v374, %v375
    %v379 = vsel %vm144, 0.0, %v371
    %v380 = vsel %vm144, 0.0, %v374
    %s381 = scalar_lea.vmem [#allocation5], 96
    %v382 = vld [vmem:[%s381] sm:$0xf]
    %s383 = scalar_lea.vmem [#allocation5], 128
    %v384 = vld [vmem:[%s383] sm:$0xf]
    %v385 = vsel %vm301, %v363, 0
    %v387 = vsel %vm301, %v364, 0
    %v389 = vsel %vm301, %v365, 0
    %v391 = vsel %vm301, %v366, 0
    %vm393 = vcmask 1043456
    %v395 = vsel %vm393, %v384, 0
    %397 = vmatpush.msra.mxu0 0.0
    %398 = vmatpush.msra.mxu0 0.0
    %399 = vmatpush.msra.mxu0 0.0
    %400 = vmatpush.msra.mxu0 0.0
    %401 = vmatpush.msra.mxu0 0.0
    %402 = vmatpush.msra.mxu0 0.0
    %403 = vmatpush.msra.mxu0 0.0
    %404 = vmatpush.msra.mxu0 0.0
    %405 = vmatpush.msra.mxu0 0.0
    %406 = vmatpush.msra.mxu0 0.0
    %407 = vmatpush.msra.mxu0 0.0
    %408 = vmatpush.msra.mxu0 0.0
    %409 = vmatpush.msra.mxu0 0.0
    %410 = vmatpush.msra.mxu0 0.0
    %411 = vmatpush.msra.mxu0 0.0
    %412 = vmatpush.msra.mxu0 %v395
    %413 = vmatmul.f32.gmra.mxu0 %v385
    %v414 = vpop.f32.mrf.mxu0
    %v415 = vadd.f32 0.0, %v414
    %416 = vmatmul.f32.gmra.mxu0 %v387
    %v417 = vpop.f32.mrf.mxu0
    %v418 = vadd.f32 0.0, %v417
    %419 = vmatmul.f32.gmra.mxu0 %v389
    %v420 = vpop.f32.mrf.mxu0
    %v421 = vadd.f32 0.0, %v420
    %422 = vmatmul.f32.gmra.mxu0 %v391
    %v423 = vpop.f32.mrf.mxu0
    %v424 = vadd.f32 0.0, %v423
    %425 = vdwg.mxu0
    %v427 = vsel %vm301, %v379, 0
    %v429 = vsel %vm301, %v373, 0
    %v432 = vsel %vm301, %v380, 0
    %v434 = vsel %vm301, %v376, 0
    %v437 = vsel %vm393, %v382, 0
    %439 = vmatpush.msra.mxu0 0.0
    %440 = vmatpush.msra.mxu0 0.0
    %441 = vmatpush.msra.mxu0 0.0
    %442 = vmatpush.msra.mxu0 0.0
    %443 = vmatpush.msra.mxu0 0.0
    %444 = vmatpush.msra.mxu0 0.0
    %445 = vmatpush.msra.mxu0 0.0
    %446 = vmatpush.msra.mxu0 0.0
    %447 = vmatpush.msra.mxu0 0.0
    %448 = vmatpush.msra.mxu0 0.0
    %449 = vmatpush.msra.mxu0 0.0
    %450 = vmatpush.msra.mxu0 0.0
    %451 = vmatpush.msra.mxu0 0.0
    %452 = vmatpush.msra.mxu0 0.0
    %453 = vmatpush.msra.mxu0 0.0
    %454 = vmatpush.msra.mxu0 %v437
    %455 = vmatmul.f32.gmra.mxu0 %v427
    %v456 = vpop.f32.mrf.mxu0
    %v457 = vadd.f32 %v415, %v456
    %458 = vmatmul.f32.gmra.mxu0 %v429
    %v459 = vpop.f32.mrf.mxu0
    %v460 = vadd.f32 %v418, %v459
    %461 = vmatmul.f32.gmra.mxu0 %v432
    %v462 = vpop.f32.mrf.mxu0
    %v463 = vadd.f32 %v421, %v462
    %464 = vmatmul.f32.gmra.mxu0 %v434
    %v465 = vpop.f32.mrf.mxu0
    %v466 = vadd.f32 %v424, %v465
    %467 = vdwg.mxu0
    %v468 = vrot.slane %v363, 1
    %v469 = vrot.slane %v364, 1
    %v470 = vsel %vm242, %v468, %v469
    %v471 = vrot.slane %v365, 1
    %v472 = vrot.slane %v366, 1
    %v473 = vsel %vm242, %v471, %v472
    %v476 = vsel %vm242, %v469, 0.0
    %v477 = vsel %vm242, %v472, 0.0
    %s478 = scalar_lea.vmem [#allocation5], 160
    %v479 = vld [vmem:[%s478] sm:$0xf]
    %v480 = vsel %vm301, %v470, 0
    %v483 = vsel %vm301, %v476, 0
    %v485 = vsel %vm301, %v473, 0
    %v488 = vsel %vm301, %v477, 0
    %v491 = vsel %vm393, %v479, 0
    %493 = vmatpush.msra.mxu0 0.0
    %494 = vmatpush.msra.mxu0 0.0
    %495 = vmatpush.msra.mxu0 0.0
    %496 = vmatpush.msra.mxu0 0.0
    %497 = vmatpush.msra.mxu0 0.0
    %498 = vmatpush.msra.mxu0 0.0
    %499 = vmatpush.msra.mxu0 0.0
    %500 = vmatpush.msra.mxu0 0.0
    %501 = vmatpush.msra.mxu0 0.0
    %502 = vmatpush.msra.mxu0 0.0
    %503 = vmatpush.msra.mxu0 0.0
    %504 = vmatpush.msra.mxu0 0.0
    %505 = vmatpush.msra.mxu0 0.0
    %506 = vmatpush.msra.mxu0 0.0
    %507 = vmatpush.msra.mxu0 0.0
    %508 = vmatpush.msra.mxu0 %v491
    %509 = vmatmul.f32.gmra.mxu0 %v480
    %v510 = vpop.f32.mrf.mxu0
    %v511 = vadd.f32 0.0, %v510
    %512 = vmatmul.f32.gmra.mxu0 %v483
    %v513 = vpop.f32.mrf.mxu0
    %v514 = vadd.f32 0.0, %v513
    %515 = vmatmul.f32.gmra.mxu0 %v485
    %v516 = vpop.f32.mrf.mxu0
    %v517 = vadd.f32 0.0, %v516
    %518 = vmatmul.f32.gmra.mxu0 %v488
    %v519 = vpop.f32.mrf.mxu0
    %v520 = vadd.f32 0.0, %v519
    %521 = vdwg.mxu0
    %v522 = vadd.f32 %v457, %v511
    %v523 = vadd.f32 %v460, %v514
    %v524 = vadd.f32 %v463, %v517
    %v525 = vadd.f32 %v466, %v520
    %v526 = vsel %vm301, %v522, 0.0
    %v527 = vsel %vm301, %v523, 0.0
    %v528 = vadd.f32 %v526, %v527
    %v529 = vsel %vm301, %v524, 0.0
    %v530 = vadd.f32 %v528, %v529
    %v531 = vsel %vm301, %v525, 0.0
    %v532 = vadd.f32 %v530, %v531
    %v533 = vrot.slane %v532, 4
    %v534 = vadd.f32 %v532, %v533
    %v535 = vrot.slane %v534, 2
    %v536 = vadd.f32 %v534, %v535
    %v537 = vrot.slane %v536, 1
    %v538 = vadd.f32 %v536, %v537
    %v539 = vmul.f32 %v538, 0.03125
    %v540 = vmul.f32 %v522, %v522
    %v541 = vmul.f32 %v523, %v523
    %v542 = vmul.f32 %v524, %v524
    %v543 = vmul.f32 %v525, %v525
    %v544 = vsel %vm301, %v540, 0.0
    %v545 = vsel %vm301, %v541, 0.0
    %v546 = vadd.f32 %v544, %v545
    %v547 = vsel %vm301, %v542, 0.0
    %v548 = vadd.f32 %v546, %v547
    %v549 = vsel %vm301, %v543, 0.0
    %v550 = vadd.f32 %v548, %v549
    %v551 = vrot.slane %v550, 4
    %v552 = vadd.f32 %v550, %v551
    %v553 = vrot.slane %v552, 2
    %v554 = vadd.f32 %v552, %v553
    %v555 = vrot.slane %v554, 1
    %v556 = vadd.f32 %v554, %v555
    %v557 = vmul.f32 %v556, 0.03125
    %v558 = vmul.f32 %v539, %v539
    %v559 = vsub.f32 %v557, %v558
    %v560 = vmax.f32 %v559, 0.0
    %s561 = scalar_lea.vmem [#allocation7], 2
    %v562 = vld [vmem:[%s561] sm:$0x1]
    %v563 = vld [vmem:[%s561 + $0x1] sm:$0x1]
    %v564 = vadd.f32 %v560, 1e-05
    %v565 = vrsqrt.pop %v564
    %v566 = vmul.f32 %v565, %v564
    %v567 = vmul.f32 %v566, %v565
    %v568 = vmul.f32 0.5, %v567
    %v569 = vsub.f32 1.5, %v568
    %v570 = vmul.f32 %v565, %v569
    %vm571 = vweird.f32 %v564
    %vm572 = vweird.f32 %v565
    %vm573 = vmor %vm571, %vm572
    %v574 = vsel %vm573, %v565, %v570
    %v575 = vmul.f32 %v562, %v574
    %v576 = vmul.f32 %v539, %v575
    %v577 = vsub.f32 %v563, %v576
    %v578 = vperm.slane %v575, 0
    %v579 = vmul.f32 %v522, %v578
    %v580 = vmul.f32 %v523, %v578
    %v581 = vmul.f32 %v524, %v578
    %v582 = vmul.f32 %v525, %v578
    %v583 = vperm.slane %v577, 0
    %v584 = vadd.f32 %v579, %v583
    %v585 = vadd.f32 %v580, %v583
    %v586 = vadd.f32 %v581, %v583
    %v587 = vadd.f32 %v582, %v583
    %v588 = vmax.f32 %v584, 0.0
    %v589 = vmax.f32 %v585, 0.0
    %v590 = vmax.f32 %v586, 0.0
    %v591 = vmax.f32 %v587, 0.0
    %v592 = vsel %vm301, %v79, 0
    %v595 = vsel %vm301, %v588, 0
    %v598 = vsel %vm301, %v589, 0
    %600 = vmatpush.xpose.msra.mxu0 0.0
    %601 = vmatpush.xpose.msra.mxu0 0.0
    %602 = vmatpush.xpose.msra.mxu0 0.0
    %603 = vmatpush.xpose.msra.mxu0 0.0
    %604 = vmatpush.xpose.msra.mxu0 0.0
    %605 = vmatpush.xpose.msra.mxu0 0.0
    %606 = vmatpush.xpose.msra.mxu0 0.0
    %607 = vmatpush.xpose.msra.mxu0 0.0
    %608 = vmatpush.xpose.msra.mxu0 0.0
    %609 = vmatpush.xpose.msra.mxu0 0.0
    %610 = vmatpush.xpose.msra.mxu0 0.0
    %611 = vmatpush.xpose.msra.mxu0 0.0
    %612 = vmatpush.xpose.msra.mxu0 0.0
    %613 = vmatpush.xpose.msra.mxu0 0.0
    %614 = vmatpush.xpose.msra.mxu0 %v598
    %615 = vmatpush.xpose.msra.mxu0 %v595
    %616 = vmatmul.f32.gmra.mxu0 %v592
    %v617 = vpop.f32.mrf.mxu0
    %v618 = vadd.f32 0.0, %v617
    %619 = vdwg.mxu0
    %v621 = vsel %vm301, %v590, 0
    %v624 = vsel %vm301, %v591, 0
    %626 = vmatpush.xpose.msra.mxu0 0.0
    %627 = vmatpush.xpose.msra.mxu0 0.0
    %628 = vmatpush.xpose.msra.mxu0 0.0
    %629 = vmatpush.xpose.msra.mxu0 0.0
    %630 = vmatpush.xpose.msra.mxu0 0.0
    %631 = vmatpush.xpose.msra.mxu0 0.0
    %632 = vmatpush.xpose.msra.mxu0 0.0
    %633 = vmatpush.xpose.msra.mxu0 0.0
    %634 = vmatpush.xpose.msra.mxu0 0.0
    %635 = vmatpush.xpose.msra.mxu0 0.0
    %636 = vmatpush.xpose.msra.mxu0 0.0
    %637 = vmatpush.xpose.msra.mxu0 0.0
    %638 = vmatpush.xpose.msra.mxu0 0.0
    %639 = vmatpush.xpose.msra.mxu0 0.0
    %640 = vmatpush.xpose.msra.mxu0 %v624
    %641 = vmatpush.xpose.msra.mxu0 %v621
    %642 = vmatmul.f32.gmra.mxu0 %v592
    %v643 = vpop.f32.mrf.mxu0
    %v644 = vadd.f32 0.0, %v643
    %645 = vdwg.mxu0
    %vm646 = vcmask 125952
    %647 = vst.msk [vmem:[#allocation8] sm:$0xf] %vm646, %v618
    %648 = vst.msk [vmem:[#allocation8 + $0x4] sm:$0xf] %vm646, %v644
    %v649 = vrot.slane %v588, 2
    %v650 = vrot.slane %v588, 4
    %v651 = vrot.slane %v588, 6
    %v652 = vrot.slane %v589, 2
    %v653 = vrot.slane %v589, 4
    %v654 = vrot.slane %v589, 6
    %v655 = vrot.slane %v590, 2
    %v656 = vrot.slane %v590, 4
    %v657 = vrot.slane %v590, 6
    %v658 = vrot.slane %v591, 2
    %v659 = vrot.slane %v591, 4
    %v660 = vrot.slane %v591, 6
    %vm673 = vcmask 25600
    %v674 = vsel %vm673, %v588, -inf
    %v675 = vrot.slane %v674, 4
    %v676 = vmax.f32 %v674, %v675
    %v677 = vrot.slane %v676, 2
    %v678 = vmax.f32 %v676, %v677
    %v679 = vrot.slane %v678, 1
    %v680 = vmax.f32 %v678, %v679
    %v681 = vsel %vm673, %v649, -inf
    %v682 = vrot.slane %v681, 4
    %v683 = vmax.f32 %v681, %v682
    %v684 = vrot.slane %v683, 2
    %v685 = vmax.f32 %v683, %v684
    %v686 = vrot.slane %v685, 1
    %v687 = vmax.f32 %v685, %v686
    %v688 = vsel %vm673, %v650, -inf
    %v689 = vrot.slane %v688, 4
    %v690 = vmax.f32 %v688, %v689
    %v691 = vrot.slane %v690, 2
    %v692 = vmax.f32 %v690, %v691
    %v693 = vrot.slane %v692, 1
    %v694 = vmax.f32 %v692, %v693
    %v695 = vsel %vm673, %v651, -inf
    %v696 = vrot.slane %v695, 4
    %v697 = vmax.f32 %v695, %v696
    %v698 = vrot.slane %v697, 2
    %v699 = vmax.f32 %v697, %v698
    %v700 = vrot.slane %v699, 1
    %v701 = vmax.f32 %v699, %v700
    %v702 = vsel %vm673, %v589, -inf
    %v703 = vrot.slane %v702, 4
    %v704 = vmax.f32 %v702, %v703
    %v705 = vrot.slane %v704, 2
    %v706 = vmax.f32 %v704, %v705
    %v707 = vrot.slane %v706, 1
    %v708 = vmax.f32 %v706, %v707
    %v709 = vsel %vm673, %v652, -inf
    %v710 = vrot.slane %v709, 4
    %v711 = vmax.f32 %v709, %v710
    %v712 = vrot.slane %v711, 2
    %v713 = vmax.f32 %v711, %v712
    %v714 = vrot.slane %v713, 1
    %v715 = vmax.f32 %v713, %v714
    %v716 = vsel %vm673, %v653, -inf
    %v717 = vrot.slane %v716, 4
    %v718 = vmax.f32 %v716, %v717
    %v719 = vrot.slane %v718, 2
    %v720 = vmax.f32 %v718, %v719
    %v721 = vrot.slane %v720, 1
    %v722 = vmax.f32 %v720, %v721
    %v723 = vsel %vm673, %v654, -inf
    %v724 = vrot.slane %v723, 4
    %v725 = vmax.f32 %v723, %v724
    %v726 = vrot.slane %v725, 2
    %v727 = vmax.f32 %v725, %v726
    %v728 = vrot.slane %v727, 1
    %v729 = vmax.f32 %v727, %v728
    %v730 = vsel %vm673, %v590, -inf
    %v731 = vrot.slane %v730, 4
    %v732 = vmax.f32 %v730, %v731
    %v733 = vrot.slane %v732, 2
    %v734 = vmax.f32 %v732, %v733
    %v735 = vrot.slane %v734, 1
    %v736 = vmax.f32 %v734, %v735
    %v737 = vsel %vm673, %v655, -inf
    %v738 = vrot.slane %v737, 4
    %v739 = vmax.f32 %v737, %v738
    %v740 = vrot.slane %v739, 2
    %v741 = vmax.f32 %v739, %v740
    %v742 = vrot.slane %v741, 1
    %v743 = vmax.f32 %v741, %v742
    %v744 = vsel %vm673, %v656, -inf
    %v745 = vrot.slane %v744, 4
    %v746 = vmax.f32 %v744, %v745
    %v747 = vrot.slane %v746, 2
    %v748 = vmax.f32 %v746, %v747
    %v749 = vrot.slane %v748, 1
    %v750 = vmax.f32 %v748, %v749
    %v751 = vsel %vm673, %v657, -inf
    %v752 = vrot.slane %v751, 4
    %v753 = vmax.f32 %v751, %v752
    %v754 = vrot.slane %v753, 2
    %v755 = vmax.f32 %v753, %v754
    %v756 = vrot.slane %v755, 1
    %v757 = vmax.f32 %v755, %v756
    %v758 = vsel %vm673, %v591, -inf
    %v759 = vrot.slane %v758, 4
    %v760 = vmax.f32 %v758, %v759
    %v761 = vrot.slane %v760, 2
    %v762 = vmax.f32 %v760, %v761
    %v763 = vrot.slane %v762, 1
    %v764 = vmax.f32 %v762, %v763
    %v765 = vsel %vm673, %v658, -inf
    %v766 = vrot.slane %v765, 4
    %v767 = vmax.f32 %v765, %v766
    %v768 = vrot.slane %v767, 2
    %v769 = vmax.f32 %v767, %v768
    %v770 = vrot.slane %v769, 1
    %v771 = vmax.f32 %v769, %v770
    %v772 = vsel %vm673, %v659, -inf
    %v773 = vrot.slane %v772, 4
    %v774 = vmax.f32 %v772, %v773
    %v775 = vrot.slane %v774, 2
    %v776 = vmax.f32 %v774, %v775
    %v777 = vrot.slane %v776, 1
    %v778 = vmax.f32 %v776, %v777
    %v779 = vsel %vm673, %v660, -inf
    %v780 = vrot.slane %v779, 4
    %v781 = vmax.f32 %v779, %v780
    %v782 = vrot.slane %v781, 2
    %v783 = vmax.f32 %v781, %v782
    %v784 = vrot.slane %v783, 1
    %v785 = vmax.f32 %v783, %v784
    %vm800 = vcmask 1042434
    %v801 = vsel %vm800, %v687, %v680
    %vm802 = vcmask 1043459
    %v803 = vsel %vm802, %v694, %v801
    %vm804 = vcmask 1044484
    %v805 = vsel %vm804, %v701, %v803
    %vm806 = vcmask 1045509
    %v807 = vsel %vm806, %v708, %v805
    %vm808 = vcmask 1046534
    %v809 = vsel %vm808, %v715, %v807
    %vm810 = vcmask 1047559
    %v811 = vsel %vm810, %v722, %v809
    %v812 = vsel %vm800, %v743, %v736
    %v813 = vsel %vm802, %v750, %v812
    %v814 = vsel %vm804, %v757, %v813
    %v815 = vsel %vm806, %v764, %v814
    %v816 = vsel %vm808, %v771, %v815
    %v817 = vsel %vm810, %v778, %v816
    %v820 = vsel %vm144, 0.0, %v811
    %v821 = vsel %vm144, 0.0, %v817
    %s822 = scalar_lea.vmem [#allocation5], 192
    %v823 = vld [vmem:[%s822] sm:$0xf]
    %s824 = scalar_lea.vmem [#allocation5], 224
    %v825 = vld [vmem:[%s824] sm:$0xf]
    %vm828 = vcmask 1041409
    %v829 = vsel %vm828, %v687, %v680
    %v830 = vsel %vm800, %v694, %v829
    %v831 = vsel %vm802, %v701, %v830
    %v832 = vsel %vm804, %v708, %v831
    %v833 = vsel %vm806, %v715, %v832
    %v834 = vsel %vm808, %v722, %v833
    %v835 = vsel %vm810, %v729, %v834
    %v836 = vsel %vm828, %v743, %v736
    %v837 = vsel %vm800, %v750, %v836
    %v838 = vsel %vm802, %v757, %v837
    %v839 = vsel %vm804, %v764, %v838
    %v840 = vsel %vm806, %v771, %v839
    %v841 = vsel %vm808, %v778, %v840
    %v842 = vsel %vm810, %v785, %v841
    %v843 = vsel %vm301, %v835, 0
    %v845 = vsel %vm301, %v842, 0
    %v848 = vsel %vm393, %v825, 0
    %850 = vmatpush.msra.mxu0 0.0
    %851 = vmatpush.msra.mxu0 0.0
    %852 = vmatpush.msra.mxu0 0.0
    %853 = vmatpush.msra.mxu0 0.0
    %854 = vmatpush.msra.mxu0 0.0
    %855 = vmatpush.msra.mxu0 0.0
    %856 = vmatpush.msra.mxu0 0.0
    %857 = vmatpush.msra.mxu0 0.0
    %858 = vmatpush.msra.mxu0 0.0
    %859 = vmatpush.msra.mxu0 0.0
    %860 = vmatpush.msra.mxu0 0.0
    %861 = vmatpush.msra.mxu0 0.0
    %862 = vmatpush.msra.mxu0 0.0
    %863 = vmatpush.msra.mxu0 0.0
    %864 = vmatpush.msra.mxu0 0.0
    %865 = vmatpush.msra.mxu0 %v848
    %866 = vmatmul.f32.gmra.mxu0 %v843
    %v867 = vpop.f32.mrf.mxu0
    %v868 = vadd.f32 0.0, %v867
    %869 = vmatmul.f32.gmra.mxu0 %v845
    %v870 = vpop.f32.mrf.mxu0
    %v871 = vadd.f32 0.0, %v870
    %872 = vdwg.mxu0
    %v874 = vsel %vm301, %v820, 0
    %v877 = vsel %vm301, %v821, 0
    %v880 = vsel %vm393, %v823, 0
    %882 = vmatpush.msra.mxu0 0.0
    %883 = vmatpush.msra.mxu0 0.0
    %884 = vmatpush.msra.mxu0 0.0
    %885 = vmatpush.msra.mxu0 0.0
    %886 = vmatpush.msra.mxu0 0.0
    %887 = vmatpush.msra.mxu0 0.0
    %888 = vmatpush.msra.mxu0 0.0
    %889 = vmatpush.msra.mxu0 0.0
    %890 = vmatpush.msra.mxu0 0.0
    %891 = vmatpush.msra.mxu0 0.0
    %892 = vmatpush.msra.mxu0 0.0
    %893 = vmatpush.msra.mxu0 0.0
    %894 = vmatpush.msra.mxu0 0.0
    %895 = vmatpush.msra.mxu0 0.0
    %896 = vmatpush.msra.mxu0 0.0
    %897 = vmatpush.msra.mxu0 %v880
    %898 = vmatmul.f32.gmra.mxu0 %v874
    %v899 = vpop.f32.mrf.mxu0
    %v900 = vadd.f32 %v868, %v899
    %901 = vmatmul.f32.gmra.mxu0 %v877
    %v902 = vpop.f32.mrf.mxu0
    %v903 = vadd.f32 %v871, %v902
    %904 = vdwg.mxu0
    %v905 = vsel %vm828, %v694, %v687
    %v906 = vsel %vm800, %v701, %v905
    %v907 = vsel %vm802, %v708, %v906
    %v908 = vsel %vm804, %v715, %v907
    %v909 = vsel %vm806, %v722, %v908
    %v910 = vsel %vm808, %v729, %v909
    %v911 = vsel %vm828, %v750, %v743
    %v912 = vsel %vm800, %v757, %v911
    %v913 = vsel %vm802, %v764, %v912
    %v914 = vsel %vm804, %v771, %v913
    %v915 = vsel %vm806, %v778, %v914
    %v916 = vsel %vm808, %v785, %v915
    %v919 = vsel %vm242, %v910, 0.0
    %v920 = vsel %vm242, %v916, 0.0
    %s921 = scalar_lea.vmem [#allocation5], 256
    %v922 = vld [vmem:[%s921] sm:$0xf]
    %v924 = vsel %vm301, %v919, 0
    %v927 = vsel %vm301, %v920, 0
    %v930 = vsel %vm393, %v922, 0
    %932 = vmatpush.msra.mxu0 0.0
    %933 = vmatpush.msra.mxu0 0.0
    %934 = vmatpush.msra.mxu0 0.0
    %935 = vmatpush.msra.mxu0 0.0
    %936 = vmatpush.msra.mxu0 0.0
    %937 = vmatpush.msra.mxu0 0.0
    %938 = vmatpush.msra.mxu0 0.0
    %939 = vmatpush.msra.mxu0 0.0
    %940 = vmatpush.msra.mxu0 0.0
    %941 = vmatpush.msra.mxu0 0.0
    %942 = vmatpush.msra.mxu0 0.0
    %943 = vmatpush.msra.mxu0 0.0
    %944 = vmatpush.msra.mxu0 0.0
    %945 = vmatpush.msra.mxu0 0.0
    %946 = vmatpush.msra.mxu0 0.0
    %947 = vmatpush.msra.mxu0 %v930
    %948 = vmatmul.f32.gmra.mxu0 %v924
    %v949 = vpop.f32.mrf.mxu0
    %v950 = vadd.f32 0.0, %v949
    %951 = vmatmul.f32.gmra.mxu0 %v927
    %v952 = vpop.f32.mrf.mxu0
    %v953 = vadd.f32 0.0, %v952
    %954 = vdwg.mxu0
    %v955 = vadd.f32 %v900, %v950
    %v956 = vadd.f32 %v903, %v953
    %vm957 = vcmask 64512
    %v958 = vsel %vm957, %v955, 0.0
    %v959 = vsel %vm957, %v956, 0.0
    %v960 = vadd.f32 %v958, %v959
    %v961 = vrot.slane %v960, 4
    %v962 = vadd.f32 %v960, %v961
    %v963 = vrot.slane %v962, 2
    %v964 = vadd.f32 %v962, %v963
    %v965 = vrot.slane %v964, 1
    %v966 = vadd.f32 %v964, %v965
    %v967 = vmul.f32 %v966, 0.0625
    %v968 = vmul.f32 %v955, %v955
    %v969 = vmul.f32 %v956, %v956
    %v970 = vsel %vm957, %v968, 0.0
    %v971 = vsel %vm957, %v969, 0.0
    %v972 = vadd.f32 %v970, %v971
    %v973 = vrot.slane %v972, 4
    %v974 = vadd.f32 %v972, %v973
    %v975 = vrot.slane %v974, 2
    %v976 = vadd.f32 %v974, %v975
    %v977 = vrot.slane %v976, 1
    %v978 = vadd.f32 %v976, %v977
    %v979 = vmul.f32 %v978, 0.0625
    %v980 = vmul.f32 %v967, %v967
    %v981 = vsub.f32 %v979, %v980
    %v982 = vmax.f32 %v981, 0.0
    %s983 = scalar_lea.vmem [#allocation7], 4
    %v984 = vld [vmem:[%s983] sm:$0x1]
    %v985 = vld [vmem:[%s983 + $0x1] sm:$0x1]
    %v986 = vadd.f32 %v982, 1e-05
    %v987 = vrsqrt.pop %v986
    %v988 = vmul.f32 %v987, %v986
    %v989 = vmul.f32 %v988, %v987
    %v990 = vmul.f32 0.5, %v989
    %v991 = vsub.f32 1.5, %v990
    %v992 = vmul.f32 %v987, %v991
    %vm993 = vweird.f32 %v986
    %vm994 = vweird.f32 %v987
    %vm995 = vmor %vm993, %vm994
    %v996 = vsel %vm995, %v987, %v992
    %v997 = vmul.f32 %v984, %v996
    %v998 = vmul.f32 %v967, %v997
    %v999 = vsub.f32 %v985, %v998
    %v1000 = vperm.slane %v997, 0
    %v1001 = vmul.f32 %v955, %v1000
    %v1002 = vmul.f32 %v956, %v1000
    %v1003 = vperm.slane %v999, 0
    %v1004 = vadd.f32 %v1001, %v1003
    %v1005 = vadd.f32 %v1002, %v1003
    %v1006 = vmax.f32 %v1004, 0.0
    %v1007 = vmax.f32 %v1005, 0.0
    %v1010 = vrot.slane %v1006, 7
    %v1011 = vrot.slane %v1007, 7
    %v1014 = vsel %vm144, 0.0, %v1010
    %v1015 = vsel %vm144, 0.0, %v1011
    %s1016 = scalar_lea.vmem [#allocation5], 288
    %v1017 = vld [vmem:[%s1016] sm:$0xff]
    %s1018 = scalar_lea.vmem [#allocation5], 320
    %v1019 = vld [vmem:[%s1018] sm:$0xff]
    %v1020 = vsel %vm957, %v1006, 0
    %v1022 = vsel %vm957, %v1007, 0
    %1024 = vmatpush.msra.mxu0 0.0
    %1025 = vmatpush.msra.mxu0 0.0
    %1026 = vmatpush.msra.mxu0 0.0
    %1027 = vmatpush.msra.mxu0 0.0
    %1028 = vmatpush.msra.mxu0 0.0
    %1029 = vmatpush.msra.mxu0 0.0
    %1030 = vmatpush.msra.mxu0 0.0
    %1031 = vmatpush.msra.mxu0 0.0
    %1032 = vmatpush.msra.mxu0 0.0
    %1033 = vmatpush.msra.mxu0 0.0
    %1034 = vmatpush.msra.mxu0 0.0
    %1035 = vmatpush.msra.mxu0 0.0
    %1036 = vmatpush.msra.mxu0 0.0
    %1037 = vmatpush.msra.mxu0 0.0
    %1038 = vmatpush.msra.mxu0 0.0
    %1039 = vmatpush.msra.mxu0 %v1019
    %1040 = vmatmul.f32.gmra.mxu0 %v1020
    %v1041 = vpop.f32.mrf.mxu0
    %v1042 = vadd.f32 0.0, %v1041
    %1043 = vmatmul.f32.gmra.mxu0 %v1022
    %v1044 = vpop.f32.mrf.mxu0
    %v1045 = vadd.f32 0.0, %v1044
    %1046 = vdwg.mxu0
    %v1048 = vsel %vm957, %v1014, 0
    %v1051 = vsel %vm957, %v1015, 0
    %1053 = vmatpush.msra.mxu0 0.0
    %1054 = vmatpush.msra.mxu0 0.0
    %1055 = vmatpush.msra.mxu0 0.0
    %1056 = vmatpush.msra.mxu0 0.0
    %1057 = vmatpush.msra.mxu0 0.0
    %1058 = vmatpush.msra.mxu0 0.0
    %1059 = vmatpush.msra.mxu0 0.0
    %1060 = vmatpush.msra.mxu0 0.0
    %1061 = vmatpush.msra.mxu0 0.0
    %1062 = vmatpush.msra.mxu0 0.0
    %1063 = vmatpush.msra.mxu0 0.0
    %1064 = vmatpush.msra.mxu0 0.0
    %1065 = vmatpush.msra.mxu0 0.0
    %1066 = vmatpush.msra.mxu0 0.0
    %1067 = vmatpush.msra.mxu0 0.0
    %1068 = vmatpush.msra.mxu0 %v1017
    %1069 = vmatmul.f32.gmra.mxu0 %v1048
    %v1070 = vpop.f32.mrf.mxu0
    %v1071 = vadd.f32 %v1042, %v1070
    %1072 = vmatmul.f32.gmra.mxu0 %v1051
    %v1073 = vpop.f32.mrf.mxu0
    %v1074 = vadd.f32 %v1045, %v1073
    %1075 = vdwg.mxu0
    %v1076 = vrot.slane %v1006, 1
    %v1077 = vrot.slane %v1007, 1
    %v1080 = vsel %vm242, %v1076, 0.0
    %v1081 = vsel %vm242, %v1077, 0.0
    %s1082 = scalar_lea.vmem [#allocation5], 352
    %v1083 = vld [vmem:[%s1082] sm:$0xff]
    %v1085 = vsel %vm957, %v1080, 0
    %v1088 = vsel %vm957, %v1081, 0
    %1090 = vmatpush.msra.mxu0 0.0
    %1091 = vmatpush.msra.mxu0 0.0
    %1092 = vmatpush.msra.mxu0 0.0
    %1093 = vmatpush.msra.mxu0 0.0
    %1094 = vmatpush.msra.mxu0 0.0
    %1095 = vmatpush.msra.mxu0 0.0
    %1096 = vmatpush.msra.mxu0 0.0
    %1097 = vmatpush.msra.mxu0 0.0
    %1098 = vmatpush.msra.mxu0 0.0
    %1099 = vmatpush.msra.mxu0 0.0
    %1100 = vmatpush.msra.mxu0 0.0
    %1101 = vmatpush.msra.mxu0 0.0
    %1102 = vmatpush.msra.mxu0 0.0
    %1103 = vmatpush.msra.mxu0 0.0
    %1104 = vmatpush.msra.mxu0 0.0
    %1105 = vmatpush.msra.mxu0 %v1083
    %1106 = vmatmul.f32.gmra.mxu0 %v1085
    %v1107 = vpop.f32.mrf.mxu0
    %v1108 = vadd.f32 0.0, %v1107
    %1109 = vmatmul.f32.gmra.mxu0 %v1088
    %v1110 = vpop.f32.mrf.mxu0
    %v1111 = vadd.f32 0.0, %v1110
    %1112 = vdwg.mxu0
    %v1113 = vadd.f32 %v1071, %v1108
    %v1114 = vadd.f32 %v1074, %v1111
    %v1115 = vsel %vm957, %v1113, 0.0
    %v1116 = vsel %vm957, %v1114, 0.0
    %v1117 = vadd.f32 %v1115, %v1116
    %v1118 = vrot.slane %v1117, 4
    %v1119 = vadd.f32 %v1117, %v1118
    %v1120 = vrot.slane %v1119, 2
    %v1121 = vadd.f32 %v1119, %v1120
    %v1122 = vrot.slane %v1121, 1
    %v1123 = vadd.f32 %v1121, %v1122
    %v1124 = vmul.f32 %v1123, 0.0625
    %v1125 = vmul.f32 %v1113, %v1113
    %v1126 = vmul.f32 %v1114, %v1114
    %v1127 = vsel %vm957, %v1125, 0.0
    %v1128 = vsel %vm957, %v1126, 0.0
    %v1129 = vadd.f32 %v1127, %v1128
    %v1130 = vrot.slane %v1129, 4
    %v1131 = vadd.f32 %v1129, %v1130
    %v1132 = vrot.slane %v1131, 2
    %v1133 = vadd.f32 %v1131, %v1132
    %v1134 = vrot.slane %v1133, 1
    %v1135 = vadd.f32 %v1133, %v1134
    %v1136 = vmul.f32 %v1135, 0.0625
    %v1137 = vmul.f32 %v1124, %v1124
    %v1138 = vsub.f32 %v1136, %v1137
    %v1139 = vmax.f32 %v1138, 0.0
    %s1140 = scalar_lea.vmem [#allocation7], 6
    %v1141 = vld [vmem:[%s1140] sm:$0x1]
    %v1142 = vld [vmem:[%s1140 + $0x1] sm:$0x1]
    %v1143 = vadd.f32 %v1139, 1e-05
    %v1144 = vrsqrt.pop %v1143
    %v1145 = vmul.f32 %v1144, %v1143
    %v1146 = vmul.f32 %v1145, %v1144
    %v1147 = vmul.f32 0.5, %v1146
    %v1148 = vsub.f32 1.5, %v1147
    %v1149 = vmul.f32 %v1144, %v1148
    %vm1150 = vweird.f32 %v1143
    %vm1151 = vweird.f32 %v1144
    %vm1152 = vmor %vm1150, %vm1151
    %v1153 = vsel %vm1152, %v1144, %v1149
    %v1154 = vmul.f32 %v1141, %v1153
    %v1155 = vmul.f32 %v1124, %v1154
    %v1156 = vsub.f32 %v1142, %v1155
    %v1157 = vperm.slane %v1154, 0
    %v1158 = vmul.f32 %v1113, %v1157
    %v1159 = vmul.f32 %v1114, %v1157
    %v1160 = vperm.slane %v1156, 0
    %v1161 = vadd.f32 %v1158, %v1160
    %v1162 = vadd.f32 %v1159, %v1160
    %v1163 = vmax.f32 %v1161, 0.0
    %v1164 = vmax.f32 %v1162, 0.0
    %v1165 = vsel %vm957, %v79, 0
    %v1168 = vsel %vm957, %v1163, 0
    %1170 = vmatpush.xpose.msra.mxu0 0.0
    %1171 = vmatpush.xpose.msra.mxu0 0.0
    %1172 = vmatpush.xpose.msra.mxu0 0.0
    %1173 = vmatpush.xpose.msra.mxu0 0.0
    %1174 = vmatpush.xpose.msra.mxu0 0.0
    %1175 = vmatpush.xpose.msra.mxu0 0.0
    %1176 = vmatpush.xpose.msra.mxu0 0.0
    %1177 = vmatpush.xpose.msra.mxu0 0.0
    %1178 = vmatpush.xpose.msra.mxu0 0.0
    %1179 = vmatpush.xpose.msra.mxu0 0.0
    %1180 = vmatpush.xpose.msra.mxu0 0.0
    %1181 = vmatpush.xpose.msra.mxu0 0.0
    %1182 = vmatpush.xpose.msra.mxu0 0.0
    %1183 = vmatpush.xpose.msra.mxu0 0.0
    %1184 = vmatpush.xpose.msra.mxu0 0.0
    %1185 = vmatpush.xpose.msra.mxu0 %v1168
    %1186 = vmatmul.f32.gmra.mxu0 %v1165
    %v1187 = vpop.f32.mrf.mxu0
    %v1188 = vadd.f32 0.0, %v1187
    %1189 = vdwg.mxu0
    %v1191 = vsel %vm957, %v1164, 0
    %1193 = vmatpush.xpose.msra.mxu0 0.0
    %1194 = vmatpush.xpose.msra.mxu0 0.0
    %1195 = vmatpush.xpose.msra.mxu0 0.0
    %1196 = vmatpush.xpose.msra.mxu0 0.0
    %1197 = vmatpush.xpose.msra.mxu0 0.0
    %1198 = vmatpush.xpose.msra.mxu0 0.0
    %1199 = vmatpush.xpose.msra.mxu0 0.0
    %1200 = vmatpush.xpose.msra.mxu0 0.0
    %1201 = vmatpush.xpose.msra.mxu0 0.0
    %1202 = vmatpush.xpose.msra.mxu0 0.0
    %1203 = vmatpush.xpose.msra.mxu0 0.0
    %1204 = vmatpush.xpose.msra.mxu0 0.0
    %1205 = vmatpush.xpose.msra.mxu0 0.0
    %1206 = vmatpush.xpose.msra.mxu0 0.0
    %1207 = vmatpush.xpose.msra.mxu0 0.0
    %1208 = vmatpush.xpose.msra.mxu0 %v1191
    %1209 = vmatmul.f32.gmra.mxu0 %v1165
    %v1210 = vpop.f32.mrf.mxu0
    %v1211 = vadd.f32 0.0, %v1210
    %1212 = vdwg.mxu0
    %1213 = vst.msk [vmem:[#allocation9] sm:$0xff] %vm957, %v1188
    %1214 = vst.msk [vmem:[#allocation9 + $0x8] sm:$0xff] %vm957, %v1211
    %v1215 = vrot.slane %v1163, 2
    %v1216 = vrot.slane %v1163, 4
    %v1217 = vrot.slane %v1163, 6
    %v1218 = vrot.slane %v1164, 2
    %v1219 = vrot.slane %v1164, 4
    %v1220 = vrot.slane %v1164, 6
    %vm1227 = vcmask 58368
    %v1228 = vsel %vm1227, %v1163, -inf
    %v1229 = vrot.slane %v1228, 4
    %v1230 = vmax.f32 %v1228, %v1229
    %v1231 = vrot.slane %v1230, 2
    %v1232 = vmax.f32 %v1230, %v1231
    %v1233 = vrot.slane %v1232, 1
    %v1234 = vmax.f32 %v1232, %v1233
    %v1235 = vsel %vm1227, %v1215, -inf
    %v1236 = vrot.slane %v1235, 4
    %v1237 = vmax.f32 %v1235, %v1236
    %v1238 = vrot.slane %v1237, 2
    %v1239 = vmax.f32 %v1237, %v1238
    %v1240 = vrot.slane %v1239, 1
    %v1241 = vmax.f32 %v1239, %v1240
    %v1242 = vsel %vm1227, %v1216, -inf
    %v1243 = vrot.slane %v1242, 4
    %v1244 = vmax.f32 %v1242, %v1243
    %v1245 = vrot.slane %v1244, 2
    %v1246 = vmax.f32 %v1244, %v1245
    %v1247 = vrot.slane %v1246, 1
    %v1248 = vmax.f32 %v1246, %v1247
    %v1249 = vsel %vm1227, %v1217, -inf
    %v1250 = vrot.slane %v1249, 4
    %v1251 = vmax.f32 %v1249, %v1250
    %v1252 = vrot.slane %v1251, 2
    %v1253 = vmax.f32 %v1251, %v1252
    %v1254 = vrot.slane %v1253, 1
    %v1255 = vmax.f32 %v1253, %v1254
    %v1256 = vsel %vm1227, %v1164, -inf
    %v1257 = vrot.slane %v1256, 4
    %v1258 = vmax.f32 %v1256, %v1257
    %v1259 = vrot.slane %v1258, 2
    %v1260 = vmax.f32 %v1258, %v1259
    %v1261 = vrot.slane %v1260, 1
    %v1262 = vmax.f32 %v1260, %v1261
    %v1263 = vsel %vm1227, %v1218, -inf
    %v1264 = vrot.slane %v1263, 4
    %v1265 = vmax.f32 %v1263, %v1264
    %v1266 = vrot.slane %v1265, 2
    %v1267 = vmax.f32 %v1265, %v1266
    %v1268 = vrot.slane %v1267, 1
    %v1269 = vmax.f32 %v1267, %v1268
    %v1270 = vsel %vm1227, %v1219, -inf
    %v1271 = vrot.slane %v1270, 4
    %v1272 = vmax.f32 %v1270, %v1271
    %v1273 = vrot.slane %v1272, 2
    %v1274 = vmax.f32 %v1272, %v1273
    %v1275 = vrot.slane %v1274, 1
    %v1276 = vmax.f32 %v1274, %v1275
    %v1277 = vsel %vm1227, %v1220, -inf
    %v1278 = vrot.slane %v1277, 4
    %v1279 = vmax.f32 %v1277, %v1278
    %v1280 = vrot.slane %v1279, 2
    %v1281 = vmax.f32 %v1279, %v1280
    %v1282 = vrot.slane %v1281, 1
    %v1283 = vmax.f32 %v1281, %v1282
    %v1290 = vsel %vm800, %v1241, %v1234
    %v1291 = vsel %vm802, %v1248, %v1290
    %v1292 = vsel %vm800, %v1269, %v1262
    %v1293 = vsel %vm802, %v1276, %v1292
    %v1296 = vsel %vm144, 0.0, %v1291
    %v1297 = vsel %vm144, 0.0, %v1293
    %s1298 = scalar_lea.vmem [#allocation5], 384
    %v1299 = vld [vmem:[%s1298] sm:$0xff]
    %s1300 = scalar_lea.vmem [#allocation5], 416
    %v1301 = vld [vmem:[%s1300] sm:$0xff]
    %v1304 = vsel %vm828, %v1241, %v1234
    %v1305 = vsel %vm800, %v1248, %v1304
    %v1306 = vsel %vm802, %v1255, %v1305
    %v1307 = vsel %vm804, %v1262, %v1306
    %v1308 = vsel %vm806, %v1269, %v1307
    %v1309 = vsel %vm808, %v1276, %v1308
    %v1310 = vsel %vm810, %v1283, %v1309
    %v1311 = vsel %vm957, %v1310, 0
    %1313 = vmatpush.msra.mxu0 0.0
    %1314 = vmatpush.msra.mxu0 0.0
    %1315 = vmatpush.msra.mxu0 0.0
    %1316 = vmatpush.msra.mxu0 0.0
    %1317 = vmatpush.msra.mxu0 0.0
    %1318 = vmatpush.msra.mxu0 0.0
    %1319 = vmatpush.msra.mxu0 0.0
    %1320 = vmatpush.msra.mxu0 0.0
    %1321 = vmatpush.msra.mxu0 0.0
    %1322 = vmatpush.msra.mxu0 0.0
    %1323 = vmatpush.msra.mxu0 0.0
    %1324 = vmatpush.msra.mxu0 0.0
    %1325 = vmatpush.msra.mxu0 0.0
    %1326 = vmatpush.msra.mxu0 0.0
    %1327 = vmatpush.msra.mxu0 0.0
    %1328 = vmatpush.msra.mxu0 %v1301
    %1329 = vmatmul.f32.gmra.mxu0 %v1311
    %v1330 = vpop.f32.mrf.mxu0
    %v1331 = vadd.f32 0.0, %v1330
    %1332 = vdwg.mxu0
    %1335 = vst [vmem:[#allocation1] ss:$2 sm:$0xff] %v1296
    %s1336 = scalar_lea.vmem [#allocation1], 1
    %1337 = vst [vmem:[%s1336] ss:$2 sm:$0xff] %v1297
    %v1338 = vld.sshfl [vmem:[#allocation1] sm:$0xff pattern:$0x75316420]
    %v1339 = vsel %vm957, %v1338, 0
    %1341 = vmatpush.msra.mxu0 0.0
    %1342 = vmatpush.msra.mxu0 0.0
    %1343 = vmatpush.msra.mxu0 0.0
    %1344 = vmatpush.msra.mxu0 0.0
    %1345 = vmatpush.msra.mxu0 0.0
    %1346 = vmatpush.msra.mxu0 0.0
    %1347 = vmatpush.msra.mxu0 0.0
    %1348 = vmatpush.msra.mxu0 0.0
    %1349 = vmatpush.msra.mxu0 0.0
    %1350 = vmatpush.msra.mxu0 0.0
    %1351 = vmatpush.msra.mxu0 0.0
    %1352 = vmatpush.msra.mxu0 0.0
    %1353 = vmatpush.msra.mxu0 0.0
    %1354 = vmatpush.msra.mxu0 0.0
    %1355 = vmatpush.msra.mxu0 0.0
    %1356 = vmatpush.msra.mxu0 %v1299
    %1357 = vmatmul.f32.gmra.mxu0 %v1339
    %v1358 = vpop.f32.mrf.mxu0
    %v1359 = vadd.f32 %v1331, %v1358
    %1360 = vdwg.mxu0
    %v1362 = vrot.slane %v1359, 4
    %v1364 = vsel %vm828, %v1248, %v1241
    %v1365 = vsel %vm800, %v1255, %v1364
    %v1366 = vsel %vm828, %v1276, %v1269
    %v1367 = vsel %vm800, %v1283, %v1366
    %vm1370 = vcmask 1042432
    %v1371 = vsel %vm1370, %v1365, 0.0
    %v1372 = vsel %vm1370, %v1367, 0.0
    %s1373 = scalar_lea.vmem [#allocation5], 448
    %v1374 = vld [vmem:[%s1373] sm:$0xff]
    %1377 = vst [vmem:[#allocation1] ss:$2 sm:$0xff] %v1371
    %s1378 = scalar_lea.vmem [#allocation1], 1
    %1379 = vst [vmem:[%s1378] ss:$2 sm:$0xff] %v1372
    %v1380 = vld.sshfl [vmem:[#allocation1] sm:$0xff pattern:$0x75316420]
    %v1381 = vsel %vm957, %v1380, 0
    %1383 = vmatpush.msra.mxu0 0.0
    %1384 = vmatpush.msra.mxu0 0.0
    %1385 = vmatpush.msra.mxu0 0.0
    %1386 = vmatpush.msra.mxu0 0.0
    %1387 = vmatpush.msra.mxu0 0.0
    %1388 = vmatpush.msra.mxu0 0.0
    %1389 = vmatpush.msra.mxu0 0.0
    %1390 = vmatpush.msra.mxu0 0.0
    %1391 = vmatpush.msra.mxu0 0.0
    %1392 = vmatpush.msra.mxu0 0.0
    %1393 = vmatpush.msra.mxu0 0.0
    %1394 = vmatpush.msra.mxu0 0.0
    %1395 = vmatpush.msra.mxu0 0.0
    %1396 = vmatpush.msra.mxu0 0.0
    %1397 = vmatpush.msra.mxu0 0.0
    %1398 = vmatpush.msra.mxu0 %v1374
    %1399 = vmatmul.f32.gmra.mxu0 %v1381
    %v1400 = vpop.f32.mrf.mxu0
    %v1401 = vadd.f32 0.0, %v1400
    %1402 = vdwg.mxu0
    %v1404 = vrot.slane %v1401, 4
    %v1406 = vadd.f32 %v1359, %v1401
    %v1407 = vadd.f32 %v1362, %v1404
    %v1408 = vsel %vm646, %v1406, 0.0
    %v1409 = vsel %vm646, %v1407, 0.0
    %v1410 = vadd.f32 %v1408, %v1409
    %v1411 = vrot.slane %v1410, 4
    %v1412 = vadd.f32 %v1410, %v1411
    %v1413 = vrot.slane %v1412, 2
    %v1414 = vadd.f32 %v1412, %v1413
    %v1415 = vrot.slane %v1414, 1
    %v1416 = vadd.f32 %v1414, %v1415
    %v1417 = vmul.f32 %v1416, 0.125
    %v1418 = vmul.f32 %v1406, %v1406
    %v1419 = vmul.f32 %v1407, %v1407
    %v1420 = vsel %vm646, %v1418, 0.0
    %v1421 = vsel %vm646, %v1419, 0.0
    %v1422 = vadd.f32 %v1420, %v1421
    %v1423 = vrot.slane %v1422, 4
    %v1424 = vadd.f32 %v1422, %v1423
    %v1425 = vrot.slane %v1424, 2
    %v1426 = vadd.f32 %v1424, %v1425
    %v1427 = vrot.slane %v1426, 1
    %v1428 = vadd.f32 %v1426, %v1427
    %v1429 = vmul.f32 %v1428, 0.125
    %v1430 = vmul.f32 %v1417, %v1417
    %v1431 = vsub.f32 %v1429, %v1430
    %v1432 = vmax.f32 %v1431, 0.0
    %s1433 = scalar_lea.vmem [#allocation7], 8
    %v1434 = vld [vmem:[%s1433] sm:$0x1]
    %v1435 = vld [vmem:[%s1433 + $0x1] sm:$0x1]
    %v1436 = vadd.f32 %v1432, 1e-05
    %v1437 = vrsqrt.pop %v1436
    %v1438 = vmul.f32 %v1437, %v1436
    %v1439 = vmul.f32 %v1438, %v1437
    %v1440 = vmul.f32 0.5, %v1439
    %v1441 = vsub.f32 1.5, %v1440
    %v1442 = vmul.f32 %v1437, %v1441
    %vm1443 = vweird.f32 %v1436
    %vm1444 = vweird.f32 %v1437
    %vm1445 = vmor %vm1443, %vm1444
    %v1446 = vsel %vm1445, %v1437, %v1442
    %v1447 = vmul.f32 %v1434, %v1446
    %v1448 = vmul.f32 %v1417, %v1447
    %v1449 = vsub.f32 %v1435, %v1448
    %v1450 = vperm.slane %v1447, 0
    %v1451 = vmul.f32 %v1406, %v1450
    %v1452 = vmul.f32 %v1407, %v1450
    %v1453 = vperm.slane %v1449, 0
    %v1454 = vadd.f32 %v1451, %v1453
    %v1455 = vadd.f32 %v1452, %v1453
    %v1456 = vmax.f32 %v1454, 0.0
    %v1457 = vmax.f32 %v1455, 0.0
    %1460 = vst [vmem:[#allocation1] ss:$2 sm:$0xff] %v1456
    %v1461 = vld.sshfl [vmem:[#allocation1] sm:$0xff pattern:$0x75316420]
    %s1462 = scalar_lea.vmem [#allocation1], 16
    %1463 = vst [vmem:[%s1462] ss:$2 sm:$0xff] %v1457
    %v1464 = vld.sshfl [vmem:[#allocation1 + $0x10] sm:$0xff pattern:$0x75316420]
    %v1465 = vrot.slane %v1461, 7
    %v1466 = vrot.slane %v1464, 7
    %v1469 = vsel %vm144, 0.0, %v1465
    %v1470 = vsel %vm144, 0.0, %v1466
    %s1471 = scalar_lea.vmem [#allocation5], 480
    %v1472 = vld [vmem:[%s1471] sm:$0xff]
    %v1473 = vld [vmem:[%s1471 + $0x8] sm:$0xff]
    %s1474 = scalar_lea.vmem [#allocation5], 512
    %v1475 = vld [vmem:[%s1474] sm:$0xff]
    %v1476 = vld [vmem:[%s1474 + $0x8] sm:$0xff]
    %1477 = vst [vmem:[#allocation1] ss:$2 sm:$0xff] %v1456
    %s1478 = scalar_lea.vmem [#allocation1], 1
    %1479 = vst [vmem:[%s1478] ss:$2 sm:$0xff] %v1457
    %v1480 = vld.sshfl [vmem:[#allocation1] sm:$0xff pattern:$0x75316420]
    %v1481 = vsel %vm81, %v1480, 0
    %1483 = vmatpush.msra.mxu0 0.0
    %1484 = vmatpush.msra.mxu0 0.0
    %1485 = vmatpush.msra.mxu0 0.0
    %1486 = vmatpush.msra.mxu0 0.0
    %1487 = vmatpush.msra.mxu0 0.0
    %1488 = vmatpush.msra.mxu0 0.0
    %1489 = vmatpush.msra.mxu0 0.0
    %1490 = vmatpush.msra.mxu0 0.0
    %1491 = vmatpush.msra.mxu0 0.0
    %1492 = vmatpush.msra.mxu0 0.0
    %1493 = vmatpush.msra.mxu0 0.0
    %1494 = vmatpush.msra.mxu0 0.0
    %1495 = vmatpush.msra.mxu0 0.0
    %1496 = vmatpush.msra.mxu0 0.0
    %1497 = vmatpush.msra.mxu0 %v1476
    %1498 = vmatpush.msra.mxu0 %v1475
    %1499 = vmatmul.f32.gmra.mxu0 %v1481
    %v1500 = vpop.f32.mrf.mxu0
    %v1501 = vadd.f32 0.0, %v1500
    %1502 = vdwg.mxu0
    %1505 = vst [vmem:[#allocation1] ss:$2 sm:$0xff] %v1469
    %s1506 = scalar_lea.vmem [#allocation1], 1
    %1507 = vst [vmem:[%s1506] ss:$2 sm:$0xff] %v1470
    %v1508 = vld.sshfl [vmem:[#allocation1] sm:$0xff pattern:$0x75316420]
    %v1509 = vsel %vm81, %v1508, 0
    %1511 = vmatpush.msra.mxu0 0.0
    %1512 = vmatpush.msra.mxu0 0.0
    %1513 = vmatpush.msra.mxu0 0.0
    %1514 = vmatpush.msra.mxu0 0.0
    %1515 = vmatpush.msra.mxu0 0.0
    %1516 = vmatpush.msra.mxu0 0.0
    %1517 = vmatpush.msra.mxu0 0.0
    %1518 = vmatpush.msra.mxu0 0.0
    %1519 = vmatpush.msra.mxu0 0.0
    %1520 = vmatpush.msra.mxu0 0.0
    %1521 = vmatpush.msra.mxu0 0.0
    %1522 = vmatpush.msra.mxu0 0.0
    %1523 = vmatpush.msra.mxu0 0.0
    %1524 = vmatpush.msra.mxu0 0.0
    %1525 = vmatpush.msra.mxu0 %v1473
    %1526 = vmatpush.msra.mxu0 %v1472
    %1527 = vmatmul.f32.gmra.mxu0 %v1509
    %v1528 = vpop.f32.mrf.mxu0
    %v1529 = vadd.f32 %v1501, %v1528
    %1530 = vdwg.mxu0
    %v1532 = vrot.slane %v1529, 4
    %1534 = vst [vmem:[#allocation1] ss:$2 sm:$0xff] %v1456
    %v1535 = vld.sshfl [vmem:[#allocation1] sm:$0xff pattern:$0x75316420]
    %s1536 = scalar_lea.vmem [#allocation1], 16
    %1537 = vst [vmem:[%s1536] ss:$2 sm:$0xff] %v1457
    %v1538 = vld.sshfl [vmem:[#allocation1 + $0x10] sm:$0xff pattern:$0x75316420]
    %v1539 = vrot.slane %v1535, 1
    %v1540 = vrot.slane %v1538, 1
    %v1543 = vsel %vm1370, %v1539, 0.0
    %v1544 = vsel %vm1370, %v1540, 0.0
    %s1545 = scalar_lea.vmem [#allocation5], 544
    %v1546 = vld [vmem:[%s1545] sm:$0xff]
    %v1547 = vld [vmem:[%s1545 + $0x8] sm:$0xff]
    %1550 = vst [vmem:[#allocation1] ss:$2 sm:$0xff] %v1543
    %s1551 = scalar_lea.vmem [#allocation1], 1
    %1552 = vst [vmem:[%s1551] ss:$2 sm:$0xff] %v1544
    %v1553 = vld.sshfl [vmem:[#allocation1] sm:$0xff pattern:$0x75316420]
    %v1554 = vsel %vm81, %v1553, 0
    %1556 = vmatpush.msra.mxu0 0.0
    %1557 = vmatpush.msra.mxu0 0.0
    %1558 = vmatpush.msra.mxu0 0.0
    %1559 = vmatpush.msra.mxu0 0.0
    %1560 = vmatpush.msra.mxu0 0.0
    %1561 = vmatpush.msra.mxu0 0.0
    %1562 = vmatpush.msra.mxu0 0.0
    %1563 = vmatpush.msra.mxu0 0.0
    %1564 = vmatpush.msra.mxu0 0.0
    %1565 = vmatpush.msra.mxu0 0.0
    %1566 = vmatpush.msra.mxu0 0.0
    %1567 = vmatpush.msra.mxu0 0.0
    %1568 = vmatpush.msra.mxu0 0.0
    %1569 = vmatpush.msra.mxu0 0.0
    %1570 = vmatpush.msra.mxu0 %v1547
    %1571 = vmatpush.msra.mxu0 %v1546
    %1572 = vmatmul.f32.gmra.mxu0 %v1554
    %v1573 = vpop.f32.mrf.mxu0
    %v1574 = vadd.f32 0.0, %v1573
    %1575 = vdwg.mxu0
    %v1577 = vrot.slane %v1574, 4
    %v1579 = vadd.f32 %v1529, %v1574
    %v1580 = vadd.f32 %v1532, %v1577
    %v1581 = vsel %vm646, %v1579, 0.0
    %v1582 = vsel %vm646, %v1580, 0.0
    %v1583 = vadd.f32 %v1581, %v1582
    %v1584 = vrot.slane %v1583, 4
    %v1585 = vadd.f32 %v1583, %v1584
    %v1586 = vrot.slane %v1585, 2
    %v1587 = vadd.f32 %v1585, %v1586
    %v1588 = vrot.slane %v1587, 1
    %v1589 = vadd.f32 %v1587, %v1588
    %v1590 = vmul.f32 %v1589, 0.125
    %v1591 = vmul.f32 %v1579, %v1579
    %v1592 = vmul.f32 %v1580, %v1580
    %v1593 = vsel %vm646, %v1591, 0.0
    %v1594 = vsel %vm646, %v1592, 0.0
    %v1595 = vadd.f32 %v1593, %v1594
    %v1596 = vrot.slane %v1595, 4
    %v1597 = vadd.f32 %v1595, %v1596
    %v1598 = vrot.slane %v1597, 2
    %v1599 = vadd.f32 %v1597, %v1598
    %v1600 = vrot.slane %v1599, 1
    %v1601 = vadd.f32 %v1599, %v1600
    %v1602 = vmul.f32 %v1601, 0.125
    %v1603 = vmul.f32 %v1590, %v1590
    %v1604 = vsub.f32 %v1602, %v1603
    %v1605 = vmax.f32 %v1604, 0.0
    %s1606 = scalar_lea.vmem [#allocation7], 10
    %v1607 = vld [vmem:[%s1606] sm:$0x1]
    %v1608 = vld [vmem:[%s1606 + $0x1] sm:$0x1]
    %v1609 = vadd.f32 %v1605, 1e-05
    %v1610 = vrsqrt.pop %v1609
    %v1611 = vmul.f32 %v1610, %v1609
    %v1612 = vmul.f32 %v1611, %v1610
    %v1613 = vmul.f32 0.5, %v1612
    %v1614 = vsub.f32 1.5, %v1613
    %v1615 = vmul.f32 %v1610, %v1614
    %vm1616 = vweird.f32 %v1609
    %vm1617 = vweird.f32 %v1610
    %vm1618 = vmor %vm1616, %vm1617
    %v1619 = vsel %vm1618, %v1610, %v1615
    %v1620 = vmul.f32 %v1607, %v1619
    %v1621 = vmul.f32 %v1590, %v1620
    %v1622 = vsub.f32 %v1608, %v1621
    %v1623 = vperm.slane %v1620, 0
    %v1624 = vmul.f32 %v1579, %v1623
    %v1625 = vmul.f32 %v1580, %v1623
    %v1626 = vperm.slane %v1622, 0
    %v1627 = vadd.f32 %v1624, %v1626
    %v1628 = vadd.f32 %v1625, %v1626
    %v1629 = vmax.f32 %v1627, 0.0
    %v1630 = vmax.f32 %v1628, 0.0
    %v1632 = vsel %vm81, %v1629, 0
    %1634 = vmatpush.xpose.msra.mxu0 0.0
    %1635 = vmatpush.xpose.msra.mxu0 0.0
    %1636 = vmatpush.xpose.msra.mxu0 0.0
    %1637 = vmatpush.xpose.msra.mxu0 0.0
    %1638 = vmatpush.xpose.msra.mxu0 0.0
    %1639 = vmatpush.xpose.msra.mxu0 0.0
    %1640 = vmatpush.xpose.msra.mxu0 0.0
    %1641 = vmatpush.xpose.msra.mxu0 0.0
    %1642 = vmatpush.xpose.msra.mxu0 0.0
    %1643 = vmatpush.xpose.msra.mxu0 0.0
    %1644 = vmatpush.xpose.msra.mxu0 0.0
    %1645 = vmatpush.xpose.msra.mxu0 0.0
    %1646 = vmatpush.xpose.msra.mxu0 0.0
    %1647 = vmatpush.xpose.msra.mxu0 0.0
    %1648 = vmatpush.xpose.msra.mxu0 0.0
    %1649 = vmatpush.xpose.msra.mxu0 %v1632
    %1650 = vmatmul.f32.gmra.mxu0 %v83
    %v1651 = vpop.f32.mrf.mxu0
    %v1652 = vadd.f32 0.0, %v1651
    %1653 = vmatmul.f32.gmra.mxu0 %v86
    %v1654 = vpop.f32.mrf.mxu0
    %v1655 = vadd.f32 0.0, %v1654
    %1656 = vdwg.mxu0
    %v1658 = vsel %vm81, %v1630, 0
    %1660 = vmatpush.xpose.msra.mxu0 0.0
    %1661 = vmatpush.xpose.msra.mxu0 0.0
    %1662 = vmatpush.xpose.msra.mxu0 0.0
    %1663 = vmatpush.xpose.msra.mxu0 0.0
    %1664 = vmatpush.xpose.msra.mxu0 0.0
    %1665 = vmatpush.xpose.msra.mxu0 0.0
    %1666 = vmatpush.xpose.msra.mxu0 0.0
    %1667 = vmatpush.xpose.msra.mxu0 0.0
    %1668 = vmatpush.xpose.msra.mxu0 0.0
    %1669 = vmatpush.xpose.msra.mxu0 0.0
    %1670 = vmatpush.xpose.msra.mxu0 0.0
    %1671 = vmatpush.xpose.msra.mxu0 0.0
    %1672 = vmatpush.xpose.msra.mxu0 0.0
    %1673 = vmatpush.xpose.msra.mxu0 0.0
    %1674 = vmatpush.xpose.msra.mxu0 0.0
    %1675 = vmatpush.xpose.msra.mxu0 %v1658
    %1676 = vmatmul.f32.gmra.mxu0 %v83
    %v1677 = vpop.f32.mrf.mxu0
    %v1678 = vadd.f32 0.0, %v1677
    %1679 = vmatmul.f32.gmra.mxu0 %v86
    %v1680 = vpop.f32.mrf.mxu0
    %v1681 = vadd.f32 0.0, %v1680
    %1682 = vdwg.mxu0
    %1683 = vst.msk [vmem:[%s5] sm:$0xff] %vm301, %v1652
    %1684 = vst.msk [vmem:[%s5 + $0x8] sm:$0xff] %vm301, %v1655
    %1685 = vst.msk [vmem:[%s5 + $0x10] sm:$0xff] %vm301, %v1678
    %1686 = vst.msk [vmem:[%s5 + $0x18] sm:$0xff] %vm301, %v1681
    %v1687 = vrot.slane %v1629, 2
    %v1688 = vrot.slane %v1630, 2
    %v1689 = vsel %vm167, %v1629, %v1687
    %vm1690 = vcmask 1043458
    %v1691 = vsel %vm1690, %v1629, %v1687
    %v1692 = vrot.slane %v1691, 2
    %v1693 = vsel %vm167, %v1630, %v1688
    %v1694 = vsel %vm1690, %v1630, %v1688
    %v1695 = vrot.slane %v1694, 2
    %vm1700 = vcmask 123904
    %v1701 = vsel %vm1700, %v1689, -inf
    %v1702 = vrot.slane %v1701, 4
    %v1703 = vmax.f32 %v1701, %v1702
    %v1704 = vrot.slane %v1703, 2
    %v1705 = vmax.f32 %v1703, %v1704
    %v1706 = vrot.slane %v1705, 1
    %v1707 = vmax.f32 %v1705, %v1706
    %v1708 = vsel %vm1700, %v1692, -inf
    %v1709 = vrot.slane %v1708, 4
    %v1710 = vmax.f32 %v1708, %v1709
    %v1711 = vrot.slane %v1710, 2
    %v1712 = vmax.f32 %v1710, %v1711
    %v1713 = vrot.slane %v1712, 1
    %v1714 = vmax.f32 %v1712, %v1713
    %v1715 = vsel %vm1700, %v1693, -inf
    %v1716 = vrot.slane %v1715, 4
    %v1717 = vmax.f32 %v1715, %v1716
    %v1718 = vrot.slane %v1717, 2
    %v1719 = vmax.f32 %v1717, %v1718
    %v1720 = vrot.slane %v1719, 1
    %v1721 = vmax.f32 %v1719, %v1720
    %v1722 = vsel %vm1700, %v1695, -inf
    %v1723 = vrot.slane %v1722, 4
    %v1724 = vmax.f32 %v1722, %v1723
    %v1725 = vrot.slane %v1724, 2
    %v1726 = vmax.f32 %v1724, %v1725
    %v1727 = vrot.slane %v1726, 1
    %v1728 = vmax.f32 %v1726, %v1727
    %v1729 = vsel %vm144, 0.0, %v1707
    %v1730 = vsel %vm144, 0.0, %v1721
    %s1731 = scalar_lea.vmem [#allocation5], 576
    %v1732 = vld [vmem:[%s1731] sm:$0xff]
    %v1733 = vld [vmem:[%s1731 + $0x8] sm:$0xff]
    %s1734 = scalar_lea.vmem [#allocation5], 608
    %v1735 = vld [vmem:[%s1734] sm:$0xff]
    %v1736 = vld [vmem:[%s1734 + $0x8] sm:$0xff]
    %v1741 = vsel %vm828, %v1714, %v1707
    %v1742 = vsel %vm800, %v1721, %v1741
    %v1743 = vsel %vm802, %v1728, %v1742
    %v1744 = vsel %vm81, %v1743, 0
    %1746 = vmatpush.msra.mxu0 0.0
    %1747 = vmatpush.msra.mxu0 0.0
    %1748 = vmatpush.msra.mxu0 0.0
    %1749 = vmatpush.msra.mxu0 0.0
    %1750 = vmatpush.msra.mxu0 0.0
    %1751 = vmatpush.msra.mxu0 0.0
    %1752 = vmatpush.msra.mxu0 0.0
    %1753 = vmatpush.msra.mxu0 0.0
    %1754 = vmatpush.msra.mxu0 0.0
    %1755 = vmatpush.msra.mxu0 0.0
    %1756 = vmatpush.msra.mxu0 0.0
    %1757 = vmatpush.msra.mxu0 0.0
    %1758 = vmatpush.msra.mxu0 0.0
    %1759 = vmatpush.msra.mxu0 0.0
    %1760 = vmatpush.msra.mxu0 %v1736
    %1761 = vmatpush.msra.mxu0 %v1735
    %1762 = vmatmul.f32.gmra.mxu0 %v1744
    %v1763 = vpop.f32.mrf.mxu0
    %v1764 = vadd.f32 0.0, %v1763
    %1765 = vdwg.mxu0
    %1768 = vst [vmem:[#allocation1] ss:$4 sm:$0xff] %v1729
    %s1769 = scalar_lea.vmem [#allocation1], 1
    %1770 = vst [vmem:[%s1769] ss:$4 sm:$0xff] %v1730
    %v1771 = vld.sshfl [vmem:[#allocation1] sm:$0xff pattern:$0x73625140]
    %v1772 = vsel %vm81, %v1771, 0
    %1774 = vmatpush.msra.mxu0 0.0
    %1775 = vmatpush.msra.mxu0 0.0
    %1776 = vmatpush.msra.mxu0 0.0
    %1777 = vmatpush.msra.mxu0 0.0
    %1778 = vmatpush.msra.mxu0 0.0
    %1779 = vmatpush.msra.mxu0 0.0
    %1780 = vmatpush.msra.mxu0 0.0
    %1781 = vmatpush.msra.mxu0 0.0
    %1782 = vmatpush.msra.mxu0 0.0
    %1783 = vmatpush.msra.mxu0 0.0
    %1784 = vmatpush.msra.mxu0 0.0
    %1785 = vmatpush.msra.mxu0 0.0
    %1786 = vmatpush.msra.mxu0 0.0
    %1787 = vmatpush.msra.mxu0 0.0
    %1788 = vmatpush.msra.mxu0 %v1733
    %1789 = vmatpush.msra.mxu0 %v1732
    %1790 = vmatmul.f32.gmra.mxu0 %v1772
    %v1791 = vpop.f32.mrf.mxu0
    %v1792 = vadd.f32 %v1764, %v1791
    %1793 = vdwg.mxu0
    %v1795 = vrot.slane %v1792, 2
    %v1797 = vsel %vm144, %v1714, 0.0
    %v1798 = vsel %vm144, %v1728, 0.0
    %s1799 = scalar_lea.vmem [#allocation5], 640
    %v1800 = vld [vmem:[%s1799] sm:$0xff]
    %v1801 = vld [vmem:[%s1799 + $0x8] sm:$0xff]
    %1804 = vst [vmem:[#allocation1] ss:$4 sm:$0xff] %v1797
    %s1805 = scalar_lea.vmem [#allocation1], 1
    %1806 = vst [vmem:[%s1805] ss:$4 sm:$0xff] %v1798
    %v1807 = vld.sshfl [vmem:[#allocation1] sm:$0xff pattern:$0x73625140]
    %v1808 = vsel %vm81, %v1807, 0
    %1810 = vmatpush.msra.mxu0 0.0
    %1811 = vmatpush.msra.mxu0 0.0
    %1812 = vmatpush.msra.mxu0 0.0
    %1813 = vmatpush.msra.mxu0 0.0
    %1814 = vmatpush.msra.mxu0 0.0
    %1815 = vmatpush.msra.mxu0 0.0
    %1816 = vmatpush.msra.mxu0 0.0
    %1817 = vmatpush.msra.mxu0 0.0
    %1818 = vmatpush.msra.mxu0 0.0
    %1819 = vmatpush.msra.mxu0 0.0
    %1820 = vmatpush.msra.mxu0 0.0
    %1821 = vmatpush.msra.mxu0 0.0
    %1822 = vmatpush.msra.mxu0 0.0
    %1823 = vmatpush.msra.mxu0 0.0
    %1824 = vmatpush.msra.mxu0 %v1801
    %1825 = vmatpush.msra.mxu0 %v1800
    %1826 = vmatmul.f32.gmra.mxu0 %v1808
    %v1827 = vpop.f32.mrf.mxu0
    %v1828 = vadd.f32 0.0, %v1827
    %1829 = vdwg.mxu0
    %v1831 = vrot.slane %v1828, 2
    %v1833 = vadd.f32 %v1792, %v1828
    %v1834 = vadd.f32 %v1795, %v1831
    %vm1835 = vcmask 254976
    %v1836 = vsel %vm1835, %v1833, 0.0
    %v1837 = vsel %vm1835, %v1834, 0.0
    %v1838 = vadd.f32 %v1836, %v1837
    %v1839 = vrot.slane %v1838, 4
    %v1840 = vadd.f32 %v1838, %v1839
    %v1841 = vrot.slane %v1840, 2
    %v1842 = vadd.f32 %v1840, %v1841
    %v1843 = vrot.slane %v1842, 1
    %v1844 = vadd.f32 %v1842, %v1843
    %v1845 = vmul.f32 %v1844, 0.25
    %v1846 = vmul.f32 %v1833, %v1833
    %v1847 = vmul.f32 %v1834, %v1834
    %v1848 = vsel %vm1835, %v1846, 0.0
    %v1849 = vsel %vm1835, %v1847, 0.0
    %v1850 = vadd.f32 %v1848, %v1849
    %v1851 = vrot.slane %v1850, 4
    %v1852 = vadd.f32 %v1850, %v1851
    %v1853 = vrot.slane %v1852, 2
    %v1854 = vadd.f32 %v1852, %v1853
    %v1855 = vrot.slane %v1854, 1
    %v1856 = vadd.f32 %v1854, %v1855
    %v1857 = vmul.f32 %v1856, 0.25
    %v1858 = vmul.f32 %v1845, %v1845
    %v1859 = vsub.f32 %v1857, %v1858
    %v1860 = vmax.f32 %v1859, 0.0
    %s1861 = scalar_lea.vmem [#allocation7], 12
    %v1862 = vld [vmem:[%s1861] sm:$0x1]
    %v1863 = vld [vmem:[%s1861 + $0x1] sm:$0x1]
    %v1864 = vadd.f32 %v1860, 1e-05
    %v1865 = vrsqrt.pop %v1864
    %v1866 = vmul.f32 %v1865, %v1864
    %v1867 = vmul.f32 %v1866, %v1865
    %v1868 = vmul.f32 0.5, %v1867
    %v1869 = vsub.f32 1.5, %v1868
    %v1870 = vmul.f32 %v1865, %v1869
    %vm1871 = vweird.f32 %v1864
    %vm1872 = vweird.f32 %v1865
    %vm1873 = vmor %vm1871, %vm1872
    %v1874 = vsel %vm1873, %v1865, %v1870
    %v1875 = vmul.f32 %v1862, %v1874
    %v1876 = vmul.f32 %v1845, %v1875
    %v1877 = vsub.f32 %v1863, %v1876
    %v1878 = vperm.slane %v1875, 0
    %v1879 = vmul.f32 %v1833, %v1878
    %v1880 = vmul.f32 %v1834, %v1878
    %v1881 = vperm.slane %v1877, 0
    %v1882 = vadd.f32 %v1879, %v1881
    %v1883 = vadd.f32 %v1880, %v1881
    %v1884 = vmax.f32 %v1882, 0.0
    %v1885 = vmax.f32 %v1883, 0.0
    %v1888 = vperm.slane %v1884, 0
    %v1889 = vperm.slane %v1885, 0
    %v1892 = vsel %vm144, 0.0, %v1888
    %v1893 = vsel %vm144, 0.0, %v1889
    %s1894 = scalar_lea.vmem [#allocation5], 672
    %v1895 = vld [vmem:[%s1894] sm:$0xff]
    %v1896 = vld [vmem:[%s1894 + $0x8] sm:$0xff]
    %v1897 = vld [vmem:[%s1894 + $0x10] sm:$0xff]
    %v1898 = vld [vmem:[%s1894 + $0x18] sm:$0xff]
    %s1899 = scalar_lea.vmem [#allocation5], 704
    %v1900 = vld [vmem:[%s1899] sm:$0xff]
    %v1901 = vld [vmem:[%s1899 + $0x8] sm:$0xff]
    %v1902 = vld [vmem:[%s1899 + $0x10] sm:$0xff]
    %v1903 = vld [vmem:[%s1899 + $0x18] sm:$0xff]
    %1904 = vst [vmem:[#allocation1] ss:$4 sm:$0xff] %v1884
    %s1905 = scalar_lea.vmem [#allocation1], 1
    %1906 = vst [vmem:[%s1905] ss:$4 sm:$0xff] %v1885
    %v1907 = vld.sshfl [vmem:[#allocation1] sm:$0xff pattern:$0x73625140]
    %vm1908 = vcmask 261120
    %v1909 = vsel %vm1908, %v1907, 0
    %1911 = vmatpush.msra.mxu0 0.0
    %1912 = vmatpush.msra.mxu0 0.0
    %1913 = vmatpush.msra.mxu0 0.0
    %1914 = vmatpush.msra.mxu0 0.0
    %1915 = vmatpush.msra.mxu0 0.0
    %1916 = vmatpush.msra.mxu0 0.0
    %1917 = vmatpush.msra.mxu0 0.0
    %1918 = vmatpush.msra.mxu0 0.0
    %1919 = vmatpush.msra.mxu0 0.0
    %1920 = vmatpush.msra.mxu0 0.0
    %1921 = vmatpush.msra.mxu0 0.0
    %1922 = vmatpush.msra.mxu0 0.0
    %1923 = vmatpush.msra.mxu0 %v1903
    %1924 = vmatpush.msra.mxu0 %v1902
    %1925 = vmatpush.msra.mxu0 %v1901
    %1926 = vmatpush.msra.mxu0 %v1900
    %1927 = vmatmul.f32.gmra.mxu0 %v1909
    %v1928 = vpop.f32.mrf.mxu0
    %v1929 = vadd.f32 0.0, %v1928
    %1930 = vdwg.mxu0
    %1933 = vst [vmem:[#allocation1] ss:$4 sm:$0xff] %v1892
    %s1934 = scalar_lea.vmem [#allocation1], 1
    %1935 = vst [vmem:[%s1934] ss:$4 sm:$0xff] %v1893
    %v1936 = vld.sshfl [vmem:[#allocation1] sm:$0xff pattern:$0x73625140]
    %v1937 = vsel %vm1908, %v1936, 0
    %1939 = vmatpush.msra.mxu0 0.0
    %1940 = vmatpush.msra.mxu0 0.0
    %1941 = vmatpush.msra.mxu0 0.0
    %1942 = vmatpush.msra.mxu0 0.0
    %1943 = vmatpush.msra.mxu0 0.0
    %1944 = vmatpush.msra.mxu0 0.0
    %1945 = vmatpush.msra.mxu0 0.0
    %1946 = vmatpush.msra.mxu0 0.0
    %1947 = vmatpush.msra.mxu0 0.0
    %1948 = vmatpush.msra.mxu0 0.0
    %1949 = vmatpush.msra.mxu0 0.0
    %1950 = vmatpush.msra.mxu0 0.0
    %1951 = vmatpush.msra.mxu0 %v1898
    %1952 = vmatpush.msra.mxu0 %v1897
    %1953 = vmatpush.msra.mxu0 %v1896
    %1954 = vmatpush.msra.mxu0 %v1895
    %1955 = vmatmul.f32.gmra.mxu0 %v1937
    %v1956 = vpop.f32.mrf.mxu0
    %v1957 = vadd.f32 %v1929, %v1956
    %1958 = vdwg.mxu0
    %v1960 = vrot.slane %v1957, 2
    %v1962 = vperm.slane %v1884, 1
    %v1963 = vperm.slane %v1885, 1
    %v1966 = vsel %vm144, %v1962, 0.0
    %v1967 = vsel %vm144, %v1963, 0.0
    %s1968 = scalar_lea.vmem [#allocation5], 736
    %v1969 = vld [vmem:[%s1968] sm:$0xff]
    %v1970 = vld [vmem:[%s1968 + $0x8] sm:$0xff]
    %v1971 = vld [vmem:[%s1968 + $0x10] sm:$0xff]
    %v1972 = vld [vmem:[%s1968 + $0x18] sm:$0xff]
    %1975 = vst [vmem:[#allocation1] ss:$4 sm:$0xff] %v1966
    %s1976 = scalar_lea.vmem [#allocation1], 1
    %1977 = vst [vmem:[%s1976] ss:$4 sm:$0xff] %v1967
    %v1978 = vld.sshfl [vmem:[#allocation1] sm:$0xff pattern:$0x73625140]
    %v1979 = vsel %vm1908, %v1978, 0
    %1981 = vmatpush.msra.mxu0 0.0
    %1982 = vmatpush.msra.mxu0 0.0
    %1983 = vmatpush.msra.mxu0 0.0
    %1984 = vmatpush.msra.mxu0 0.0
    %1985 = vmatpush.msra.mxu0 0.0
    %1986 = vmatpush.msra.mxu0 0.0
    %1987 = vmatpush.msra.mxu0 0.0
    %1988 = vmatpush.msra.mxu0 0.0
    %1989 = vmatpush.msra.mxu0 0.0
    %1990 = vmatpush.msra.mxu0 0.0
    %1991 = vmatpush.msra.mxu0 0.0
    %1992 = vmatpush.msra.mxu0 0.0
    %1993 = vmatpush.msra.mxu0 %v1972
    %1994 = vmatpush.msra.mxu0 %v1971
    %1995 = vmatpush.msra.mxu0 %v1970
    %1996 = vmatpush.msra.mxu0 %v1969
    %1997 = vmatmul.f32.gmra.mxu0 %v1979
    %v1998 = vpop.f32.mrf.mxu0
    %v1999 = vadd.f32 0.0, %v1998
    %2000 = vdwg.mxu0
    %v2002 = vrot.slane %v1999, 2
    %v2004 = vadd.f32 %v1957, %v1999
    %v2005 = vadd.f32 %v1960, %v2002
    %v2006 = vsel %vm1835, %v2004, 0.0
    %v2007 = vsel %vm1835, %v2005, 0.0
    %v2008 = vadd.f32 %v2006, %v2007
    %v2009 = vrot.slane %v2008, 4
    %v2010 = vadd.f32 %v2008, %v2009
    %v2011 = vrot.slane %v2010, 2
    %v2012 = vadd.f32 %v2010, %v2011
    %v2013 = vrot.slane %v2012, 1
    %v2014 = vadd.f32 %v2012, %v2013
    %v2015 = vmul.f32 %v2014, 0.25
    %v2016 = vmul.f32 %v2004, %v2004
    %v2017 = vmul.f32 %v2005, %v2005
    %v2018 = vsel %vm1835, %v2016, 0.0
    %v2019 = vsel %vm1835, %v2017, 0.0
    %v2020 = vadd.f32 %v2018, %v2019
    %v2021 = vrot.slane %v2020, 4
    %v2022 = vadd.f32 %v2020, %v2021
    %v2023 = vrot.slane %v2022, 2
    %v2024 = vadd.f32 %v2022, %v2023
    %v2025 = vrot.slane %v2024, 1
    %v2026 = vadd.f32 %v2024, %v2025
    %v2027 = vmul.f32 %v2026, 0.25
    %v2028 = vmul.f32 %v2015, %v2015
    %v2029 = vsub.f32 %v2027, %v2028
    %v2030 = vmax.f32 %v2029, 0.0
    %s2031 = scalar_lea.vmem [#allocation7], 14
    %v2032 = vld [vmem:[%s2031] sm:$0x1]
    %v2033 = vld [vmem:[%s2031 + $0x1] sm:$0x1]
    %v2034 = vadd.f32 %v2030, 1e-05
    %v2035 = vrsqrt.pop %v2034
    %v2036 = vmul.f32 %v2035, %v2034
    %v2037 = vmul.f32 %v2036, %v2035
    %v2038 = vmul.f32 0.5, %v2037
    %v2039 = vsub.f32 1.5, %v2038
    %v2040 = vmul.f32 %v2035, %v2039
    %vm2041 = vweird.f32 %v2034
    %vm2042 = vweird.f32 %v2035
    %vm2043 = vmor %vm2041, %vm2042
    %v2044 = vsel %vm2043, %v2035, %v2040
    %v2045 = vmul.f32 %v2032, %v2044
    %v2046 = vmul.f32 %v2015, %v2045
    %v2047 = vsub.f32 %v2033, %v2046
    %v2048 = vperm.slane %v2045, 0
    %v2049 = vmul.f32 %v2004, %v2048
    %v2050 = vmul.f32 %v2005, %v2048
    %v2051 = vperm.slane %v2047, 0
    %v2052 = vadd.f32 %v2049, %v2051
    %v2053 = vadd.f32 %v2050, %v2051
    %v2054 = vmax.f32 %v2052, 0.0
    %v2055 = vmax.f32 %v2053, 0.0
    %v2056 = vadd.s32 %v71, 16
    %v2057 = vadd.s32 %v71, 24
    %vm2058 = vcmp.eq.s32.totalorder %v2056, %v74
    %vm2059 = vcmp.eq.s32.totalorder %v2057, %v74
    %v2060 = vsel %vm2058, 1, 0
    %v2061 = vsel %vm2059, 1, 0
    %v2062 = vcvt.s32.f32 %v2060
    %v2063 = vcvt.s32.f32 %v2061
    %v2064 = vsel %vm1908, %v79, 0
    %v2066 = vsel %vm1908, %v80, 0
    %v2069 = vsel %vm1908, %v2062, 0
    %v2072 = vsel %vm1908, %v2063, 0
    %v2075 = vsel %vm1908, %v2054, 0
    %2077 = vmatpush.xpose.msra.mxu0 0.0
    %2078 = vmatpush.xpose.msra.mxu0 0.0
    %2079 = vmatpush.xpose.msra.mxu0 0.0
    %2080 = vmatpush.xpose.msra.mxu0 0.0
    %2081 = vmatpush.xpose.msra.mxu0 0.0
    %2082 = vmatpush.xpose.msra.mxu0 0.0
    %2083 = vmatpush.xpose.msra.mxu0 0.0
    %2084 = vmatpush.xpose.msra.mxu0 0.0
    %2085 = vmatpush.xpose.msra.mxu0 0.0
    %2086 = vmatpush.xpose.msra.mxu0 0.0
    %2087 = vmatpush.xpose.msra.mxu0 0.0
    %2088 = vmatpush.xpose.msra.mxu0 0.0
    %2089 = vmatpush.xpose.msra.mxu0 0.0
    %2090 = vmatpush.xpose.msra.mxu0 0.0
    %2091 = vmatpush.xpose.msra.mxu0 0.0
    %2092 = vmatpush.xpose.msra.mxu0 %v2075
    %2093 = vmatmul.f32.gmra.mxu0 %v2064
    %v2094 = vpop.f32.mrf.mxu0
    %v2095 = vadd.f32 0.0, %v2094
    %2096 = vmatmul.f32.gmra.mxu0 %v2066
    %v2097 = vpop.f32.mrf.mxu0
    %v2098 = vadd.f32 0.0, %v2097
    %2099 = vmatmul.f32.gmra.mxu0 %v2069
    %v2100 = vpop.f32.mrf.mxu0
    %v2101 = vadd.f32 0.0, %v2100
    %2102 = vmatmul.f32.gmra.mxu0 %v2072
    %v2103 = vpop.f32.mrf.mxu0
    %v2104 = vadd.f32 0.0, %v2103
    %2105 = vdwg.mxu0
    %v2107 = vsel %vm1908, %v2055, 0
    %2109 = vmatpush.xpose.msra.mxu0 0.0
    %2110 = vmatpush.xpose.msra.mxu0 0.0
    %2111 = vmatpush.xpose.msra.mxu0 0.0
    %2112 = vmatpush.xpose.msra.mxu0 0.0
    %2113 = vmatpush.xpose.msra.mxu0 0.0
    %2114 = vmatpush.xpose.msra.mxu0 0.0
    %2115 = vmatpush.xpose.msra.mxu0 0.0
    %2116 = vmatpush.xpose.msra.mxu0 0.0
    %2117 = vmatpush.xpose.msra.mxu0 0.0
    %2118 = vmatpush.xpose.msra.mxu0 0.0
    %2119 = vmatpush.xpose.msra.mxu0 0.0
    %2120 = vmatpush.xpose.msra.mxu0 0.0
    %2121 = vmatpush.xpose.msra.mxu0 0.0
    %2122 = vmatpush.xpose.msra.mxu0 0.0
    %2123 = vmatpush.xpose.msra.mxu0 0.0
    %2124 = vmatpush.xpose.msra.mxu0 %v2107
    %2125 = vmatmul.f32.gmra.mxu0 %v2064
    %v2126 = vpop.f32.mrf.mxu0
    %v2127 = vadd.f32 0.0, %v2126
    %2128 = vmatmul.f32.gmra.mxu0 %v2066
    %v2129 = vpop.f32.mrf.mxu0
    %v2130 = vadd.f32 0.0, %v2129
    %2131 = vmatmul.f32.gmra.mxu0 %v2069
    %v2132 = vpop.f32.mrf.mxu0
    %v2133 = vadd.f32 0.0, %v2132
    %2134 = vmatmul.f32.gmra.mxu0 %v2072
    %v2135 = vpop.f32.mrf.mxu0
    %v2136 = vadd.f32 0.0, %v2135
    %2137 = vdwg.mxu0
    %2138 = vst.msk [vmem:[%s6] sm:$0xff] %vm158, %v2095
    %2139 = vst.msk [vmem:[%s6 + $0x8] sm:$0xff] %vm158, %v2098
    %2140 = vst.msk [vmem:[%s6 + $0x10] sm:$0xff] %vm158, %v2101
    %2141 = vst.msk [vmem:[%s6 + $0x18] sm:$0xff] %vm158, %v2104
    %2142 = vst.msk [vmem:[%s6 + $0x20] sm:$0xff] %vm158, %v2127
    %2143 = vst.msk [vmem:[%s6 + $0x28] sm:$0xff] %vm158, %v2130
    %2144 = vst.msk [vmem:[%s6 + $0x30] sm:$0xff] %vm158, %v2133
    %2145 = vst.msk [vmem:[%s6 + $0x38] sm:$0xff] %vm158, %v2136
    %v2146 = vsel %vm1835, %v2054, -inf
    %v2147 = vrot.slane %v2146, 4
    %v2148 = vmax.f32 %v2146, %v2147
    %v2149 = vrot.slane %v2148, 2
    %v2150 = vmax.f32 %v2148, %v2149
    %v2151 = vrot.slane %v2150, 1
    %v2152 = vmax.f32 %v2150, %v2151
    %v2153 = vsel %vm1835, %v2055, -inf
    %v2154 = vrot.slane %v2153, 4
    %v2155 = vmax.f32 %v2153, %v2154
    %v2156 = vrot.slane %v2155, 2
    %v2157 = vmax.f32 %v2155, %v2156
    %v2158 = vrot.slane %v2157, 1
    %v2159 = vmax.f32 %v2157, %v2158
    %v2160 = vmul.f32 %v79, %v2152
    %v2161 = vmul.f32 %v80, %v2152
    %v2162 = vmul.f32 %v2062, %v2152
    %v2163 = vmul.f32 %v2063, %v2152
    %v2164 = vsel %vm1908, %v2160, 0.0
    %2165 = vadd.xlane.f32.xlu0 %v2164
    %v2166 = vpop.xlane.xlu0 %2165
    %v2167 = vsel %vm1908, %v2161, 0.0
    %2168 = vadd.xlane.f32.xlu0 %v2167
    %v2169 = vpop.xlane.xlu0 %2168
    %v2170 = vsel %vm1908, %v2162, 0.0
    %2171 = vadd.xlane.f32.xlu0 %v2170
    %v2172 = vpop.xlane.xlu0 %2171
    %v2173 = vsel %vm1908, %v2163, 0.0
    %2174 = vadd.xlane.f32.xlu0 %v2173
    %v2175 = vpop.xlane.xlu0 %2174
    %v2176 = vmul.f32 %v79, %v2159
    %v2177 = vmul.f32 %v80, %v2159
    %v2178 = vmul.f32 %v2062, %v2159
    %v2179 = vmul.f32 %v2063, %v2159
    %v2180 = vsel %vm1908, %v2176, 0.0
    %2181 = vadd.xlane.f32.xlu0 %v2180
    %v2182 = vpop.xlane.xlu0 %2181
    %v2183 = vsel %vm1908, %v2177, 0.0
    %2184 = vadd.xlane.f32.xlu0 %v2183
    %v2185 = vpop.xlane.xlu0 %2184
    %v2186 = vsel %vm1908, %v2178, 0.0
    %2187 = vadd.xlane.f32.xlu0 %v2186
    %v2188 = vpop.xlane.xlu0 %2187
    %v2189 = vsel %vm1908, %v2179, 0.0
    %2190 = vadd.xlane.f32.xlu0 %v2189
    %v2191 = vpop.xlane.xlu0 %2190
    %vm2192 = vcmask 7168
    %2193 = vst.msk [vmem:[%s7] sm:$0xff] %vm2192, %v2166
    %2194 = vst.msk [vmem:[%s7 + $0x8] sm:$0xff] %vm2192, %v2169
    %2195 = vst.msk [vmem:[%s7 + $0x10] sm:$0xff] %vm2192, %v2172
    %2196 = vst.msk [vmem:[%s7 + $0x18] sm:$0xff] %vm2192, %v2175
    %2197 = vst.msk [vmem:[%s7 + $0x20] sm:$0xff] %vm2192, %v2182
    %2198 = vst.msk [vmem:[%s7 + $0x28] sm:$0xff] %vm2192, %v2185
    %2199 = vst.msk [vmem:[%s7 + $0x30] sm:$0xff] %vm2192, %v2188
    %2200 = vst.msk [vmem:[%s7 + $0x38] sm:$0xff] %vm2192, %v2191
    // Predicated region
    $region26: #{unet1d_encoder.1} parent=1 // pred_check
      _
    $region27: #{unet1d_encoder.1} parent=1 // pred_check_branch
      %2202 = sbr.rel (0) target = $region29
    $region28: #{unet1d_encoder.1} parent=1 // pred_region
      %2204 = vsyncadd [#allocation4], 0
      %s2205 = sshll.u32 [#allocation8], 4
      %s2206 = int_to_ptr.vmem [resolvable:$true] %s2205
      %s2207 = sshll.u32 %s3, 4
      %s2208 = int_to_ptr.hbm [resolvable:$true] %s2207
      %2213 = dma.vmem_to_hbm [thread:$0]  %s2206, 128, %s2208, [#allocation4], 64, 64, 4
    $region29: #{unet1d_encoder.1} parent=1 // pred_fallthru
      _
    // Predicated region
    $region30: #{unet1d_encoder.1} parent=1 // pred_check
      _
    $region31: #{unet1d_encoder.1} parent=1 // pred_check_branch
      %2215 = sbr.rel (0) target = $region33
    $region32: #{unet1d_encoder.1} parent=1 // pred_region
      %2217 = vsyncadd [#allocation10], 0
      %s2218 = sshll.u32 [#allocation9], 4
      %s2219 = int_to_ptr.vmem [resolvable:$true] %s2218
      %s2220 = sshll.u32 %s4, 4
      %s2221 = int_to_ptr.hbm [resolvable:$true] %s2220
      %2226 = dma.vmem_to_hbm [thread:$0]  %s2219, 256, %s2221, [#allocation10], 128, 128, 8
    $region33: #{unet1d_encoder.1} parent=1 // pred_fallthru
      _
    // Predicated region
    $region34: #{unet1d_encoder.1} parent=1 // pred_check
      _
    $region35: #{unet1d_encoder.1} parent=1 // pred_check_branch
      %2228 = sbr.rel (0) target = $region37
    $region36: #{unet1d_encoder.1} parent=1 // pred_region
      _
    $region37: #{unet1d_encoder.1} parent=1 // pred_fallthru
      _
    // Predicated region
    $region38: #{unet1d_encoder.1} parent=1 // pred_check
      _
    $region39: #{unet1d_encoder.1} parent=1 // pred_check_branch
      %2230 = sbr.rel (0) target = $region41
    $region40: #{unet1d_encoder.1} parent=1 // pred_region
      _
    $region41: #{unet1d_encoder.1} parent=1 // pred_fallthru
      _
    // Predicated region
    $region42: #{unet1d_encoder.1} parent=1 // pred_check
      _
    $region43: #{unet1d_encoder.1} parent=1 // pred_check_branch
      %2232 = sbr.rel (0) target = $region45
    $region44: #{unet1d_encoder.1} parent=1 // pred_region
      _
    $region45: #{unet1d_encoder.1} parent=1 // pred_fallthru
      _
    // Predicated region
    $region46: #{unet1d_encoder.1} parent=1 // pred_check
      _
    $region47: #{unet1d_encoder.1} parent=1 // pred_check_branch
      %2234 = sbr.rel (0) target = $region49
    $region48: #{unet1d_encoder.1} parent=1 // pred_region
      %2236 = dma.done [#allocation4], 128
    $region49: #{unet1d_encoder.1} parent=1 // pred_fallthru
      _
    // Predicated region
    $region50: #{unet1d_encoder.1} parent=1 // pred_check
      _
    $region51: #{unet1d_encoder.1} parent=1 // pred_check_branch
      %2238 = sbr.rel (0) target = $region53
    $region52: #{unet1d_encoder.1} parent=1 // pred_region
      %2240 = dma.done [#allocation10], 256
    $region53: #{unet1d_encoder.1} parent=1 // pred_fallthru
      _
    // Predicated region
    $region54: #{unet1d_encoder.1} parent=1 // pred_check
      _
    $region55: #{unet1d_encoder.1} parent=1 // pred_check_branch
      %2242 = sbr.rel (0) target = $region57
    $region56: #{unet1d_encoder.1} parent=1 // pred_region
      _
    $region57: #{unet1d_encoder.1} parent=1 // pred_fallthru
      _
    // Predicated region
    $region58: #{unet1d_encoder.1} parent=1 // pred_check
      _
    $region59: #{unet1d_encoder.1} parent=1 // pred_check_branch
      %2244 = sbr.rel (0) target = $region61
    $region60: #{unet1d_encoder.1} parent=1 // pred_region
      _
    $region61: #{unet1d_encoder.1} parent=1 // pred_fallthru
      _
    // Predicated region
    $region62: #{unet1d_encoder.1} parent=1 // pred_check
      _
    $region63: #{unet1d_encoder.1} parent=1 // pred_check_branch
      %2246 = sbr.rel (0) target = $region65
    $region64: #{unet1d_encoder.1} parent=1 // pred_region
      _
    $region65: #{unet1d_encoder.1} parent=1 // pred_fallthru
      _
    %2247 = vsyncpa [#allocation3], 1
    %2248 = vsyncpa [#allocation6], 1
    %2249 = vsyncpa [#allocation4], 1
    %2250 = vsyncpa [#allocation10], 1

</llo_original>
